<compile_context>
chip_gen: v7x
topology: tpu7x:2x2x1
jax: 0.10.0
libtpu: 0.0.40
codegen_flags: <defaults>
</compile_context>

<pallas_src>
import functools

import jax
import jax.numpy as jnp
from jax.experimental import pallas as pl
from jax.experimental.pallas import tpu as pltpu


# ----------------------------- in-kernel helpers -----------------------------

def _mm(a, w):
    # (M, K) @ (K, N): bf16 operands on the MXU, f32 accumulation.
    return jax.lax.dot_general(a.astype(jnp.bfloat16), w,
                               (((1,), (0,)), ((), ())),
                               preferred_element_type=jnp.float32)


def _mm_f32(a, w):
    # tiny f32 matmul (GroupNorm group reduce / expand of per-channel stats).
    return jax.lax.dot_general(a, w, (((1,), (0,)), ((), ())),
                               preferred_element_type=jnp.float32)


def _bmm_nt(a, b):
    # (B, M, D) x (B, N, D) -> (B, M, N)   (a @ b^T per batch element)
    return jax.lax.dot_general(a, b, (((2,), (2,)), ((0,), (0,))),
                               preferred_element_type=jnp.float32)


def _bmm(a, b):
    # (B, M, K) x (B, K, N) -> (B, M, N)
    return jax.lax.dot_general(a, b, (((2,), (1,)), ((0,), (0,))),
                               preferred_element_type=jnp.float32)


def _group_norm(x3, gred, gexp, w, b, eps=1e-5):
    # x3: (Bb, N, C) f32.  Per-sample GroupNorm (stats over N x group-channels), f32 stats.
    # gred: (C, 32) averages per-channel stats within each group; gexp: (32, C) broadcasts
    # the group statistic back to channels (factored form: weight bytes ~ C, not C^2).
    bb, n, _ = x3.shape
    inv_n = 1.0 / n
    mean_c = jnp.sum(x3, axis=1) * inv_n                  # (Bb, C) per-channel E[x]
    msq_c = jnp.sum(x3 * x3, axis=1) * inv_n              # (Bb, C) per-channel E[x^2]
    stats = jnp.concatenate([mean_c, msq_c], axis=0)      # (2*Bb, C) -> two tiny matmuls
    gstats = _mm_f32(_mm_f32(stats, gred), gexp)          # (2*Bb, C) group stats per channel
    gmean = gstats[:bb][:, None, :]                       # (Bb, 1, C)
    gmsq = gstats[bb:][:, None, :]
    # biased variance E[x^2]-E[x]^2 matches torch GroupNorm; inputs here are activation-scaled
    # so catastrophic cancellation is not a practical concern.
    inv = jax.lax.rsqrt(gmsq - gmean * gmean + eps)
    return (x3 - gmean) * inv * w + b


def _unnormalized_softmax(s, exp_dtype):
    # exp optionally in bf16 (EUP bf16 on v6e/v7x), row-sum accumulated in f32.  The divide is
    # applied AFTER the PV matmul by the caller (O(rows*dh) instead of O(rows*N) scaling).
    m = jnp.max(s, axis=-1, keepdims=True)
    e = jnp.exp((s - m).astype(exp_dtype))
    l = jnp.sum(e, axis=-1, keepdims=True, dtype=jnp.float32)
    return e.astype(jnp.bfloat16), l


# --------------------------------- kernel ------------------------------------

def attention_layer_kernel(x_ref,
                           gn1_w, gn1_b, gred1, gexp1,
                           inp_w, inp_b,
                           gn2_w, gn2_b, gred2, gexp2,
                           sa_qkv_w, sa_p_w,
                           ca_qkv_w, ca_o_w, ca_o_b,
                           out_w, out_b,
                           o_ref, *, block_b, seq_n, heads, dim_head, fast):
    bb, n = block_b, seq_n
    c_in = x_ref.shape[-1]
    inner = heads * dim_head
    dh = dim_head
    bf16 = jnp.bfloat16
    exp_dtype = bf16 if fast else jnp.float32

    x3 = x_ref[...].reshape(bb, n, c_in)                  # f32 view of the resident block

    # 1) outer GroupNorm(32, C)
    xn = _group_norm(x3, gred1[...], gexp1[...], gn1_w[...], gn1_b[...]).reshape(bb * n, c_in)

    # 2) input_proj: 1x1 conv  C -> inner  (matmul + bias)
    xp = _mm(xn, inp_w[...]) + inp_b[...]                 # (Bb*N, inner) f32

    # 3) SelfAttention (single head over all inner channels)
    hgn = _group_norm(xp.reshape(bb, n, inner), gred2[...], gexp2[...], gn2_w[...], gn2_b[...])
    qkv = _mm(hgn.reshape(bb * n, inner), sa_qkv_w[...]).astype(bf16)   # q pre-scaled
    q3 = qkv[:, 0 * inner:1 * inner].reshape(bb, n, inner)
    k3 = qkv[:, 1 * inner:2 * inner].reshape(bb, n, inner)
    v3 = qkv[:, 2 * inner:3 * inner].reshape(bb, n, inner)
    # TODO(synk): for large N (>= ~1024 on v7x), tile both attentions flash-style (online
    # softmax over KV tiles) instead of materializing the full (N, N) score tiles.
    e_sa, l_sa = _unnormalized_softmax(_bmm_nt(q3, k3), exp_dtype)      # (Bb, N, N)
    pv = _bmm(e_sa, v3) * pl.reciprocal(l_sa, approx=True)              # normalized post-PV
    h_sa = _mm(pv.reshape(bb * n, inner), sa_p_w[...])
    x1 = xp + xp + h_sa            # self_attn(xp) + xp == (xp + h) + xp, matches the module

    # 4) CrossAttention with context=None (multi-head self-attention over x1)
    qkvc = _mm(x1, ca_qkv_w[...]).astype(bf16)            # (Bb*N, 3*inner); q pre-scaled
    if fast:
        # head split by pure reshape + two-batch-dim dot_generals (no concatenates).
        q4 = qkvc[:, 0 * inner:1 * inner].reshape(bb, n, heads, dh)
        k4 = qkvc[:, 1 * inner:2 * inner].reshape(bb, n, heads, dh)
        v4 = qkvc[:, 2 * inner:3 * inner].reshape(bb, n, heads, dh)
        s = jax.lax.dot_general(q4, k4, (((3,), (3,)), ((2, 0), (2, 0))),
                                preferred_element_type=jnp.float32)     # (heads, Bb, N, N)
        e, l = _unnormalized_softmax(s, exp_dtype)
        oh = jax.lax.dot_general(e, v4, (((3,), (1,)), ((0, 1), (2, 0))),
                                 preferred_element_type=jnp.float32)    # (heads, Bb, N, dh)
        oh = (oh * pl.reciprocal(l, approx=True)).astype(bf16)
        oh = oh.reshape(heads, bb * n, dh)
    else:
        # fallback: lane-slice + concat head split (previously validated lowering path).
        qc = qkvc[:, 0 * inner:1 * inner].reshape(bb, n, inner)
        kc = qkvc[:, 1 * inner:2 * inner].reshape(bb, n, inner)
        vc = qkvc[:, 2 * inner:3 * inner].reshape(bb, n, inner)

        def split_heads(t):                               # (Bb, N, inner) -> (heads*Bb, N, dh)
            return jnp.concatenate(
                [t[:, :, h * dh:(h + 1) * dh] for h in range(heads)], axis=0)

        qh, kh, vh = split_heads(qc), split_heads(kc), split_heads(vc)
        e, l = _unnormalized_softmax(_bmm_nt(qh, kh), exp_dtype)        # (heads*Bb, N, N)
        oh = (_bmm(e, vh) * pl.reciprocal(l, approx=True)).astype(bf16)
        oh = oh.reshape(heads, bb * n, dh)

    # head merge folded into the output projection: per-head (dh, inner) matmul batched over
    # heads, then summed over heads -- equivalent to concat('h d') @ W_o, no lane concat.
    w_r = ca_o_w[...].reshape(heads, dh, inner)
    ca_out = jnp.sum(_bmm(oh, w_r), axis=0) + ca_o_b[...]               # (Bb*N, inner) f32
    # TODO(synk): nn.Dropout(p=0.0) in to_out is identity in eval mode; intentionally omitted.
    x2 = ca_out + x1

    # 5) output_proj: 1x1 conv inner -> C, then outer residual (re-read the resident input
    #    block instead of keeping it live across the whole body).
    y = _mm(x2, out_w[...]) + out_b[...]                  # (Bb*N, C) f32
    # TODO(synk): when C < 128 and (N*C) % 128 == 0, a lane-dense (rows, 128) I/O layout would
    # avoid half-masked vst on this store; kept (rows, C) here for robust lowering.
    o_ref[...] = y + x_ref[...]


# --------------------------------- wrapper ------------------------------------

KPARAM_ORDER = ("gn1_w", "gn1_b", "gred1", "gexp1", "inp_w", "inp_b",
                "gn2_w", "gn2_b", "gred2", "gexp2",
                "sa_qkv_w", "sa_p_w",
                "ca_qkv_w", "ca_o_w", "ca_o_b",
                "out_w", "out_b")


def group_reduce_expand(channels, num_groups=32):
    # Factored group averaging: reduce (C, G) with 1/group_size entries, expand (G, C) with 1s.
    gs = channels // num_groups
    gid = jnp.arange(channels) // gs
    onehot = (gid[:, None] == jnp.arange(num_groups)[None, :]).astype(jnp.float32)  # (C, G)
    return onehot / gs, onehot.T


def init_params(key, in_channels, heads, dim_head):
    inner = heads * dim_head
    ks = jax.random.split(key, 16)

    def w(k, shape, scale=0.05):
        return scale * jax.random.normal(k, shape, dtype=jnp.float32)

    # Linear / 1x1-conv weights stored pre-transposed as (in, out) for y = x @ W.
    return {
        "gn1_w": 1.0 + 0.1 * jax.random.normal(ks[12], (in_channels,), jnp.float32),
        "gn1_b": 0.1 * jax.random.normal(ks[13], (in_channels,), jnp.float32),
        "inp_w": w(ks[0], (in_channels, inner)),
        "inp_b": w(ks[1], (inner,)),
        "gn2_w": 1.0 + 0.1 * jax.random.normal(ks[14], (inner,), jnp.float32),
        "gn2_b": 0.1 * jax.random.normal(ks[15], (inner,), jnp.float32),
        "sa_k_w": w(ks[2], (inner, inner)),
        "sa_q_w": w(ks[3], (inner, inner)),
        "sa_v_w": w(ks[4], (inner, inner)),
        "sa_p_w": w(ks[5], (inner, inner)),
        "ca_q_w": w(ks[6], (inner, inner)),
        "ca_k_w": w(ks[7], (inner, inner)),
        "ca_v_w": w(ks[8], (inner, inner)),
        "ca_o_w": w(ks[9], (inner, inner)),
        "ca_o_b": w(ks[10], (inner,)),
        "out_w": w(ks[11], (inner, in_channels)),
        "out_b": jnp.zeros((in_channels,), jnp.float32),
    }


def _prepare_kernel_params(p, in_channels, inner, dim_head):
    f32, bf16 = jnp.float32, jnp.bfloat16
    sa_scale = float(inner) ** -0.5       # SelfAttention uses int(C)**-0.5 with C = inner
    ca_scale = float(dim_head) ** -0.5
    row = lambda v: v.reshape(1, -1).astype(f32)
    gred1, gexp1 = group_reduce_expand(in_channels, 32)
    gred2, gexp2 = group_reduce_expand(inner, 32)
    return {
        "gn1_w": row(p["gn1_w"]), "gn1_b": row(p["gn1_b"]),
        "gred1": gred1, "gexp1": gexp1,
        "inp_w": p["inp_w"].astype(bf16), "inp_b": row(p["inp_b"]),
        "gn2_w": row(p["gn2_w"]), "gn2_b": row(p["gn2_b"]),
        "gred2": gred2, "gexp2": gexp2,
        # fused QKV weights; attention scale folded into the Q columns (f32) before bf16 cast.
        "sa_qkv_w": jnp.concatenate(
            [p["sa_q_w"] * sa_scale, p["sa_k_w"], p["sa_v_w"]], axis=1).astype(bf16),
        "sa_p_w": p["sa_p_w"].astype(bf16),
        "ca_qkv_w": jnp.concatenate(
            [p["ca_q_w"] * ca_scale, p["ca_k_w"], p["ca_v_w"]], axis=1).astype(bf16),
        "ca_o_w": p["ca_o_w"].astype(bf16), "ca_o_b": row(p["ca_o_b"]),
        "out_w": p["out_w"].astype(bf16), "out_b": row(p["out_b"]),
    }


def _vmem_budget_bytes():
    # Generation-aware VMEM cap: v4/v5e/v6e have 128 MiB VMEM per TensorCore, v7x only 64 MiB.
    try:
        kind = jax.devices()[0].device_kind.lower()
    except Exception:
        kind = ""
    if ("v4" in kind) or ("v5" in kind) or ("v6" in kind):
        return 96 * 1024 * 1024
    return 48 * 1024 * 1024


def _step_vmem_bytes(bb, n, c, inner, heads, weight_bytes):
    rows = bb * n
    io = 2 * 2 * rows * c * 4                  # in + out blocks, double-buffered
    act = 14 * rows * inner * 4                # xp/x1/x2/qkv/per-head projection slabs (f32)
    scores = (1 + heads) * bb * n * n * 6      # f32 score tiles + bf16 exp, both attentions
    return int(1.25 * (io + act + scores)) + 2 * weight_bytes


def _pick_block_b(batch, n, c, inner, heads, weight_bytes, budget,
                  min_steps=4, max_rows=1024):
    # Largest batch block that (a) divides B, (b) keeps >= min(min_steps, B) grid granules
    # (>= 2 steps per v7x TensorCore so the BlockSpec pipeline has something to overlap),
    # (c) fits the estimated per-step VMEM footprint, (d) keeps the flattened row count sane.
    best = 1
    for bb in range(1, batch + 1):
        if batch % bb:
            continue
        if batch // bb < min(min_steps, batch):
            continue
        if bb > 1 and bb * n > max_rows:
            continue
        if _step_vmem_bytes(bb, n, c, inner, heads, weight_bytes) > budget:
            continue
        best = bb
    return best


def attention_layer_forward(x_nchw, params, heads, dim_head, block_b=None):
    B, C, H, W = x_nchw.shape
    N = H * W
    inner = heads * dim_head

    # channels-last, rows flattened: every 1x1 conv / Linear is a (rows, Cin) @ (Cin, Cout).
    x_rows = jnp.transpose(x_nchw, (0, 2, 3, 1)).reshape(B * N, C)

    kp = _prepare_kernel_params(params, C, inner, dim_head)
    plist = [kp[name] for name in KPARAM_ORDER]
    weight_bytes = sum(int(a.size) * a.dtype.itemsize for a in plist)

    vmem_budget = _vmem_budget_bytes()
    if block_b is None:
        block_b = _pick_block_b(B, N, C, inner, heads, weight_bytes, vmem_budget)
    assert B % block_b == 0, "batch must be divisible by block_b"

    def full_spec(shape):
        nd = len(shape)
        return pl.BlockSpec(shape, lambda b, _nd=nd: (0,) * _nd)
    # TODO(synk): the weight operands could be single-buffered (pipeline_mode=pl.Buffered(1))
    # since their block index never changes; left at the default for robust lowering.

    in_specs = [pl.BlockSpec((block_b * N, C), lambda b: (b, 0))]
    in_specs += [full_spec(p.shape) for p in plist]
    out_spec = pl.BlockSpec((block_b * N, C), lambda b: (b, 0))

    def run(fast):
        kernel = functools.partial(attention_layer_kernel, block_b=block_b, seq_n=N,
                                   heads=heads, dim_head=dim_head, fast=fast)
        return pl.pallas_call(
            kernel,
            out_shape=jax.ShapeDtypeStruct((B * N, C), jnp.float32),
            grid=(B // block_b,),
            in_specs=in_specs,
            out_specs=out_spec,
            compiler_params=pltpu.CompilerParams(
                dimension_semantics=("parallel",),
                vmem_limit_bytes=vmem_budget),
        )(x_rows, *plist)

    try:
        out = run(True)       # reshape-only head handling, bf16 exp (no concats / transposes)
    except Exception:
        # Some Mosaic builds reject dot_general with two batch dimensions (or bf16 exp); fall
        # back to the previously validated concat-based head split with f32 exp (same math).
        out = run(False)

    return jnp.transpose(out.reshape(B, H, W, C), (0, 3, 1, 2))


# ------------------------------ pure-JAX reference ----------------------------

def reference_forward(x_nchw, p, heads, dim_head):
    hp = jax.lax.Precision.HIGHEST
    B, C, H, W = x_nchw.shape
    N = H * W
    inner = heads * dim_head
    x = jnp.transpose(x_nchw, (0, 2, 3, 1)).reshape(B, N, C)

    def gn(z, w, b, groups=32, eps=1e-5):
        Bz, Nz, Cz = z.shape
        gs = Cz // groups
        zg = z.reshape(Bz, Nz, groups, gs)
        mean = jnp.mean(zg, axis=(1, 3), keepdims=True)
        var = jnp.mean(jnp.square(zg - mean), axis=(1, 3), keepdims=True)
        zn = ((zg - mean) * jax.lax.rsqrt(var + eps)).reshape(Bz, Nz, Cz)
        return zn * w + b

    def mm(z, w):
        return jnp.einsum("bnc,cd->bnd", z, w, precision=hp)

    xn = gn(x, p["gn1_w"], p["gn1_b"])
    xp = mm(xn, p["inp_w"]) + p["inp_b"]
    hgn = gn(xp, p["gn2_w"], p["gn2_b"])
    q = mm(hgn, p["sa_q_w"]); k = mm(hgn, p["sa_k_w"]); v = mm(hgn, p["sa_v_w"])
    sim = jnp.einsum("bid,bjd->bij", q, k, precision=hp) * (float(inner) ** -0.5)
    attn = jax.nn.softmax(sim, axis=-1)
    hsa = mm(jnp.einsum("bij,bjd->bid", attn, v, precision=hp), p["sa_p_w"])
    x1 = xp + hsa + xp

    qc = mm(x1, p["ca_q_w"]); kc = mm(x1, p["ca_k_w"]); vc = mm(x1, p["ca_v_w"])
    split = lambda t: t.reshape(B, N, heads, dim_head).transpose(0, 2, 1, 3)
    qh, kh, vh = split(qc), split(kc), split(vc)
    s = jnp.einsum("bhid,bhjd->bhij", qh, kh, precision=hp) * (float(dim_head) ** -0.5)
    a = jax.nn.softmax(s, axis=-1)
    oh = jnp.einsum("bhij,bhjd->bhid", a, vh, precision=hp)
    oc = oh.transpose(0, 2, 1, 3).reshape(B, N, inner)
    x2 = mm(oc, p["ca_o_w"]) + p["ca_o_b"] + x1

    y = mm(x2, p["out_w"]) + p["out_b"]
    out = y + x
    return jnp.transpose(out.reshape(B, H, W, C), (0, 3, 1, 2))


# ----------------------------------- main --------------------------------------

if __name__ == "__main__":
    key = jax.random.PRNGKey(0)
    kx, kp = jax.random.split(key)

    # in_channels and inner_dim must both be divisible by 32 (GroupNorm with 32 groups).
    B, C, H, W = 8, 64, 8, 8
    heads, dim_head = 4, 32          # inner_dim = 128 (lane-dense activations)

    x = jax.random.normal(kx, (B, C, H, W), dtype=jnp.float32)
    params = init_params(kp, C, heads, dim_head)

    out = attention_layer_forward(x, params, heads, dim_head)
    out = jax.block_until_ready(out)

    ref = reference_forward(x, params, heads, dim_head)
    assert out.shape == x.shape
    assert bool(jnp.all(jnp.isfinite(out)))
    max_err = float(jnp.max(jnp.abs(out - ref)))
    assert bool(jnp.allclose(out, ref, rtol=3e-2, atol=3e-2)), max_err

    print("KERNEL_OK")
</pallas_src>

<mosaic_0001>
module attributes {stable_mosaic.version = 11 : i64} {
  func.func @attention_layer_kernel(%arg0: i32, %arg1: memref<128x64xf32, #tpu.memory_space<vmem>>, %arg2: memref<1x64xf32, #tpu.memory_space<vmem>>, %arg3: memref<1x64xf32, #tpu.memory_space<vmem>>, %arg4: memref<64x32xf32, #tpu.memory_space<vmem>>, %arg5: memref<32x64xf32, #tpu.memory_space<vmem>>, %arg6: memref<64x128xbf16, #tpu.memory_space<vmem>>, %arg7: memref<1x128xf32, #tpu.memory_space<vmem>>, %arg8: memref<1x128xf32, #tpu.memory_space<vmem>>, %arg9: memref<1x128xf32, #tpu.memory_space<vmem>>, %arg10: memref<128x32xf32, #tpu.memory_space<vmem>>, %arg11: memref<32x128xf32, #tpu.memory_space<vmem>>, %arg12: memref<128x384xbf16, #tpu.memory_space<vmem>>, %arg13: memref<128x128xbf16, #tpu.memory_space<vmem>>, %arg14: memref<128x384xbf16, #tpu.memory_space<vmem>>, %arg15: memref<128x128xbf16, #tpu.memory_space<vmem>>, %arg16: memref<1x128xf32, #tpu.memory_space<vmem>>, %arg17: memref<128x64xbf16, #tpu.memory_space<vmem>>, %arg18: memref<1x64xf32, #tpu.memory_space<vmem>>, %arg19: memref<128x64xf32, #tpu.memory_space<vmem>>) attributes {dimension_semantics = [#tpu.dimension_semantics<parallel>], iteration_bounds = array<i64: 4>, scalar_prefetch = 0 : i64, scratch_operands = 0 : i64, tpu.core_type = #tpu.core_type<tc>, window_params = [{transform_indices = @transform_0, window_bounds = array<i64: 128, 64>}, {pipeline_mode = #tpu.pipeline_mode<synchronous>, transform_indices = @transform_1, window_bounds = array<i64: 1, 64>}, {pipeline_mode = #tpu.pipeline_mode<synchronous>, transform_indices = @transform_2, window_bounds = array<i64: 1, 64>}, {pipeline_mode = #tpu.pipeline_mode<synchronous>, transform_indices = @transform_3, window_bounds = array<i64: 64, 32>}, {pipeline_mode = #tpu.pipeline_mode<synchronous>, transform_indices = @transform_4, window_bounds = array<i64: 32, 64>}, {pipeline_mode = #tpu.pipeline_mode<synchronous>, transform_indices = @transform_5, window_bounds = array<i64: 64, 128>}, {pipeline_mode = #tpu.pipeline_mode<synchronous>, transform_indices = @transform_6, window_bounds = array<i64: 1, 128>}, {pipeline_mode = #tpu.pipeline_mode<synchronous>, transform_indices = @transform_7, window_bounds = array<i64: 1, 128>}, {pipeline_mode = #tpu.pipeline_mode<synchronous>, transform_indices = @transform_8, window_bounds = array<i64: 1, 128>}, {pipeline_mode = #tpu.pipeline_mode<synchronous>, transform_indices = @transform_9, window_bounds = array<i64: 128, 32>}, {pipeline_mode = #tpu.pipeline_mode<synchronous>, transform_indices = @transform_10, window_bounds = array<i64: 32, 128>}, {pipeline_mode = #tpu.pipeline_mode<synchronous>, transform_indices = @transform_11, window_bounds = array<i64: 128, 384>}, {pipeline_mode = #tpu.pipeline_mode<synchronous>, transform_indices = @transform_12, window_bounds = array<i64: 128, 128>}, {pipeline_mode = #tpu.pipeline_mode<synchronous>, transform_indices = @transform_13, window_bounds = array<i64: 128, 384>}, {pipeline_mode = #tpu.pipeline_mode<synchronous>, transform_indices = @transform_14, window_bounds = array<i64: 128, 128>}, {pipeline_mode = #tpu.pipeline_mode<synchronous>, transform_indices = @transform_15, window_bounds = array<i64: 1, 128>}, {pipeline_mode = #tpu.pipeline_mode<synchronous>, transform_indices = @transform_16, window_bounds = array<i64: 128, 64>}, {pipeline_mode = #tpu.pipeline_mode<synchronous>, transform_indices = @transform_17, window_bounds = array<i64: 1, 64>}, {transform_indices = @transform_18, window_bounds = array<i64: 128, 64>}]} {
    %c0 = arith.constant 0 : index
    %c0_0 = arith.constant 0 : index
    %0 = vector.load %arg1[%c0, %c0_0] : memref<128x64xf32, #tpu.memory_space<vmem>>, vector<128x64xf32>
    %1 = vector.shape_cast %0 : vector<128x64xf32> to vector<2x64x64xf32>
    %c0_1 = arith.constant 0 : index
    %c0_2 = arith.constant 0 : index
    %2 = vector.load %arg4[%c0_1, %c0_2] : memref<64x32xf32, #tpu.memory_space<vmem>>, vector<64x32xf32>
    %c0_3 = arith.constant 0 : index
    %c0_4 = arith.constant 0 : index
    %3 = vector.load %arg5[%c0_3, %c0_4] : memref<32x64xf32, #tpu.memory_space<vmem>>, vector<32x64xf32>
    %c0_5 = arith.constant 0 : index
    %c0_6 = arith.constant 0 : index
    %4 = vector.load %arg2[%c0_5, %c0_6] : memref<1x64xf32, #tpu.memory_space<vmem>>, vector<1x64xf32>
    %c0_7 = arith.constant 0 : index
    %c0_8 = arith.constant 0 : index
    %5 = vector.load %arg3[%c0_7, %c0_8] : memref<1x64xf32, #tpu.memory_space<vmem>>, vector<1x64xf32>
    %cst = arith.constant dense<0.000000e+00> : vector<2x64xf32>
    %6 = vector.multi_reduction <add>, %1, %cst [1] : vector<2x64x64xf32> to vector<2x64xf32>
    %cst_9 = arith.constant 1.562500e-02 : f32
    %7 = vector.broadcast %cst_9 : f32 to vector<2x64xf32>
    %8 = arith.mulf %6, %7 : vector<2x64xf32>
    %9 = arith.mulf %1, %1 : vector<2x64x64xf32>
    %cst_10 = arith.constant dense<0.000000e+00> : vector<2x64xf32>
    %10 = vector.multi_reduction <add>, %9, %cst_10 [1] : vector<2x64x64xf32> to vector<2x64xf32>
    %cst_11 = arith.constant 1.562500e-02 : f32
    %11 = vector.broadcast %cst_11 : f32 to vector<2x64xf32>
    %12 = arith.mulf %10, %11 : vector<2x64xf32>
    %13 = tpu.concatenate %8, %12 in 0 : vector<2x64xf32>, vector<2x64xf32> -> vector<4x64xf32>
    %cst_12 = arith.constant dense<0.000000e+00> : vector<4x32xf32>
    %14 = tpu.matmul %13, %2, %cst_12 {dimension_numbers = #tpu.dot_dimension_numbers<[1], [0], [0], [1], [0, 0, 1, 1], [], []>} : vector<4x64xf32>, vector<64x32xf32>, vector<4x32xf32> -> vector<4x32xf32>
    %cst_13 = arith.constant dense<0.000000e+00> : vector<4x64xf32>
    %15 = tpu.matmul %14, %3, %cst_13 {dimension_numbers = #tpu.dot_dimension_numbers<[1], [0], [0], [1], [0, 0, 1, 1], [], []>} : vector<4x32xf32>, vector<32x64xf32>, vector<4x64xf32> -> vector<4x64xf32>
    %16 = vector.extract_strided_slice %15 {offsets = [0, 0], sizes = [2, 64], strides = [1, 1]} : vector<4x64xf32> to vector<2x64xf32>
    %17 = vector.shape_cast %16 : vector<2x64xf32> to vector<2x1x64xf32>
    %18 = vector.extract_strided_slice %15 {offsets = [2, 0], sizes = [2, 64], strides = [1, 1]} : vector<4x64xf32> to vector<2x64xf32>
    %19 = vector.shape_cast %18 : vector<2x64xf32> to vector<2x1x64xf32>
    %20 = arith.mulf %17, %17 : vector<2x1x64xf32>
    %21 = arith.subf %19, %20 : vector<2x1x64xf32>
    %cst_14 = arith.constant 9.99999974E-6 : f32
    %22 = vector.broadcast %cst_14 : f32 to vector<2x1x64xf32>
    %23 = arith.addf %21, %22 : vector<2x1x64xf32>
    %24 = math.rsqrt %23 : vector<2x1x64xf32>
    %25 = vector.broadcast %17 : vector<2x1x64xf32> to vector<2x64x64xf32>
    %26 = arith.subf %1, %25 : vector<2x64x64xf32>
    %27 = vector.broadcast %24 : vector<2x1x64xf32> to vector<2x64x64xf32>
    %28 = arith.mulf %26, %27 : vector<2x64x64xf32>
    %29 = vector.shape_cast %4 : vector<1x64xf32> to vector<1x1x64xf32>
    %30 = vector.broadcast %29 : vector<1x1x64xf32> to vector<2x64x64xf32>
    %31 = arith.mulf %28, %30 : vector<2x64x64xf32>
    %32 = vector.shape_cast %5 : vector<1x64xf32> to vector<1x1x64xf32>
    %33 = vector.broadcast %32 : vector<1x1x64xf32> to vector<2x64x64xf32>
    %34 = arith.addf %31, %33 : vector<2x64x64xf32>
    %35 = vector.shape_cast %34 : vector<2x64x64xf32> to vector<128x64xf32>
    %c0_15 = arith.constant 0 : index
    %c0_16 = arith.constant 0 : index
    %36 = vector.load %arg6[%c0_15, %c0_16] : memref<64x128xbf16, #tpu.memory_space<vmem>>, vector<64x128xbf16>
    %37 = arith.truncf %35 : vector<128x64xf32> to vector<128x64xbf16>
    %cst_17 = arith.constant dense<0.000000e+00> : vector<128x128xf32>
    %38 = tpu.matmul %37, %36, %cst_17 {dimension_numbers = #tpu.dot_dimension_numbers<[1], [0], [0], [1], [0, 0, 1, 1], [], []>} : vector<128x64xbf16>, vector<64x128xbf16>, vector<128x128xf32> -> vector<128x128xf32>
    %c0_18 = arith.constant 0 : index
    %c0_19 = arith.constant 0 : index
    %39 = vector.load %arg7[%c0_18, %c0_19] : memref<1x128xf32, #tpu.memory_space<vmem>>, vector<1x128xf32>
    %40 = vector.broadcast %39 : vector<1x128xf32> to vector<128x128xf32>
    %41 = arith.addf %38, %40 : vector<128x128xf32>
    %42 = vector.shape_cast %41 : vector<128x128xf32> to vector<2x64x128xf32>
    %c0_20 = arith.constant 0 : index
    %c0_21 = arith.constant 0 : index
    %43 = vector.load %arg10[%c0_20, %c0_21] : memref<128x32xf32, #tpu.memory_space<vmem>>, vector<128x32xf32>
    %c0_22 = arith.constant 0 : index
    %c0_23 = arith.constant 0 : index
    %44 = vector.load %arg11[%c0_22, %c0_23] : memref<32x128xf32, #tpu.memory_space<vmem>>, vector<32x128xf32>
    %c0_24 = arith.constant 0 : index
    %c0_25 = arith.constant 0 : index
    %45 = vector.load %arg8[%c0_24, %c0_25] : memref<1x128xf32, #tpu.memory_space<vmem>>, vector<1x128xf32>
    %c0_26 = arith.constant 0 : index
    %c0_27 = arith.constant 0 : index
    %46 = vector.load %arg9[%c0_26, %c0_27] : memref<1x128xf32, #tpu.memory_space<vmem>>, vector<1x128xf32>
    %cst_28 = arith.constant dense<0.000000e+00> : vector<2x128xf32>
    %47 = vector.multi_reduction <add>, %42, %cst_28 [1] : vector<2x64x128xf32> to vector<2x128xf32>
    %cst_29 = arith.constant 1.562500e-02 : f32
    %48 = vector.broadcast %cst_29 : f32 to vector<2x128xf32>
    %49 = arith.mulf %47, %48 : vector<2x128xf32>
    %50 = arith.mulf %42, %42 : vector<2x64x128xf32>
    %cst_30 = arith.constant dense<0.000000e+00> : vector<2x128xf32>
    %51 = vector.multi_reduction <add>, %50, %cst_30 [1] : vector<2x64x128xf32> to vector<2x128xf32>
    %cst_31 = arith.constant 1.562500e-02 : f32
    %52 = vector.broadcast %cst_31 : f32 to vector<2x128xf32>
    %53 = arith.mulf %51, %52 : vector<2x128xf32>
    %54 = tpu.concatenate %49, %53 in 0 : vector<2x128xf32>, vector<2x128xf32> -> vector<4x128xf32>
    %cst_32 = arith.constant dense<0.000000e+00> : vector<4x32xf32>
    %55 = tpu.matmul %54, %43, %cst_32 {dimension_numbers = #tpu.dot_dimension_numbers<[1], [0], [0], [1], [0, 0, 1, 1], [], []>} : vector<4x128xf32>, vector<128x32xf32>, vector<4x32xf32> -> vector<4x32xf32>
    %cst_33 = arith.constant dense<0.000000e+00> : vector<4x128xf32>
    %56 = tpu.matmul %55, %44, %cst_33 {dimension_numbers = #tpu.dot_dimension_numbers<[1], [0], [0], [1], [0, 0, 1, 1], [], []>} : vector<4x32xf32>, vector<32x128xf32>, vector<4x128xf32> -> vector<4x128xf32>
    %57 = vector.extract_strided_slice %56 {offsets = [0, 0], sizes = [2, 128], strides = [1, 1]} : vector<4x128xf32> to vector<2x128xf32>
    %58 = vector.shape_cast %57 : vector<2x128xf32> to vector<2x1x128xf32>
    %59 = vector.extract_strided_slice %56 {offsets = [2, 0], sizes = [2, 128], strides = [1, 1]} : vector<4x128xf32> to vector<2x128xf32>
    %60 = vector.shape_cast %59 : vector<2x128xf32> to vector<2x1x128xf32>
    %61 = arith.mulf %58, %58 : vector<2x1x128xf32>
    %62 = arith.subf %60, %61 : vector<2x1x128xf32>
    %cst_34 = arith.constant 9.99999974E-6 : f32
    %63 = vector.broadcast %cst_34 : f32 to vector<2x1x128xf32>
    %64 = arith.addf %62, %63 : vector<2x1x128xf32>
    %65 = math.rsqrt %64 : vector<2x1x128xf32>
    %66 = vector.broadcast %58 : vector<2x1x128xf32> to vector<2x64x128xf32>
    %67 = arith.subf %42, %66 : vector<2x64x128xf32>
    %68 = vector.broadcast %65 : vector<2x1x128xf32> to vector<2x64x128xf32>
    %69 = arith.mulf %67, %68 : vector<2x64x128xf32>
    %70 = vector.shape_cast %45 : vector<1x128xf32> to vector<1x1x128xf32>
    %71 = vector.broadcast %70 : vector<1x1x128xf32> to vector<2x64x128xf32>
    %72 = arith.mulf %69, %71 : vector<2x64x128xf32>
    %73 = vector.shape_cast %46 : vector<1x128xf32> to vector<1x1x128xf32>
    %74 = vector.broadcast %73 : vector<1x1x128xf32> to vector<2x64x128xf32>
    %75 = arith.addf %72, %74 : vector<2x64x128xf32>
    %76 = vector.shape_cast %75 : vector<2x64x128xf32> to vector<128x128xf32>
    %c0_35 = arith.constant 0 : index
    %c0_36 = arith.constant 0 : index
    %77 = vector.load %arg12[%c0_35, %c0_36] : memref<128x384xbf16, #tpu.memory_space<vmem>>, vector<128x384xbf16>
    %78 = arith.truncf %76 : vector<128x128xf32> to vector<128x128xbf16>
    %cst_37 = arith.constant dense<0.000000e+00> : vector<128x384xf32>
    %79 = tpu.matmul %78, %77, %cst_37 {dimension_numbers = #tpu.dot_dimension_numbers<[1], [0], [0], [1], [0, 0, 1, 1], [], []>} : vector<128x128xbf16>, vector<128x384xbf16>, vector<128x384xf32> -> vector<128x384xf32>
    %80 = arith.truncf %79 : vector<128x384xf32> to vector<128x384xbf16>
    %81 = vector.extract_strided_slice %80 {offsets = [0, 0], sizes = [128, 128], strides = [1, 1]} : vector<128x384xbf16> to vector<128x128xbf16>
    %82 = vector.shape_cast %81 : vector<128x128xbf16> to vector<2x64x128xbf16>
    %83 = vector.extract_strided_slice %80 {offsets = [0, 128], sizes = [128, 128], strides = [1, 1]} : vector<128x384xbf16> to vector<128x128xbf16>
    %84 = vector.shape_cast %83 : vector<128x128xbf16> to vector<2x64x128xbf16>
    %85 = vector.extract_strided_slice %80 {offsets = [0, 256], sizes = [128, 128], strides = [1, 1]} : vector<128x384xbf16> to vector<128x128xbf16>
    %86 = vector.shape_cast %85 : vector<128x128xbf16> to vector<2x64x128xbf16>
    %cst_38 = arith.constant dense<0.000000e+00> : vector<2x64x64xf32>
    %87 = tpu.matmul %82, %84, %cst_38 {dimension_numbers = #tpu.dot_dimension_numbers<[2], [2], [1], [1], [0, 0, 0, 1, 1, 1], [0], [0]>} : vector<2x64x128xbf16>, vector<2x64x128xbf16>, vector<2x64x64xf32> -> vector<2x64x64xf32>
    %cst_39 = arith.constant dense<0xFF800000> : vector<2x64xf32>
    %88 = vector.multi_reduction <maximumf>, %87, %cst_39 [2] : vector<2x64x64xf32> to vector<2x64xf32>
    %89 = vector.shape_cast %88 : vector<2x64xf32> to vector<2x64x1xf32>
    %90 = vector.broadcast %89 : vector<2x64x1xf32> to vector<2x64x64xf32>
    %91 = arith.subf %87, %90 : vector<2x64x64xf32>
    %92 = math.exp %91 : vector<2x64x64xf32>
    %cst_40 = arith.constant dense<0.000000e+00> : vector<2x64xf32>
    %93 = vector.multi_reduction <add>, %92, %cst_40 [2] : vector<2x64x64xf32> to vector<2x64xf32>
    %94 = vector.shape_cast %93 : vector<2x64xf32> to vector<2x64x1xf32>
    %95 = arith.truncf %92 : vector<2x64x64xf32> to vector<2x64x64xbf16>
    %cst_41 = arith.constant dense<0.000000e+00> : vector<2x64x128xf32>
    %96 = tpu.matmul %95, %86, %cst_41 {dimension_numbers = #tpu.dot_dimension_numbers<[2], [1], [1], [2], [0, 0, 0, 1, 1, 2], [0], [0]>} : vector<2x64x64xbf16>, vector<2x64x128xbf16>, vector<2x64x128xf32> -> vector<2x64x128xf32>
    %97 = tpu.reciprocal %94 {approx = true} : vector<2x64x1xf32> -> vector<2x64x1xf32>
    %98 = vector.broadcast %97 : vector<2x64x1xf32> to vector<2x64x128xf32>
    %99 = arith.mulf %96, %98 : vector<2x64x128xf32>
    %100 = vector.shape_cast %99 : vector<2x64x128xf32> to vector<128x128xf32>
    %c0_42 = arith.constant 0 : index
    %c0_43 = arith.constant 0 : index
    %101 = vector.load %arg13[%c0_42, %c0_43] : memref<128x128xbf16, #tpu.memory_space<vmem>>, vector<128x128xbf16>
    %102 = arith.truncf %100 : vector<128x128xf32> to vector<128x128xbf16>
    %cst_44 = arith.constant dense<0.000000e+00> : vector<128x128xf32>
    %103 = tpu.matmul %102, %101, %cst_44 {dimension_numbers = #tpu.dot_dimension_numbers<[1], [0], [0], [1], [0, 0, 1, 1], [], []>} : vector<128x128xbf16>, vector<128x128xbf16>, vector<128x128xf32> -> vector<128x128xf32>
    %104 = arith.addf %41, %41 : vector<128x128xf32>
    %105 = arith.addf %104, %103 : vector<128x128xf32>
    %c0_45 = arith.constant 0 : index
    %c0_46 = arith.constant 0 : index
    %106 = vector.load %arg14[%c0_45, %c0_46] : memref<128x384xbf16, #tpu.memory_space<vmem>>, vector<128x384xbf16>
    %107 = arith.truncf %105 : vector<128x128xf32> to vector<128x128xbf16>
    %cst_47 = arith.constant dense<0.000000e+00> : vector<128x384xf32>
    %108 = tpu.matmul %107, %106, %cst_47 {dimension_numbers = #tpu.dot_dimension_numbers<[1], [0], [0], [1], [0, 0, 1, 1], [], []>} : vector<128x128xbf16>, vector<128x384xbf16>, vector<128x384xf32> -> vector<128x384xf32>
    %109 = arith.truncf %108 : vector<128x384xf32> to vector<128x384xbf16>
    %110 = vector.extract_strided_slice %109 {offsets = [0, 0], sizes = [128, 128], strides = [1, 1]} : vector<128x384xbf16> to vector<128x128xbf16>
    %111 = vector.shape_cast %110 : vector<128x128xbf16> to vector<2x64x128xbf16>
    %112 = vector.extract_strided_slice %109 {offsets = [0, 128], sizes = [128, 128], strides = [1, 1]} : vector<128x384xbf16> to vector<128x128xbf16>
    %113 = vector.shape_cast %112 : vector<128x128xbf16> to vector<2x64x128xbf16>
    %114 = vector.extract_strided_slice %109 {offsets = [0, 256], sizes = [128, 128], strides = [1, 1]} : vector<128x384xbf16> to vector<128x128xbf16>
    %115 = vector.shape_cast %114 : vector<128x128xbf16> to vector<2x64x128xbf16>
    %116 = vector.extract_strided_slice %111 {offsets = [0, 0, 0], sizes = [2, 64, 32], strides = [1, 1, 1]} : vector<2x64x128xbf16> to vector<2x64x32xbf16>
    %117 = vector.extract_strided_slice %111 {offsets = [0, 0, 32], sizes = [2, 64, 32], strides = [1, 1, 1]} : vector<2x64x128xbf16> to vector<2x64x32xbf16>
    %118 = vector.extract_strided_slice %111 {offsets = [0, 0, 64], sizes = [2, 64, 32], strides = [1, 1, 1]} : vector<2x64x128xbf16> to vector<2x64x32xbf16>
    %119 = vector.extract_strided_slice %111 {offsets = [0, 0, 96], sizes = [2, 64, 32], strides = [1, 1, 1]} : vector<2x64x128xbf16> to vector<2x64x32xbf16>
    %120 = tpu.concatenate %116, %117, %118, %119 in 0 : vector<2x64x32xbf16>, vector<2x64x32xbf16>, vector<2x64x32xbf16>, vector<2x64x32xbf16> -> vector<8x64x32xbf16>
    %121 = vector.extract_strided_slice %113 {offsets = [0, 0, 0], sizes = [2, 64, 32], strides = [1, 1, 1]} : vector<2x64x128xbf16> to vector<2x64x32xbf16>
    %122 = vector.extract_strided_slice %113 {offsets = [0, 0, 32], sizes = [2, 64, 32], strides = [1, 1, 1]} : vector<2x64x128xbf16> to vector<2x64x32xbf16>
    %123 = vector.extract_strided_slice %113 {offsets = [0, 0, 64], sizes = [2, 64, 32], strides = [1, 1, 1]} : vector<2x64x128xbf16> to vector<2x64x32xbf16>
    %124 = vector.extract_strided_slice %113 {offsets = [0, 0, 96], sizes = [2, 64, 32], strides = [1, 1, 1]} : vector<2x64x128xbf16> to vector<2x64x32xbf16>
    %125 = tpu.concatenate %121, %122, %123, %124 in 0 : vector<2x64x32xbf16>, vector<2x64x32xbf16>, vector<2x64x32xbf16>, vector<2x64x32xbf16> -> vector<8x64x32xbf16>
    %126 = vector.extract_strided_slice %115 {offsets = [0, 0, 0], sizes = [2, 64, 32], strides = [1, 1, 1]} : vector<2x64x128xbf16> to vector<2x64x32xbf16>
    %127 = vector.extract_strided_slice %115 {offsets = [0, 0, 32], sizes = [2, 64, 32], strides = [1, 1, 1]} : vector<2x64x128xbf16> to vector<2x64x32xbf16>
    %128 = vector.extract_strided_slice %115 {offsets = [0, 0, 64], sizes = [2, 64, 32], strides = [1, 1, 1]} : vector<2x64x128xbf16> to vector<2x64x32xbf16>
    %129 = vector.extract_strided_slice %115 {offsets = [0, 0, 96], sizes = [2, 64, 32], strides = [1, 1, 1]} : vector<2x64x128xbf16> to vector<2x64x32xbf16>
    %130 = tpu.concatenate %126, %127, %128, %129 in 0 : vector<2x64x32xbf16>, vector<2x64x32xbf16>, vector<2x64x32xbf16>, vector<2x64x32xbf16> -> vector<8x64x32xbf16>
    %cst_48 = arith.constant dense<0.000000e+00> : vector<8x64x64xf32>
    %131 = tpu.matmul %120, %125, %cst_48 {dimension_numbers = #tpu.dot_dimension_numbers<[2], [2], [1], [1], [0, 0, 0, 1, 1, 1], [0], [0]>} : vector<8x64x32xbf16>, vector<8x64x32xbf16>, vector<8x64x64xf32> -> vector<8x64x64xf32>
    %cst_49 = arith.constant dense<0xFF800000> : vector<8x64xf32>
    %132 = vector.multi_reduction <maximumf>, %131, %cst_49 [2] : vector<8x64x64xf32> to vector<8x64xf32>
    %133 = vector.shape_cast %132 : vector<8x64xf32> to vector<8x64x1xf32>
    %134 = vector.broadcast %133 : vector<8x64x1xf32> to vector<8x64x64xf32>
    %135 = arith.subf %131, %134 : vector<8x64x64xf32>
    %136 = math.exp %135 : vector<8x64x64xf32>
    %cst_50 = arith.constant dense<0.000000e+00> : vector<8x64xf32>
    %137 = vector.multi_reduction <add>, %136, %cst_50 [2] : vector<8x64x64xf32> to vector<8x64xf32>
    %138 = vector.shape_cast %137 : vector<8x64xf32> to vector<8x64x1xf32>
    %139 = arith.truncf %136 : vector<8x64x64xf32> to vector<8x64x64xbf16>
    %cst_51 = arith.constant dense<0.000000e+00> : vector<8x64x32xf32>
    %140 = tpu.matmul %139, %130, %cst_51 {dimension_numbers = #tpu.dot_dimension_numbers<[2], [1], [1], [2], [0, 0, 0, 1, 1, 2], [0], [0]>} : vector<8x64x64xbf16>, vector<8x64x32xbf16>, vector<8x64x32xf32> -> vector<8x64x32xf32>
    %141 = tpu.reciprocal %138 {approx = true} : vector<8x64x1xf32> -> vector<8x64x1xf32>
    %142 = vector.broadcast %141 : vector<8x64x1xf32> to vector<8x64x32xf32>
    %143 = arith.mulf %140, %142 : vector<8x64x32xf32>
    %144 = arith.truncf %143 : vector<8x64x32xf32> to vector<8x64x32xbf16>
    %145 = vector.shape_cast %144 : vector<8x64x32xbf16> to vector<4x128x32xbf16>
    %c0_52 = arith.constant 0 : index
    %c0_53 = arith.constant 0 : index
    %146 = vector.load %arg15[%c0_52, %c0_53] : memref<128x128xbf16, #tpu.memory_space<vmem>>, vector<128x128xbf16>
    %147 = vector.shape_cast %146 : vector<128x128xbf16> to vector<4x32x128xbf16>
    %cst_54 = arith.constant dense<0.000000e+00> : vector<4x128x128xf32>
    %148 = tpu.matmul %145, %147, %cst_54 {dimension_numbers = #tpu.dot_dimension_numbers<[2], [1], [1], [2], [0, 0, 0, 1, 1, 2], [0], [0]>} : vector<4x128x32xbf16>, vector<4x32x128xbf16>, vector<4x128x128xf32> -> vector<4x128x128xf32>
    %cst_55 = arith.constant dense<0.000000e+00> : vector<128x128xf32>
    %149 = vector.multi_reduction <add>, %148, %cst_55 [0] : vector<4x128x128xf32> to vector<128x128xf32>
    %c0_56 = arith.constant 0 : index
    %c0_57 = arith.constant 0 : index
    %150 = vector.load %arg16[%c0_56, %c0_57] : memref<1x128xf32, #tpu.memory_space<vmem>>, vector<1x128xf32>
    %151 = vector.broadcast %150 : vector<1x128xf32> to vector<128x128xf32>
    %152 = arith.addf %149, %151 : vector<128x128xf32>
    %153 = arith.addf %152, %105 : vector<128x128xf32>
    %c0_58 = arith.constant 0 : index
    %c0_59 = arith.constant 0 : index
    %154 = vector.load %arg17[%c0_58, %c0_59] : memref<128x64xbf16, #tpu.memory_space<vmem>>, vector<128x64xbf16>
    %155 = arith.truncf %153 : vector<128x128xf32> to vector<128x128xbf16>
    %cst_60 = arith.constant dense<0.000000e+00> : vector<128x64xf32>
    %156 = tpu.matmul %155, %154, %cst_60 {dimension_numbers = #tpu.dot_dimension_numbers<[1], [0], [0], [1], [0, 0, 1, 1], [], []>} : vector<128x128xbf16>, vector<128x64xbf16>, vector<128x64xf32> -> vector<128x64xf32>
    %c0_61 = arith.constant 0 : index
    %c0_62 = arith.constant 0 : index
    %157 = vector.load %arg18[%c0_61, %c0_62] : memref<1x64xf32, #tpu.memory_space<vmem>>, vector<1x64xf32>
    %158 = vector.broadcast %157 : vector<1x64xf32> to vector<128x64xf32>
    %159 = arith.addf %156, %158 : vector<128x64xf32>
    %c0_63 = arith.constant 0 : index
    %c0_64 = arith.constant 0 : index
    %160 = vector.load %arg1[%c0_63, %c0_64] : memref<128x64xf32, #tpu.memory_space<vmem>>, vector<128x64xf32>
    %161 = arith.addf %159, %160 : vector<128x64xf32>
    %c0_65 = arith.constant 0 : index
    %c0_66 = arith.constant 0 : index
    %162 = vector.load %arg19[%c0_65, %c0_66] : memref<128x64xf32, #tpu.memory_space<vmem>>, vector<128x64xf32>
    tpu.vector_store %arg19[%c0_65, %c0_66], %161 {strides = array<i32>} : memref<128x64xf32, #tpu.memory_space<vmem>>, vector<128x64xf32>,
    return
  }
  func.func @transform_0(%arg0: i32) -> (i32, i32) {
    %c0_i32 = arith.constant 0 : i32
    %c0_i32_0 = arith.constant 0 : i32
    return %arg0, %c0_i32 : i32, i32
  }
  func.func @transform_1(%arg0: i32) -> (i32, i32) {
    %c0_i32 = arith.constant 0 : i32
    %c0_i32_0 = arith.constant 0 : i32
    %c0_i32_1 = arith.constant 0 : i32
    return %c0_i32, %c0_i32_0 : i32, i32
  }
  func.func @transform_2(%arg0: i32) -> (i32, i32) {
    %c0_i32 = arith.constant 0 : i32
    %c0_i32_0 = arith.constant 0 : i32
    %c0_i32_1 = arith.constant 0 : i32
    return %c0_i32, %c0_i32_0 : i32, i32
  }
  func.func @transform_3(%arg0: i32) -> (i32, i32) {
    %c0_i32 = arith.constant 0 : i32
    %c0_i32_0 = arith.constant 0 : i32
    %c0_i32_1 = arith.constant 0 : i32
    return %c0_i32, %c0_i32_0 : i32, i32
  }
  func.func @transform_4(%arg0: i32) -> (i32, i32) {
    %c0_i32 = arith.constant 0 : i32
    %c0_i32_0 = arith.constant 0 : i32
    %c0_i32_1 = arith.constant 0 : i32
    return %c0_i32, %c0_i32_0 : i32, i32
  }
  func.func @transform_5(%arg0: i32) -> (i32, i32) {
    %c0_i32 = arith.constant 0 : i32
    %c0_i32_0 = arith.constant 0 : i32
    %c0_i32_1 = arith.constant 0 : i32
    return %c0_i32, %c0_i32_0 : i32, i32
  }
  func.func @transform_6(%arg0: i32) -> (i32, i32) {
    %c0_i32 = arith.constant 0 : i32
    %c0_i32_0 = arith.constant 0 : i32
    %c0_i32_1 = arith.constant 0 : i32
    return %c0_i32, %c0_i32_0 : i32, i32
  }
  func.func @transform_7(%arg0: i32) -> (i32, i32) {
    %c0_i32 = arith.constant 0 : i32
    %c0_i32_0 = arith.constant 0 : i32
    %c0_i32_1 = arith.constant 0 : i32
    return %c0_i32, %c0_i32_0 : i32, i32
  }
  func.func @transform_8(%arg0: i32) -> (i32, i32) {
    %c0_i32 = arith.constant 0 : i32
    %c0_i32_0 = arith.constant 0 : i32
    %c0_i32_1 = arith.constant 0 : i32
    return %c0_i32, %c0_i32_0 : i32, i32
  }
  func.func @transform_9(%arg0: i32) -> (i32, i32) {
    %c0_i32 = arith.constant 0 : i32
    %c0_i32_0 = arith.constant 0 : i32
    %c0_i32_1 = arith.constant 0 : i32
    return %c0_i32, %c0_i32_0 : i32, i32
  }
  func.func @transform_10(%arg0: i32) -> (i32, i32) {
    %c0_i32 = arith.constant 0 : i32
    %c0_i32_0 = arith.constant 0 : i32
    %c0_i32_1 = arith.constant 0 : i32
    return %c0_i32, %c0_i32_0 : i32, i32
  }
  func.func @transform_11(%arg0: i32) -> (i32, i32) {
    %c0_i32 = arith.constant 0 : i32
    %c0_i32_0 = arith.constant 0 : i32
    %c0_i32_1 = arith.constant 0 : i32
    return %c0_i32, %c0_i32_0 : i32, i32
  }
  func.func @transform_12(%arg0: i32) -> (i32, i32) {
    %c0_i32 = arith.constant 0 : i32
    %c0_i32_0 = arith.constant 0 : i32
    %c0_i32_1 = arith.constant 0 : i32
    return %c0_i32, %c0_i32_0 : i32, i32
  }
  func.func @transform_13(%arg0: i32) -> (i32, i32) {
    %c0_i32 = arith.constant 0 : i32
    %c0_i32_0 = arith.constant 0 : i32
    %c0_i32_1 = arith.constant 0 : i32
    return %c0_i32, %c0_i32_0 : i32, i32
  }
  func.func @transform_14(%arg0: i32) -> (i32, i32) {
    %c0_i32 = arith.constant 0 : i32
    %c0_i32_0 = arith.constant 0 : i32
    %c0_i32_1 = arith.constant 0 : i32
    return %c0_i32, %c0_i32_0 : i32, i32
  }
  func.func @transform_15(%arg0: i32) -> (i32, i32) {
    %c0_i32 = arith.constant 0 : i32
    %c0_i32_0 = arith.constant 0 : i32
    %c0_i32_1 = arith.constant 0 : i32
    return %c0_i32, %c0_i32_0 : i32, i32
  }
  func.func @transform_16(%arg0: i32) -> (i32, i32) {
    %c0_i32 = arith.constant 0 : i32
    %c0_i32_0 = arith.constant 0 : i32
    %c0_i32_1 = arith.constant 0 : i32
    return %c0_i32, %c0_i32_0 : i32, i32
  }
  func.func @transform_17(%arg0: i32) -> (i32, i32) {
    %c0_i32 = arith.constant 0 : i32
    %c0_i32_0 = arith.constant 0 : i32
    %c0_i32_1 = arith.constant 0 : i32
    return %c0_i32, %c0_i32_0 : i32, i32
  }
  func.func @transform_18(%arg0: i32) -> (i32, i32) {
    %c0_i32 = arith.constant 0 : i32
    %c0_i32_0 = arith.constant 0 : i32
    return %arg0, %c0_i32 : i32, i32
  }
}

</mosaic_0001>

<llo_original>
// kernel: tpu_custom_call.1
$region0: #{tpu_custom_call.1}
  #allocation0 [shape = 'u32[]', space=smem, size = 0x4, offset = 0x4, fixed_abs, tag = 'smem constant byte address 0x4 - core index']
  #allocation1 [shape = 'u32[144,128]{1,0:T(1,128)}', space=vmem, size = 0x12000, scoped, tag = 'internal scratch']
  %s0 = inlined_call_operand.vmem [shape: f32[512,64], index: 0, kind: input, shape index: {}]
  %s1 = inlined_call_operand.vmem [shape: f32[1,64], index: 1, kind: input, shape index: {}]
  %s2 = inlined_call_operand.vmem [shape: f32[1,64], index: 2, kind: input, shape index: {}]
  %s3 = inlined_call_operand.vmem [shape: f32[64,32], index: 3, kind: input, shape index: {}]
  %s4 = inlined_call_operand.vmem [shape: f32[32,64], index: 4, kind: input, shape index: {}]
  %s5 = inlined_call_operand.vmem [shape: bf16[64,128], index: 5, kind: input, shape index: {}]
  %s6 = inlined_call_operand.vmem [shape: f32[1,128], index: 6, kind: input, shape index: {}]
  %s7 = inlined_call_operand.vmem [shape: f32[1,128], index: 7, kind: input, shape index: {}]
  %s8 = inlined_call_operand.vmem [shape: f32[1,128], index: 8, kind: input, shape index: {}]
  %s9 = inlined_call_operand.vmem [shape: f32[128,32], index: 9, kind: input, shape index: {}]
  %s10 = inlined_call_operand.vmem [shape: f32[32,128], index: 10, kind: input, shape index: {}]
  %s11 = inlined_call_operand.vmem [shape: bf16[128,384], index: 11, kind: input, shape index: {}]
  %s12 = inlined_call_operand.vmem [shape: bf16[128,128], index: 12, kind: input, shape index: {}]
  %s13 = inlined_call_operand.vmem [shape: bf16[128,384], index: 13, kind: input, shape index: {}]
  %s14 = inlined_call_operand.vmem [shape: bf16[128,128], index: 14, kind: input, shape index: {}]
  %s15 = inlined_call_operand.vmem [shape: f32[1,128], index: 15, kind: input, shape index: {}]
  %s16 = inlined_call_operand.vmem [shape: bf16[128,64], index: 16, kind: input, shape index: {}]
  %s17 = inlined_call_operand.vmem [shape: f32[1,64], index: 17, kind: input, shape index: {}]
  %s18 = inlined_call_operand.vmem [shape: f32[512,64], index: 18, kind: output, shape index: {}]
  %s19 = sld [smem:[#allocation0]]
  $region105: #{tpu_custom_call.1} parent=0
    _
  %s21 = ssub.s32 1, %s19
  %s22 = scalar_select 0, %s21, %s19
  loop: start=0, step=1, limit=6
  $region2: #{tpu_custom_call.1} parent=0 // loop_pre_header
    _
  $region3: #{tpu_custom_call.1} parent=0 // loop_header
    %s24 = sphi 0, %s28
    %p25 = scmp.ge.s32.totalorder %s24, 6
    %s34 = sphi 0, %s36
    %s37 = sphi 0, %s34
    %s38 = sphi 0, %s37
    %s54 = sphi 0, %s38
    %s58 = sphi 0, %s58
    %s60 = sphi 0, %s58
    %s61 = sphi 0, %s60
    %s75 = sphi 0, %s61
    %s79 = sphi 0, %s79
    %s81 = sphi 0, %s79
    %s82 = sphi 0, %s81
    %s96 = sphi 0, %s82
    %s100 = sphi 0, %s100
    %s102 = sphi 0, %s100
    %s103 = sphi 0, %s102
    %s117 = sphi 0, %s103
    %s121 = sphi 0, %s121
    %s123 = sphi 0, %s121
    %s124 = sphi 0, %s123
    %s138 = sphi 0, %s124
    %s142 = sphi 0, %s142
    %s144 = sphi 0, %s142
    %s145 = sphi 0, %s144
    %s159 = sphi 0, %s145
    %s163 = sphi 0, %s163
    %s165 = sphi 0, %s163
    %s166 = sphi 0, %s165
    %s180 = sphi 0, %s166
    %s184 = sphi 0, %s184
    %s186 = sphi 0, %s184
    %s187 = sphi 0, %s186
    %s201 = sphi 0, %s187
    %s205 = sphi 0, %s205
    %s207 = sphi 0, %s205
    %s208 = sphi 0, %s207
    %s222 = sphi 0, %s208
    %s226 = sphi 0, %s226
    %s228 = sphi 0, %s226
    %s229 = sphi 0, %s228
    %s243 = sphi 0, %s229
    %s247 = sphi 0, %s247
    %s249 = sphi 0, %s247
    %s250 = sphi 0, %s249
    %s264 = sphi 0, %s250
    %s268 = sphi 0, %s268
    %s270 = sphi 0, %s268
    %s271 = sphi 0, %s270
    %s285 = sphi 0, %s271
    %s289 = sphi 0, %s289
    %s291 = sphi 0, %s289
    %s292 = sphi 0, %s291
    %s306 = sphi 0, %s292
    %s310 = sphi 0, %s310
    %s312 = sphi 0, %s310
    %s313 = sphi 0, %s312
    %s327 = sphi 0, %s313
    %s331 = sphi 0, %s331
    %s333 = sphi 0, %s331
    %s334 = sphi 0, %s333
    %s348 = sphi 0, %s334
    %s352 = sphi 0, %s352
    %s354 = sphi 0, %s352
    %s355 = sphi 0, %s354
    %s369 = sphi 0, %s355
    %s373 = sphi 0, %s373
    %s375 = sphi 0, %s373
    %s376 = sphi 0, %s375
    %s390 = sphi 0, %s376
    %s394 = sphi 0, %s394
    %s396 = sphi 0, %s394
    %s397 = sphi 0, %s396
    %s411 = sphi 0, %s397
    %s417 = sphi 0, %s419
    %s420 = sphi 0, %s417
    %s421 = sphi 0, %s420
    %s437 = sphi 0, %s421
  $region4: #{tpu_custom_call.1} parent=0 // loop_header_branch
    %27 = sbr.rel (%p25) target = $region8
  $region5: #{tpu_custom_call.1} parent=0 // loop_body
    %s29 = ssub.s32 %s24, 1
    %s30 = ssub.s32 %s24, 2
    %s31 = sadd.s32 %s24, 1
    %s32 = ssub.s32 %s24, %s31
    %p33 = scmp.eq.s32.totalorder %s32, 0
    %s35 = sadd.s32 %s34, 1
    %s36 = scalar_select %p33, %s34, %s35
    %p39 = pneg %p33
    %p40 = scmp.eq.s32.totalorder %s24, 3
    %p41 = por %p39, %p40
    %p42 = scmp.ne.s32.totalorder %s34, %s37
    %p43 = scmp.eq.s32.totalorder %s24, 0
    %p44 = por %p42, %p43
    %p45 = scmp.ne.s32.totalorder %s34, %s37
    %p46 = scmp.eq.s32.totalorder %s29, 3
    %p47 = por %p45, %p46
    %p48 = scmp.ne.s32.totalorder %s37, %s38
    %p49 = scmp.eq.s32.totalorder %s29, 0
    %p50 = por %p48, %p49
    %p51 = scmp.ne.s32.totalorder %s37, %s38
    %p52 = scmp.eq.s32.totalorder %s30, 3
    %p53 = por %p51, %p52
    %p55 = scmp.ne.s32.totalorder %s38, %s54
    %p56 = scmp.eq.s32.totalorder %s30, 0
    %p57 = por %p55, %p56
    %s59 = sadd.s32 %s58, 1
    %p62 = scmp.eq.s32.totalorder %s24, 3
    %p63 = scmp.ne.s32.totalorder %s58, %s60
    %p64 = scmp.eq.s32.totalorder %s24, 0
    %p65 = por %p63, %p64
    %p66 = scmp.ne.s32.totalorder %s58, %s60
    %p67 = scmp.eq.s32.totalorder %s29, 3
    %p68 = por %p66, %p67
    %p69 = scmp.ne.s32.totalorder %s60, %s61
    %p70 = scmp.eq.s32.totalorder %s29, 0
    %p71 = por %p69, %p70
    %p72 = scmp.ne.s32.totalorder %s60, %s61
    %p73 = scmp.eq.s32.totalorder %s30, 3
    %p74 = por %p72, %p73
    %p76 = scmp.ne.s32.totalorder %s61, %s75
    %p77 = scmp.eq.s32.totalorder %s30, 0
    %p78 = por %p76, %p77
    %s80 = sadd.s32 %s79, 1
    %p83 = scmp.eq.s32.totalorder %s24, 3
    %p84 = scmp.ne.s32.totalorder %s79, %s81
    %p85 = scmp.eq.s32.totalorder %s24, 0
    %p86 = por %p84, %p85
    %p87 = scmp.ne.s32.totalorder %s79, %s81
    %p88 = scmp.eq.s32.totalorder %s29, 3
    %p89 = por %p87, %p88
    %p90 = scmp.ne.s32.totalorder %s81, %s82
    %p91 = scmp.eq.s32.totalorder %s29, 0
    %p92 = por %p90, %p91
    %p93 = scmp.ne.s32.totalorder %s81, %s82
    %p94 = scmp.eq.s32.totalorder %s30, 3
    %p95 = por %p93, %p94
    %p97 = scmp.ne.s32.totalorder %s82, %s96
    %p98 = scmp.eq.s32.totalorder %s30, 0
    %p99 = por %p97, %p98
    %s101 = sadd.s32 %s100, 1
    %p104 = scmp.eq.s32.totalorder %s24, 3
    %p105 = scmp.ne.s32.totalorder %s100, %s102
    %p106 = scmp.eq.s32.totalorder %s24, 0
    %p107 = por %p105, %p106
    %p108 = scmp.ne.s32.totalorder %s100, %s102
    %p109 = scmp.eq.s32.totalorder %s29, 3
    %p110 = por %p108, %p109
    %p111 = scmp.ne.s32.totalorder %s102, %s103
    %p112 = scmp.eq.s32.totalorder %s29, 0
    %p113 = por %p111, %p112
    %p114 = scmp.ne.s32.totalorder %s102, %s103
    %p115 = scmp.eq.s32.totalorder %s30, 3
    %p116 = por %p114, %p115
    %p118 = scmp.ne.s32.totalorder %s103, %s117
    %p119 = scmp.eq.s32.totalorder %s30, 0
    %p120 = por %p118, %p119
    %s122 = sadd.s32 %s121, 1
    %p125 = scmp.eq.s32.totalorder %s24, 3
    %p126 = scmp.ne.s32.totalorder %s121, %s123
    %p127 = scmp.eq.s32.totalorder %s24, 0
    %p128 = por %p126, %p127
    %p129 = scmp.ne.s32.totalorder %s121, %s123
    %p130 = scmp.eq.s32.totalorder %s29, 3
    %p131 = por %p129, %p130
    %p132 = scmp.ne.s32.totalorder %s123, %s124
    %p133 = scmp.eq.s32.totalorder %s29, 0
    %p134 = por %p132, %p133
    %p135 = scmp.ne.s32.totalorder %s123, %s124
    %p136 = scmp.eq.s32.totalorder %s30, 3
    %p137 = por %p135, %p136
    %p139 = scmp.ne.s32.totalorder %s124, %s138
    %p140 = scmp.eq.s32.totalorder %s30, 0
    %p141 = por %p139, %p140
    %s143 = sadd.s32 %s142, 1
    %p146 = scmp.eq.s32.totalorder %s24, 3
    %p147 = scmp.ne.s32.totalorder %s142, %s144
    %p148 = scmp.eq.s32.totalorder %s24, 0
    %p149 = por %p147, %p148
    %p150 = scmp.ne.s32.totalorder %s142, %s144
    %p151 = scmp.eq.s32.totalorder %s29, 3
    %p152 = por %p150, %p151
    %p153 = scmp.ne.s32.totalorder %s144, %s145
    %p154 = scmp.eq.s32.totalorder %s29, 0
    %p155 = por %p153, %p154
    %p156 = scmp.ne.s32.totalorder %s144, %s145
    %p157 = scmp.eq.s32.totalorder %s30, 3
    %p158 = por %p156, %p157
    %p160 = scmp.ne.s32.totalorder %s145, %s159
    %p161 = scmp.eq.s32.totalorder %s30, 0
    %p162 = por %p160, %p161
    %s164 = sadd.s32 %s163, 1
    %p167 = scmp.eq.s32.totalorder %s24, 3
    %p168 = scmp.ne.s32.totalorder %s163, %s165
    %p169 = scmp.eq.s32.totalorder %s24, 0
    %p170 = por %p168, %p169
    %p171 = scmp.ne.s32.totalorder %s163, %s165
    %p172 = scmp.eq.s32.totalorder %s29, 3
    %p173 = por %p171, %p172
    %p174 = scmp.ne.s32.totalorder %s165, %s166
    %p175 = scmp.eq.s32.totalorder %s29, 0
    %p176 = por %p174, %p175
    %p177 = scmp.ne.s32.totalorder %s165, %s166
    %p178 = scmp.eq.s32.totalorder %s30, 3
    %p179 = por %p177, %p178
    %p181 = scmp.ne.s32.totalorder %s166, %s180
    %p182 = scmp.eq.s32.totalorder %s30, 0
    %p183 = por %p181, %p182
    %s185 = sadd.s32 %s184, 1
    %p188 = scmp.eq.s32.totalorder %s24, 3
    %p189 = scmp.ne.s32.totalorder %s184, %s186
    %p190 = scmp.eq.s32.totalorder %s24, 0
    %p191 = por %p189, %p190
    %p192 = scmp.ne.s32.totalorder %s184, %s186
    %p193 = scmp.eq.s32.totalorder %s29, 3
    %p194 = por %p192, %p193
    %p195 = scmp.ne.s32.totalorder %s186, %s187
    %p196 = scmp.eq.s32.totalorder %s29, 0
    %p197 = por %p195, %p196
    %p198 = scmp.ne.s32.totalorder %s186, %s187
    %p199 = scmp.eq.s32.totalorder %s30, 3
    %p200 = por %p198, %p199
    %p202 = scmp.ne.s32.totalorder %s187, %s201
    %p203 = scmp.eq.s32.totalorder %s30, 0
    %p204 = por %p202, %p203
    %s206 = sadd.s32 %s205, 1
    %p209 = scmp.eq.s32.totalorder %s24, 3
    %p210 = scmp.ne.s32.totalorder %s205, %s207
    %p211 = scmp.eq.s32.totalorder %s24, 0
    %p212 = por %p210, %p211
    %p213 = scmp.ne.s32.totalorder %s205, %s207
    %p214 = scmp.eq.s32.totalorder %s29, 3
    %p215 = por %p213, %p214
    %p216 = scmp.ne.s32.totalorder %s207, %s208
    %p217 = scmp.eq.s32.totalorder %s29, 0
    %p218 = por %p216, %p217
    %p219 = scmp.ne.s32.totalorder %s207, %s208
    %p220 = scmp.eq.s32.totalorder %s30, 3
    %p221 = por %p219, %p220
    %p223 = scmp.ne.s32.totalorder %s208, %s222
    %p224 = scmp.eq.s32.totalorder %s30, 0
    %p225 = por %p223, %p224
    %s227 = sadd.s32 %s226, 1
    %p230 = scmp.eq.s32.totalorder %s24, 3
    %p231 = scmp.ne.s32.totalorder %s226, %s228
    %p232 = scmp.eq.s32.totalorder %s24, 0
    %p233 = por %p231, %p232
    %p234 = scmp.ne.s32.totalorder %s226, %s228
    %p235 = scmp.eq.s32.totalorder %s29, 3
    %p236 = por %p234, %p235
    %p237 = scmp.ne.s32.totalorder %s228, %s229
    %p238 = scmp.eq.s32.totalorder %s29, 0
    %p239 = por %p237, %p238
    %p240 = scmp.ne.s32.totalorder %s228, %s229
    %p241 = scmp.eq.s32.totalorder %s30, 3
    %p242 = por %p240, %p241
    %p244 = scmp.ne.s32.totalorder %s229, %s243
    %p245 = scmp.eq.s32.totalorder %s30, 0
    %p246 = por %p244, %p245
    %s248 = sadd.s32 %s247, 1
    %p251 = scmp.eq.s32.totalorder %s24, 3
    %p252 = scmp.ne.s32.totalorder %s247, %s249
    %p253 = scmp.eq.s32.totalorder %s24, 0
    %p254 = por %p252, %p253
    %p255 = scmp.ne.s32.totalorder %s247, %s249
    %p256 = scmp.eq.s32.totalorder %s29, 3
    %p257 = por %p255, %p256
    %p258 = scmp.ne.s32.totalorder %s249, %s250
    %p259 = scmp.eq.s32.totalorder %s29, 0
    %p260 = por %p258, %p259
    %p261 = scmp.ne.s32.totalorder %s249, %s250
    %p262 = scmp.eq.s32.totalorder %s30, 3
    %p263 = por %p261, %p262
    %p265 = scmp.ne.s32.totalorder %s250, %s264
    %p266 = scmp.eq.s32.totalorder %s30, 0
    %p267 = por %p265, %p266
    %s269 = sadd.s32 %s268, 1
    %p272 = scmp.eq.s32.totalorder %s24, 3
    %p273 = scmp.ne.s32.totalorder %s268, %s270
    %p274 = scmp.eq.s32.totalorder %s24, 0
    %p275 = por %p273, %p274
    %p276 = scmp.ne.s32.totalorder %s268, %s270
    %p277 = scmp.eq.s32.totalorder %s29, 3
    %p278 = por %p276, %p277
    %p279 = scmp.ne.s32.totalorder %s270, %s271
    %p280 = scmp.eq.s32.totalorder %s29, 0
    %p281 = por %p279, %p280
    %p282 = scmp.ne.s32.totalorder %s270, %s271
    %p283 = scmp.eq.s32.totalorder %s30, 3
    %p284 = por %p282, %p283
    %p286 = scmp.ne.s32.totalorder %s271, %s285
    %p287 = scmp.eq.s32.totalorder %s30, 0
    %p288 = por %p286, %p287
    %s290 = sadd.s32 %s289, 1
    %p293 = scmp.eq.s32.totalorder %s24, 3
    %p294 = scmp.ne.s32.totalorder %s289, %s291
    %p295 = scmp.eq.s32.totalorder %s24, 0
    %p296 = por %p294, %p295
    %p297 = scmp.ne.s32.totalorder %s289, %s291
    %p298 = scmp.eq.s32.totalorder %s29, 3
    %p299 = por %p297, %p298
    %p300 = scmp.ne.s32.totalorder %s291, %s292
    %p301 = scmp.eq.s32.totalorder %s29, 0
    %p302 = por %p300, %p301
    %p303 = scmp.ne.s32.totalorder %s291, %s292
    %p304 = scmp.eq.s32.totalorder %s30, 3
    %p305 = por %p303, %p304
    %p307 = scmp.ne.s32.totalorder %s292, %s306
    %p308 = scmp.eq.s32.totalorder %s30, 0
    %p309 = por %p307, %p308
    %s311 = sadd.s32 %s310, 1
    %p314 = scmp.eq.s32.totalorder %s24, 3
    %p315 = scmp.ne.s32.totalorder %s310, %s312
    %p316 = scmp.eq.s32.totalorder %s24, 0
    %p317 = por %p315, %p316
    %p318 = scmp.ne.s32.totalorder %s310, %s312
    %p319 = scmp.eq.s32.totalorder %s29, 3
    %p320 = por %p318, %p319
    %p321 = scmp.ne.s32.totalorder %s312, %s313
    %p322 = scmp.eq.s32.totalorder %s29, 0
    %p323 = por %p321, %p322
    %p324 = scmp.ne.s32.totalorder %s312, %s313
    %p325 = scmp.eq.s32.totalorder %s30, 3
    %p326 = por %p324, %p325
    %p328 = scmp.ne.s32.totalorder %s313, %s327
    %p329 = scmp.eq.s32.totalorder %s30, 0
    %p330 = por %p328, %p329
    %s332 = sadd.s32 %s331, 1
    %p335 = scmp.eq.s32.totalorder %s24, 3
    %p336 = scmp.ne.s32.totalorder %s331, %s333
    %p337 = scmp.eq.s32.totalorder %s24, 0
    %p338 = por %p336, %p337
    %p339 = scmp.ne.s32.totalorder %s331, %s333
    %p340 = scmp.eq.s32.totalorder %s29, 3
    %p341 = por %p339, %p340
    %p342 = scmp.ne.s32.totalorder %s333, %s334
    %p343 = scmp.eq.s32.totalorder %s29, 0
    %p344 = por %p342, %p343
    %p345 = scmp.ne.s32.totalorder %s333, %s334
    %p346 = scmp.eq.s32.totalorder %s30, 3
    %p347 = por %p345, %p346
    %p349 = scmp.ne.s32.totalorder %s334, %s348
    %p350 = scmp.eq.s32.totalorder %s30, 0
    %p351 = por %p349, %p350
    %s353 = sadd.s32 %s352, 1
    %p356 = scmp.eq.s32.totalorder %s24, 3
    %p357 = scmp.ne.s32.totalorder %s352, %s354
    %p358 = scmp.eq.s32.totalorder %s24, 0
    %p359 = por %p357, %p358
    %p360 = scmp.ne.s32.totalorder %s352, %s354
    %p361 = scmp.eq.s32.totalorder %s29, 3
    %p362 = por %p360, %p361
    %p363 = scmp.ne.s32.totalorder %s354, %s355
    %p364 = scmp.eq.s32.totalorder %s29, 0
    %p365 = por %p363, %p364
    %p366 = scmp.ne.s32.totalorder %s354, %s355
    %p367 = scmp.eq.s32.totalorder %s30, 3
    %p368 = por %p366, %p367
    %p370 = scmp.ne.s32.totalorder %s355, %s369
    %p371 = scmp.eq.s32.totalorder %s30, 0
    %p372 = por %p370, %p371
    %s374 = sadd.s32 %s373, 1
    %p377 = scmp.eq.s32.totalorder %s24, 3
    %p378 = scmp.ne.s32.totalorder %s373, %s375
    %p379 = scmp.eq.s32.totalorder %s24, 0
    %p380 = por %p378, %p379
    %p381 = scmp.ne.s32.totalorder %s373, %s375
    %p382 = scmp.eq.s32.totalorder %s29, 3
    %p383 = por %p381, %p382
    %p384 = scmp.ne.s32.totalorder %s375, %s376
    %p385 = scmp.eq.s32.totalorder %s29, 0
    %p386 = por %p384, %p385
    %p387 = scmp.ne.s32.totalorder %s375, %s376
    %p388 = scmp.eq.s32.totalorder %s30, 3
    %p389 = por %p387, %p388
    %p391 = scmp.ne.s32.totalorder %s376, %s390
    %p392 = scmp.eq.s32.totalorder %s30, 0
    %p393 = por %p391, %p392
    %s395 = sadd.s32 %s394, 1
    %p398 = scmp.eq.s32.totalorder %s24, 3
    %p399 = scmp.ne.s32.totalorder %s394, %s396
    %p400 = scmp.eq.s32.totalorder %s24, 0
    %p401 = por %p399, %p400
    %p402 = scmp.ne.s32.totalorder %s394, %s396
    %p403 = scmp.eq.s32.totalorder %s29, 3
    %p404 = por %p402, %p403
    %p405 = scmp.ne.s32.totalorder %s396, %s397
    %p406 = scmp.eq.s32.totalorder %s29, 0
    %p407 = por %p405, %p406
    %p408 = scmp.ne.s32.totalorder %s396, %s397
    %p409 = scmp.eq.s32.totalorder %s30, 3
    %p410 = por %p408, %p409
    %p412 = scmp.ne.s32.totalorder %s397, %s411
    %p413 = scmp.eq.s32.totalorder %s30, 0
    %p414 = por %p412, %p413
    %s415 = ssub.s32 %s24, %s31
    %p416 = scmp.eq.s32.totalorder %s415, 0
    %s418 = sadd.s32 %s417, 1
    %s419 = scalar_select %p416, %s417, %s418
    %p422 = pneg %p416
    %p423 = scmp.eq.s32.totalorder %s24, 3
    %p424 = por %p422, %p423
    %p425 = scmp.ne.s32.totalorder %s417, %s420
    %p426 = scmp.eq.s32.totalorder %s24, 0
    %p427 = por %p425, %p426
    %p428 = scmp.ne.s32.totalorder %s417, %s420
    %p429 = scmp.eq.s32.totalorder %s29, 3
    %p430 = por %p428, %p429
    %p431 = scmp.ne.s32.totalorder %s420, %s421
    %p432 = scmp.eq.s32.totalorder %s29, 0
    %p433 = por %p431, %p432
    %p434 = scmp.ne.s32.totalorder %s420, %s421
    %p435 = scmp.eq.s32.totalorder %s30, 3
    %p436 = por %p434, %p435
    %p438 = scmp.ne.s32.totalorder %s421, %s437
    %p439 = scmp.eq.s32.totalorder %s30, 0
    %p440 = por %p438, %p439
    %p441 = scmp.le.s32.totalorder 1, %s24
    %p442 = scmp.lt.s32.totalorder %s24, 5
    %p443 = pnand %p441, %p442
    %p444 = pneg %p443
    // Predicated region
    $region9: #{tpu_custom_call.1} parent=5 // pred_check
      _
    $region10: #{tpu_custom_call.1} parent=5 // pred_check_branch
      %446 = sbr.rel (%p443) target = $region12
    $region11: #{tpu_custom_call.1} parent=5 // pred_region
      %s447 = ssub.s32 %s24, 1
      // Predicated region
      $region13: #{tpu_custom_call.1} parent=11 // pred_check
        %p448 = pneg %p71
      $region14: #{tpu_custom_call.1} parent=11 // pred_check_branch
        %450 = sbr.rel (%p448) target = $region16
      $region15: #{tpu_custom_call.1} parent=11 // pred_region
        _
      $region16: #{tpu_custom_call.1} parent=11 // pred_fallthru
        _
      // Predicated region
      $region17: #{tpu_custom_call.1} parent=11 // pred_check
        %p451 = pneg %p92
      $region18: #{tpu_custom_call.1} parent=11 // pred_check_branch
        %453 = sbr.rel (%p451) target = $region20
      $region19: #{tpu_custom_call.1} parent=11 // pred_region
        _
      $region20: #{tpu_custom_call.1} parent=11 // pred_fallthru
        _
      // Predicated region
      $region21: #{tpu_custom_call.1} parent=11 // pred_check
        %p454 = pneg %p113
      $region22: #{tpu_custom_call.1} parent=11 // pred_check_branch
        %456 = sbr.rel (%p454) target = $region24
      $region23: #{tpu_custom_call.1} parent=11 // pred_region
        _
      $region24: #{tpu_custom_call.1} parent=11 // pred_fallthru
        _
      // Predicated region
      $region25: #{tpu_custom_call.1} parent=11 // pred_check
        %p457 = pneg %p134
      $region26: #{tpu_custom_call.1} parent=11 // pred_check_branch
        %459 = sbr.rel (%p457) target = $region28
      $region27: #{tpu_custom_call.1} parent=11 // pred_region
        _
      $region28: #{tpu_custom_call.1} parent=11 // pred_fallthru
        _
      // Predicated region
      $region29: #{tpu_custom_call.1} parent=11 // pred_check
        %p460 = pneg %p155
      $region30: #{tpu_custom_call.1} parent=11 // pred_check_branch
        %462 = sbr.rel (%p460) target = $region32
      $region31: #{tpu_custom_call.1} parent=11 // pred_region
        _
      $region32: #{tpu_custom_call.1} parent=11 // pred_fallthru
        _
      // Predicated region
      $region33: #{tpu_custom_call.1} parent=11 // pred_check
        %p463 = pneg %p176
      $region34: #{tpu_custom_call.1} parent=11 // pred_check_branch
        %465 = sbr.rel (%p463) target = $region36
      $region35: #{tpu_custom_call.1} parent=11 // pred_region
        _
      $region36: #{tpu_custom_call.1} parent=11 // pred_fallthru
        _
      // Predicated region
      $region37: #{tpu_custom_call.1} parent=11 // pred_check
        %p466 = pneg %p197
      $region38: #{tpu_custom_call.1} parent=11 // pred_check_branch
        %468 = sbr.rel (%p466) target = $region40
      $region39: #{tpu_custom_call.1} parent=11 // pred_region
        _
      $region40: #{tpu_custom_call.1} parent=11 // pred_fallthru
        _
      // Predicated region
      $region41: #{tpu_custom_call.1} parent=11 // pred_check
        %p469 = pneg %p218
      $region42: #{tpu_custom_call.1} parent=11 // pred_check_branch
        %471 = sbr.rel (%p469) target = $region44
      $region43: #{tpu_custom_call.1} parent=11 // pred_region
        _
      $region44: #{tpu_custom_call.1} parent=11 // pred_fallthru
        _
      // Predicated region
      $region45: #{tpu_custom_call.1} parent=11 // pred_check
        %p472 = pneg %p239
      $region46: #{tpu_custom_call.1} parent=11 // pred_check_branch
        %474 = sbr.rel (%p472) target = $region48
      $region47: #{tpu_custom_call.1} parent=11 // pred_region
        _
      $region48: #{tpu_custom_call.1} parent=11 // pred_fallthru
        _
      // Predicated region
      $region49: #{tpu_custom_call.1} parent=11 // pred_check
        %p475 = pneg %p260
      $region50: #{tpu_custom_call.1} parent=11 // pred_check_branch
        %477 = sbr.rel (%p475) target = $region52
      $region51: #{tpu_custom_call.1} parent=11 // pred_region
        _
      $region52: #{tpu_custom_call.1} parent=11 // pred_fallthru
        _
      // Predicated region
      $region53: #{tpu_custom_call.1} parent=11 // pred_check
        %p478 = pneg %p281
      $region54: #{tpu_custom_call.1} parent=11 // pred_check_branch
        %480 = sbr.rel (%p478) target = $region56
      $region55: #{tpu_custom_call.1} parent=11 // pred_region
        _
      $region56: #{tpu_custom_call.1} parent=11 // pred_fallthru
        _
      // Predicated region
      $region57: #{tpu_custom_call.1} parent=11 // pred_check
        %p481 = pneg %p302
      $region58: #{tpu_custom_call.1} parent=11 // pred_check_branch
        %483 = sbr.rel (%p481) target = $region60
      $region59: #{tpu_custom_call.1} parent=11 // pred_region
        _
      $region60: #{tpu_custom_call.1} parent=11 // pred_fallthru
        _
      // Predicated region
      $region61: #{tpu_custom_call.1} parent=11 // pred_check
        %p484 = pneg %p323
      $region62: #{tpu_custom_call.1} parent=11 // pred_check_branch
        %486 = sbr.rel (%p484) target = $region64
      $region63: #{tpu_custom_call.1} parent=11 // pred_region
        _
      $region64: #{tpu_custom_call.1} parent=11 // pred_fallthru
        _
      // Predicated region
      $region65: #{tpu_custom_call.1} parent=11 // pred_check
        %p487 = pneg %p344
      $region66: #{tpu_custom_call.1} parent=11 // pred_check_branch
        %489 = sbr.rel (%p487) target = $region68
      $region67: #{tpu_custom_call.1} parent=11 // pred_region
        _
      $region68: #{tpu_custom_call.1} parent=11 // pred_fallthru
        _
      // Predicated region
      $region69: #{tpu_custom_call.1} parent=11 // pred_check
        %p490 = pneg %p365
      $region70: #{tpu_custom_call.1} parent=11 // pred_check_branch
        %492 = sbr.rel (%p490) target = $region72
      $region71: #{tpu_custom_call.1} parent=11 // pred_region
        _
      $region72: #{tpu_custom_call.1} parent=11 // pred_fallthru
        _
      // Predicated region
      $region73: #{tpu_custom_call.1} parent=11 // pred_check
        %p493 = pneg %p386
      $region74: #{tpu_custom_call.1} parent=11 // pred_check_branch
        %495 = sbr.rel (%p493) target = $region76
      $region75: #{tpu_custom_call.1} parent=11 // pred_region
        _
      $region76: #{tpu_custom_call.1} parent=11 // pred_fallthru
        _
      // Predicated region
      $region77: #{tpu_custom_call.1} parent=11 // pred_check
        %p496 = pneg %p407
      $region78: #{tpu_custom_call.1} parent=11 // pred_check_branch
        %498 = sbr.rel (%p496) target = $region80
      $region79: #{tpu_custom_call.1} parent=11 // pred_region
        _
      $region80: #{tpu_custom_call.1} parent=11 // pred_fallthru
        _
    $region12: #{tpu_custom_call.1} parent=5 // pred_fallthru
      _
    %p499 = scmp.lt.s32.totalorder %s24, 4
    // Predicated region
    $region81: #{tpu_custom_call.1} parent=5 // pred_check
      %p500 = pneg %p499
    $region82: #{tpu_custom_call.1} parent=5 // pred_check_branch
      %502 = sbr.rel (%p500) target = $region84
    $region83: #{tpu_custom_call.1} parent=5 // pred_region
      // Predicated region
      $region85: #{tpu_custom_call.1} parent=83 // pred_check
        %p503 = pneg %p44
      $region86: #{tpu_custom_call.1} parent=83 // pred_check_branch
        %505 = sbr.rel (%p503) target = $region88
      $region87: #{tpu_custom_call.1} parent=83 // pred_region
        %s506 = smul.u32 16, %s24
        %p507 = scmp.lt.s32.totalorder %s506, 63
        %s508 = scalar_select %p507, %s506, 63
        %s509 = smul.addr %s508, 8
        %s510 = scalar_lea.vmem %s0, %s509
        %s511 = smul.u32 16, %s24
      $region88: #{tpu_custom_call.1} parent=83 // pred_fallthru
        _
    $region84: #{tpu_custom_call.1} parent=5 // pred_fallthru
      _
    %p512 = scmp.le.s32.totalorder 1, %s24
    %p513 = scmp.lt.s32.totalorder %s24, 5
    %p514 = pnand %p512, %p513
    %p515 = pneg %p514
    // Predicated region
    $region89: #{tpu_custom_call.1} parent=5 // pred_check
      _
    $region90: #{tpu_custom_call.1} parent=5 // pred_check_branch
      %517 = sbr.rel (%p514) target = $region92
    $region91: #{tpu_custom_call.1} parent=5 // pred_region
      %s518 = ssub.s32 %s24, 1
      %s519 = smul.u32 16, %s29
      %p520 = scmp.lt.s32.totalorder %s519, 63
      %s521 = scalar_select %p520, %s519, 63
      %s522 = smul.addr %s521, 8
      %s523 = scalar_lea.vmem %s0, %s522
      %p524 = pneg %p50
      %p525 = pneg %p47
      %p526 = pneg %p71
      %p527 = pneg %p68
      %p528 = pneg %p92
      %p529 = pneg %p89
      %p530 = pneg %p113
      %p531 = pneg %p110
      %p532 = pneg %p134
      %p533 = pneg %p131
      %p534 = pneg %p155
      %p535 = pneg %p152
      %p536 = pneg %p176
      %p537 = pneg %p173
      %p538 = pneg %p197
      %p539 = pneg %p194
      %p540 = pneg %p218
      %p541 = pneg %p215
      %p542 = pneg %p239
      %p543 = pneg %p236
      %p544 = pneg %p260
      %p545 = pneg %p257
      %p546 = pneg %p281
      %p547 = pneg %p278
      %p548 = pneg %p302
      %p549 = pneg %p299
      %p550 = pneg %p323
      %p551 = pneg %p320
      %p552 = pneg %p344
      %p553 = pneg %p341
      %p554 = pneg %p365
      %p555 = pneg %p362
      %p556 = pneg %p386
      %p557 = pneg %p383
      %p558 = pneg %p407
      %p559 = pneg %p404
      %p560 = pneg %p433
      %p561 = pneg %p430
      %s562 = smul.u32 16, %s29
      %p563 = scmp.lt.s32.totalorder %s562, 63
      %s564 = scalar_select %p563, %s562, 63
      %s565 = smul.addr %s564, 8
      %s566 = scalar_lea.vmem %s18, %s565
      %s567 = smul.u32 16, %s29
      %p568 = scmp.lt.s32.totalorder %s567, 63
      %s569 = scalar_select %p568, %s567, 63
      %s570 = smul.addr %s569, 8
      %s571 = scalar_lea.vmem %s0, %s570
      %s572 = smul.u32 16, %s29
      %s573 = smul.u32 16, %s29
      %p574 = scmp.lt.s32.totalorder %s573, 63
      %s575 = scalar_select %p574, %s573, 63
      %s576 = smul.addr %s575, 8
      %s577 = scalar_lea.vmem %s18, %s576
      %s578 = smul.u32 16, %s29
      %v580 = vld [vmem:[%s571] sm:$0xff]
      %v581 = vld [vmem:[%s571 + $0x8] sm:$0xff]
      %v582 = vld [vmem:[%s571 + $0x10] sm:$0xff]
      %v583 = vld [vmem:[%s571 + $0x18] sm:$0xff]
      %v584 = vld [vmem:[%s571 + $0x20] sm:$0xff]
      %v585 = vld [vmem:[%s571 + $0x28] sm:$0xff]
      %v586 = vld [vmem:[%s571 + $0x30] sm:$0xff]
      %v587 = vld [vmem:[%s571 + $0x38] sm:$0xff]
      %v588 = vld [vmem:[%s571 + $0x40] sm:$0xff]
      %v589 = vld [vmem:[%s571 + $0x48] sm:$0xff]
      %v590 = vld [vmem:[%s571 + $0x50] sm:$0xff]
      %v591 = vld [vmem:[%s571 + $0x58] sm:$0xff]
      %v592 = vld [vmem:[%s571 + $0x60] sm:$0xff]
      %v593 = vld [vmem:[%s571 + $0x68] sm:$0xff]
      %v594 = vld [vmem:[%s571 + $0x70] sm:$0xff]
      %v595 = vld [vmem:[%s571 + $0x78] sm:$0xff]
      %v596 = vld [vmem:[%s3] sm:$0xff]
      %v597 = vld [vmem:[%s3 + $0x8] sm:$0xff]
      %v598 = vld [vmem:[%s3 + $0x10] sm:$0xff]
      %v599 = vld [vmem:[%s3 + $0x18] sm:$0xff]
      %v600 = vld [vmem:[%s3 + $0x20] sm:$0xff]
      %v601 = vld [vmem:[%s3 + $0x28] sm:$0xff]
      %v602 = vld [vmem:[%s3 + $0x30] sm:$0xff]
      %v603 = vld [vmem:[%s3 + $0x38] sm:$0xff]
      %v604 = vld [vmem:[%s4] sm:$0xff]
      %v605 = vld [vmem:[%s4 + $0x8] sm:$0xff]
      %v606 = vld [vmem:[%s4 + $0x10] sm:$0xff]
      %v607 = vld [vmem:[%s4 + $0x18] sm:$0xff]
      %v608 = vld [vmem:[%s1] sm:$0x1]
      %v609 = vld [vmem:[%s2] sm:$0x1]
      %vm610 = vcmask 523264
      %v611 = vsel %vm610, %v580, 0.0
      %v612 = vsel %vm610, %v581, 0.0
      %v613 = vadd.f32 %v611, %v612
      %v614 = vsel %vm610, %v582, 0.0
      %v615 = vadd.f32 %v613, %v614
      %v616 = vsel %vm610, %v583, 0.0
      %v617 = vadd.f32 %v615, %v616
      %v618 = vsel %vm610, %v584, 0.0
      %v619 = vadd.f32 %v617, %v618
      %v620 = vsel %vm610, %v585, 0.0
      %v621 = vadd.f32 %v619, %v620
      %v622 = vsel %vm610, %v586, 0.0
      %v623 = vadd.f32 %v621, %v622
      %v624 = vsel %vm610, %v587, 0.0
      %v625 = vadd.f32 %v623, %v624
      %v626 = vrot.slane %v625, 4
      %v627 = vadd.f32 %v625, %v626
      %v628 = vrot.slane %v627, 2
      %v629 = vadd.f32 %v627, %v628
      %v630 = vrot.slane %v629, 1
      %v631 = vadd.f32 %v629, %v630
      %v632 = vsel %vm610, %v588, 0.0
      %v633 = vsel %vm610, %v589, 0.0
      %v634 = vadd.f32 %v632, %v633
      %v635 = vsel %vm610, %v590, 0.0
      %v636 = vadd.f32 %v634, %v635
      %v637 = vsel %vm610, %v591, 0.0
      %v638 = vadd.f32 %v636, %v637
      %v639 = vsel %vm610, %v592, 0.0
      %v640 = vadd.f32 %v638, %v639
      %v641 = vsel %vm610, %v593, 0.0
      %v642 = vadd.f32 %v640, %v641
      %v643 = vsel %vm610, %v594, 0.0
      %v644 = vadd.f32 %v642, %v643
      %v645 = vsel %vm610, %v595, 0.0
      %v646 = vadd.f32 %v644, %v645
      %v647 = vrot.slane %v646, 4
      %v648 = vadd.f32 %v646, %v647
      %v649 = vrot.slane %v648, 2
      %v650 = vadd.f32 %v648, %v649
      %v651 = vrot.slane %v650, 1
      %v652 = vadd.f32 %v650, %v651
      %v653 = vmul.f32 %v631, 0.015625
      %v654 = vmul.f32 %v652, 0.015625
      %v655 = vmul.f32 %v580, %v580
      %v656 = vmul.f32 %v581, %v581
      %v657 = vmul.f32 %v582, %v582
      %v658 = vmul.f32 %v583, %v583
      %v659 = vmul.f32 %v584, %v584
      %v660 = vmul.f32 %v585, %v585
      %v661 = vmul.f32 %v586, %v586
      %v662 = vmul.f32 %v587, %v587
      %v663 = vmul.f32 %v588, %v588
      %v664 = vmul.f32 %v589, %v589
      %v665 = vmul.f32 %v590, %v590
      %v666 = vmul.f32 %v591, %v591
      %v667 = vmul.f32 %v592, %v592
      %v668 = vmul.f32 %v593, %v593
      %v669 = vmul.f32 %v594, %v594
      %v670 = vmul.f32 %v595, %v595
      %v671 = vsel %vm610, %v655, 0.0
      %v672 = vsel %vm610, %v656, 0.0
      %v673 = vadd.f32 %v671, %v672
      %v674 = vsel %vm610, %v657, 0.0
      %v675 = vadd.f32 %v673, %v674
      %v676 = vsel %vm610, %v658, 0.0
      %v677 = vadd.f32 %v675, %v676
      %v678 = vsel %vm610, %v659, 0.0
      %v679 = vadd.f32 %v677, %v678
      %v680 = vsel %vm610, %v660, 0.0
      %v681 = vadd.f32 %v679, %v680
      %v682 = vsel %vm610, %v661, 0.0
      %v683 = vadd.f32 %v681, %v682
      %v684 = vsel %vm610, %v662, 0.0
      %v685 = vadd.f32 %v683, %v684
      %v686 = vrot.slane %v685, 4
      %v687 = vadd.f32 %v685, %v686
      %v688 = vrot.slane %v687, 2
      %v689 = vadd.f32 %v687, %v688
      %v690 = vrot.slane %v689, 1
      %v691 = vadd.f32 %v689, %v690
      %v692 = vsel %vm610, %v663, 0.0
      %v693 = vsel %vm610, %v664, 0.0
      %v694 = vadd.f32 %v692, %v693
      %v695 = vsel %vm610, %v665, 0.0
      %v696 = vadd.f32 %v694, %v695
      %v697 = vsel %vm610, %v666, 0.0
      %v698 = vadd.f32 %v696, %v697
      %v699 = vsel %vm610, %v667, 0.0
      %v700 = vadd.f32 %v698, %v699
      %v701 = vsel %vm610, %v668, 0.0
      %v702 = vadd.f32 %v700, %v701
      %v703 = vsel %vm610, %v669, 0.0
      %v704 = vadd.f32 %v702, %v703
      %v705 = vsel %vm610, %v670, 0.0
      %v706 = vadd.f32 %v704, %v705
      %v707 = vrot.slane %v706, 4
      %v708 = vadd.f32 %v706, %v707
      %v709 = vrot.slane %v708, 2
      %v710 = vadd.f32 %v708, %v709
      %v711 = vrot.slane %v710, 1
      %v712 = vadd.f32 %v710, %v711
      %v713 = vmul.f32 %v691, 0.015625
      %v714 = vmul.f32 %v712, 0.015625
      %vm717 = vcmask 1041409
      %v718 = vsel %vm717, %v654, %v653
      %vm722 = vcmask 1043459
      %v723 = vsel %vm722, %v714, %v713
      %vm725 = vcmask 1041408
      %v726 = vsel %vm725, %v718, %v723
      %v728 = vsel %vm610, %v726, 0
      %730 = vmatprep.subr.mxu0 0.0
      %731 = vmatpush1.msra.mxu0 %v596
      %732 = vmatprep.subr.mxu0 0.0
      %733 = vmatpush1.msra.mxu0 %v597
      %734 = vmatprep.subr.mxu0 0.0
      %735 = vmatpush1.msra.mxu0 %v598
      %736 = vmatprep.subr.mxu0 0.0
      %737 = vmatpush1.msra.mxu0 %v599
      %738 = vmatprep.subr.mxu0 0.0
      %739 = vmatpush1.msra.mxu0 %v600
      %740 = vmatprep.subr.mxu0 0.0
      %741 = vmatpush1.msra.mxu0 %v601
      %742 = vmatprep.subr.mxu0 0.0
      %743 = vmatpush1.msra.mxu0 %v602
      %744 = vmatprep.subr.mxu0 0.0
      %745 = vmatpush1.msra.mxu0 %v603
      %746 = vmatprep.subr.mxu0 0.0
      %747 = vmatpush1.msra.mxu0 0.0
      %748 = vmatprep.subr.mxu0 0.0
      %749 = vmatpush1.msra.mxu0 0.0
      %750 = vmatprep.subr.mxu0 0.0
      %751 = vmatpush1.msra.mxu0 0.0
      %752 = vmatprep.subr.mxu0 0.0
      %753 = vmatpush1.msra.mxu0 0.0
      %754 = vmatprep.subr.mxu0 0.0
      %755 = vmatpush1.msra.mxu0 0.0
      %756 = vmatprep.subr.mxu0 0.0
      %757 = vmatpush1.msra.mxu0 0.0
      %758 = vmatprep.subr.mxu0 0.0
      %759 = vmatpush1.msra.mxu0 0.0
      %760 = vmatprep.subr.mxu0 0.0
      %761 = vmatpush1.msra.mxu0 0.0
      %762 = vmatprep.subr.mxu0 0.0
      %763 = vmatpush1.msra.mxu0 0.0
      %764 = vmatprep.subr.mxu0 0.0
      %765 = vmatpush1.msra.mxu0 0.0
      %766 = vmatprep.subr.mxu0 0.0
      %767 = vmatpush1.msra.mxu0 0.0
      %768 = vmatprep.subr.mxu0 0.0
      %769 = vmatpush1.msra.mxu0 0.0
      %770 = vmatprep.subr.mxu0 0.0
      %771 = vmatpush1.msra.mxu0 0.0
      %772 = vmatprep.subr.mxu0 0.0
      %773 = vmatpush1.msra.mxu0 0.0
      %774 = vmatprep.subr.mxu0 0.0
      %775 = vmatpush1.msra.mxu0 0.0
      %776 = vmatprep.subr.mxu0 0.0
      %777 = vmatpush1.msra.mxu0 0.0
      %778 = vmatprep.subr.mxu0 0.0
      %779 = vmatpush1.msra.mxu0 0.0
      %780 = vmatprep.subr.mxu0 0.0
      %781 = vmatpush1.msra.mxu0 0.0
      %782 = vmatprep.subr.mxu0 0.0
      %783 = vmatpush1.msra.mxu0 0.0
      %784 = vmatprep.subr.mxu0 0.0
      %785 = vmatpush1.msra.mxu0 0.0
      %786 = vmatprep.subr.mxu0 0.0
      %787 = vmatpush1.msra.mxu0 0.0
      %788 = vmatprep.subr.mxu0 0.0
      %789 = vmatpush1.msra.mxu0 0.0
      %790 = vmatprep.subr.mxu0 0.0
      %791 = vmatpush1.msra.mxu0 0.0
      %792 = vmatprep.subr.mxu0 0.0
      %793 = vmatpush1.msra.mxu0 0.0
      %794 = vmatprep.mubr.f32.mxu0 0.0
      %795 = vmatmul.mubr.f32.gmra.mrb[0].mxu0 %v728
      %v796 = vpop.f32.mrb[0].mxu0
      %v797 = vadd.f32 0.0, %v796
      %v798 = vpop.f32.mrb[0].mxu0
      %799 = vdwg.mxu0
      %vm800 = vcmask 261120
      %v802 = vsel %vm800, %v797, 0
      %804 = vmatprep.subr.mxu0 0.0
      %805 = vmatpush1.msra.mxu0 %v604
      %806 = vmatprep.subr.mxu0 0.0
      %807 = vmatpush1.msra.mxu0 %v605
      %808 = vmatprep.subr.mxu0 0.0
      %809 = vmatpush1.msra.mxu0 %v606
      %810 = vmatprep.subr.mxu0 0.0
      %811 = vmatpush1.msra.mxu0 %v607
      %812 = vmatprep.subr.mxu0 0.0
      %813 = vmatpush1.msra.mxu0 0.0
      %814 = vmatprep.subr.mxu0 0.0
      %815 = vmatpush1.msra.mxu0 0.0
      %816 = vmatprep.subr.mxu0 0.0
      %817 = vmatpush1.msra.mxu0 0.0
      %818 = vmatprep.subr.mxu0 0.0
      %819 = vmatpush1.msra.mxu0 0.0
      %820 = vmatprep.subr.mxu0 0.0
      %821 = vmatpush1.msra.mxu0 0.0
      %822 = vmatprep.subr.mxu0 0.0
      %823 = vmatpush1.msra.mxu0 0.0
      %824 = vmatprep.subr.mxu0 0.0
      %825 = vmatpush1.msra.mxu0 0.0
      %826 = vmatprep.subr.mxu0 0.0
      %827 = vmatpush1.msra.mxu0 0.0
      %828 = vmatprep.subr.mxu0 0.0
      %829 = vmatpush1.msra.mxu0 0.0
      %830 = vmatprep.subr.mxu0 0.0
      %831 = vmatpush1.msra.mxu0 0.0
      %832 = vmatprep.subr.mxu0 0.0
      %833 = vmatpush1.msra.mxu0 0.0
      %834 = vmatprep.subr.mxu0 0.0
      %835 = vmatpush1.msra.mxu0 0.0
      %836 = vmatprep.subr.mxu0 0.0
      %837 = vmatpush1.msra.mxu0 0.0
      %838 = vmatprep.subr.mxu0 0.0
      %839 = vmatpush1.msra.mxu0 0.0
      %840 = vmatprep.subr.mxu0 0.0
      %841 = vmatpush1.msra.mxu0 0.0
      %842 = vmatprep.subr.mxu0 0.0
      %843 = vmatpush1.msra.mxu0 0.0
      %844 = vmatprep.subr.mxu0 0.0
      %845 = vmatpush1.msra.mxu0 0.0
      %846 = vmatprep.subr.mxu0 0.0
      %847 = vmatpush1.msra.mxu0 0.0
      %848 = vmatprep.subr.mxu0 0.0
      %849 = vmatpush1.msra.mxu0 0.0
      %850 = vmatprep.subr.mxu0 0.0
      %851 = vmatpush1.msra.mxu0 0.0
      %852 = vmatprep.subr.mxu0 0.0
      %853 = vmatpush1.msra.mxu0 0.0
      %854 = vmatprep.subr.mxu0 0.0
      %855 = vmatpush1.msra.mxu0 0.0
      %856 = vmatprep.subr.mxu0 0.0
      %857 = vmatpush1.msra.mxu0 0.0
      %858 = vmatprep.subr.mxu0 0.0
      %859 = vmatpush1.msra.mxu0 0.0
      %860 = vmatprep.subr.mxu0 0.0
      %861 = vmatpush1.msra.mxu0 0.0
      %862 = vmatprep.subr.mxu0 0.0
      %863 = vmatpush1.msra.mxu0 0.0
      %864 = vmatprep.subr.mxu0 0.0
      %865 = vmatpush1.msra.mxu0 0.0
      %866 = vmatprep.subr.mxu0 0.0
      %867 = vmatpush1.msra.mxu0 0.0
      %868 = vmatprep.mubr.f32.mxu0 0.0
      %869 = vmatmul.mubr.f32.gmra.mrb[0].mxu0 %v802
      %v870 = vpop.f32.mrb[0].mxu0
      %v871 = vadd.f32 0.0, %v870
      %v872 = vpop.f32.mrb[0].mxu0
      %873 = vdwg.mxu0
      %v876 = vunpack.c.l.s4 1966171168
      %v877 = vunpack.c.0.s8 %v876
      %v878 = vlaneseq
      %v879 = vshrl.u32 %v878, 7
      %v880 = vsub.s32 %v877, %v879
      %v881 = vrot.slane %v871, %v880
      %v882 = vcombine.high %v881, %v881
      %v884 = vunpack.c.l.s4 1966171168
      %v885 = vunpack.c.0.s8 %v884
      %v886 = vlaneseq
      %v887 = vshrl.u32 %v886, 7
      %v888 = vsub.s32 %v885, %v887
      %v889 = vrot.slane %v881, %v888
      %v891 = vunpack.c.l.s4 1966171168
      %v892 = vunpack.c.0.s8 %v891
      %v893 = vlaneseq
      %v894 = vshrl.u32 %v893, 7
      %v895 = vsub.s32 %v892, %v894
      %v896 = vrot.slane %v882, %v895
      %v899 = vcombine.high %v889, %v889
      %v900 = vcombine.high %v896, %v896
      %v903 = vmul.f32 %v889, %v889
      %v904 = vmul.f32 %v896, %v896
      %v905 = vsub.f32 %v899, %v903
      %v906 = vsub.f32 %v900, %v904
      %v907 = vadd.f32 %v905, 1e-05
      %v908 = vadd.f32 %v906, 1e-05
      %v909 = vrsqrt.pop %v907
      %v910 = vrsqrt.pop %v908
      %v911 = vlaneseq
      %v912 = vshrl.u32 %v911, 7
      %v913 = vsub.s32 0, %v912
      %v914 = vrot.slane %v889, %v913
      %v915 = vlaneseq
      %v916 = vshrl.u32 %v915, 7
      %v917 = vsub.s32 0, %v916
      %v918 = vrot.slane %v896, %v917
      %v921 = vsub.f32 %v580, %v914
      %v922 = vsub.f32 %v581, %v914
      %v923 = vsub.f32 %v582, %v914
      %v924 = vsub.f32 %v583, %v914
      %v925 = vsub.f32 %v584, %v914
      %v926 = vsub.f32 %v585, %v914
      %v927 = vsub.f32 %v586, %v914
      %v928 = vsub.f32 %v587, %v914
      %v929 = vsub.f32 %v588, %v918
      %v930 = vsub.f32 %v589, %v918
      %v931 = vsub.f32 %v590, %v918
      %v932 = vsub.f32 %v591, %v918
      %v933 = vsub.f32 %v592, %v918
      %v934 = vsub.f32 %v593, %v918
      %v935 = vsub.f32 %v594, %v918
      %v936 = vsub.f32 %v595, %v918
      %v939 = vlaneseq
      %v940 = vshrl.u32 %v939, 7
      %v941 = vsub.s32 0, %v940
      %v942 = vrot.slane %v909, %v941
      %v943 = vlaneseq
      %v944 = vshrl.u32 %v943, 7
      %v945 = vsub.s32 0, %v944
      %v946 = vrot.slane %v910, %v945
      %v949 = vmul.f32 %v921, %v942
      %v950 = vmul.f32 %v922, %v942
      %v951 = vmul.f32 %v923, %v942
      %v952 = vmul.f32 %v924, %v942
      %v953 = vmul.f32 %v925, %v942
      %v954 = vmul.f32 %v926, %v942
      %v955 = vmul.f32 %v927, %v942
      %v956 = vmul.f32 %v928, %v942
      %v957 = vmul.f32 %v929, %v946
      %v958 = vmul.f32 %v930, %v946
      %v959 = vmul.f32 %v931, %v946
      %v960 = vmul.f32 %v932, %v946
      %v961 = vmul.f32 %v933, %v946
      %v962 = vmul.f32 %v934, %v946
      %v963 = vmul.f32 %v935, %v946
      %v964 = vmul.f32 %v936, %v946
      %v966 = vlaneseq
      %v967 = vshrl.u32 %v966, 7
      %v968 = vsub.s32 0, %v967
      %v969 = vrot.slane %v608, %v968
      %v971 = vmul.f32 %v949, %v969
      %v972 = vmul.f32 %v950, %v969
      %v973 = vmul.f32 %v951, %v969
      %v974 = vmul.f32 %v952, %v969
      %v975 = vmul.f32 %v953, %v969
      %v976 = vmul.f32 %v954, %v969
      %v977 = vmul.f32 %v955, %v969
      %v978 = vmul.f32 %v956, %v969
      %v979 = vmul.f32 %v957, %v969
      %v980 = vmul.f32 %v958, %v969
      %v981 = vmul.f32 %v959, %v969
      %v982 = vmul.f32 %v960, %v969
      %v983 = vmul.f32 %v961, %v969
      %v984 = vmul.f32 %v962, %v969
      %v985 = vmul.f32 %v963, %v969
      %v986 = vmul.f32 %v964, %v969
      %v988 = vlaneseq
      %v989 = vshrl.u32 %v988, 7
      %v990 = vsub.s32 0, %v989
      %v991 = vrot.slane %v609, %v990
      %v993 = vadd.f32 %v971, %v991
      %v994 = vadd.f32 %v972, %v991
      %v995 = vadd.f32 %v973, %v991
      %v996 = vadd.f32 %v974, %v991
      %v997 = vadd.f32 %v975, %v991
      %v998 = vadd.f32 %v976, %v991
      %v999 = vadd.f32 %v977, %v991
      %v1000 = vadd.f32 %v978, %v991
      %v1001 = vadd.f32 %v979, %v991
      %v1002 = vadd.f32 %v980, %v991
      %v1003 = vadd.f32 %v981, %v991
      %v1004 = vadd.f32 %v982, %v991
      %v1005 = vadd.f32 %v983, %v991
      %v1006 = vadd.f32 %v984, %v991
      %v1007 = vadd.f32 %v985, %v991
      %v1008 = vadd.f32 %v986, %v991
      %v1009 = vld [vmem:[%s5] sm:$0xf]
      %v1010 = vld [vmem:[%s5 + $0x4] sm:$0xf]
      %v1011 = vld [vmem:[%s5 + $0x8] sm:$0xf]
      %v1012 = vld [vmem:[%s5 + $0xc] sm:$0xf]
      %v1013 = vld [vmem:[%s5 + $0x10] sm:$0xf]
      %v1014 = vld [vmem:[%s5 + $0x14] sm:$0xf]
      %v1015 = vld [vmem:[%s5 + $0x18] sm:$0xf]
      %v1016 = vld [vmem:[%s5 + $0x1c] sm:$0xf]
      %v1017 = vpack.c.bf16 %v994, %v993
      %v1018 = vpack.c.bf16 %v996, %v995
      %v1019 = vpack.c.bf16 %v998, %v997
      %v1020 = vpack.c.bf16 %v1000, %v999
      %v1021 = vpack.c.bf16 %v1002, %v1001
      %v1022 = vpack.c.bf16 %v1004, %v1003
      %v1023 = vpack.c.bf16 %v1006, %v1005
      %v1024 = vpack.c.bf16 %v1008, %v1007
      %v1025 = vld [vmem:[%s6] sm:$0x1]
      %v1027 = vlaneseq
      %v1028 = vshrl.u32 %v1027, 7
      %v1029 = vsub.s32 0, %v1028
      %v1030 = vrot.slane %v1025, %v1029
      %v1040 = vunpack.c.l.b16 %v1009
      %v1041 = vunpack.c.l.b16 %v1010
      %v1042 = vunpack.c.l.b16 %v1011
      %v1043 = vunpack.c.l.b16 %v1012
      %v1044 = vunpack.c.l.b16 %v1013
      %v1045 = vunpack.c.l.b16 %v1014
      %v1046 = vunpack.c.l.b16 %v1015
      %v1047 = vunpack.c.l.b16 %v1016
      %v1048 = vpack.c.b16 %v1041, %v1040
      %v1049 = vpack.c.b16 %v1043, %v1042
      %v1050 = vpack.c.b16 %v1045, %v1044
      %v1051 = vpack.c.b16 %v1047, %v1046
      %v1057 = vsel %vm610, %v1017, 0
      %v1060 = vsel %vm610, %v1018, 0
      %v1063 = vsel %vm610, %v1019, 0
      %v1066 = vsel %vm610, %v1020, 0
      %v1069 = vsel %vm610, %v1021, 0
      %v1072 = vsel %vm610, %v1022, 0
      %v1075 = vsel %vm610, %v1023, 0
      %v1078 = vsel %vm610, %v1024, 0
      %1080 = vmatprep.subr.bf16.mxu0 0
      %1081 = vmatpush1.bf16.msra.mxu0 %v1048
      %1082 = vmatprep.subr.bf16.mxu0 0
      %1083 = vmatpush1.bf16.msra.mxu0 %v1049
      %1084 = vmatprep.subr.bf16.mxu0 0
      %1085 = vmatpush1.bf16.msra.mxu0 %v1050
      %1086 = vmatprep.subr.bf16.mxu0 0
      %1087 = vmatpush1.bf16.msra.mxu0 %v1051
      %1088 = vmatprep.subr.bf16.mxu0 0
      %1089 = vmatpush1.bf16.msra.mxu0 0
      %1090 = vmatprep.subr.bf16.mxu0 0
      %1091 = vmatpush1.bf16.msra.mxu0 0
      %1092 = vmatprep.subr.bf16.mxu0 0
      %1093 = vmatpush1.bf16.msra.mxu0 0
      %1094 = vmatprep.subr.bf16.mxu0 0
      %1095 = vmatpush1.bf16.msra.mxu0 0
      %1096 = vmatprep.subr.bf16.mxu0 0
      %1097 = vmatpush1.bf16.msra.mxu0 0
      %1098 = vmatprep.subr.bf16.mxu0 0
      %1099 = vmatpush1.bf16.msra.mxu0 0
      %1100 = vmatprep.subr.bf16.mxu0 0
      %1101 = vmatpush1.bf16.msra.mxu0 0
      %1102 = vmatprep.subr.bf16.mxu0 0
      %1103 = vmatpush1.bf16.msra.mxu0 0
      %1104 = vmatprep.subr.bf16.mxu0 0
      %1105 = vmatpush1.bf16.msra.mxu0 0
      %1106 = vmatprep.subr.bf16.mxu0 0
      %1107 = vmatpush1.bf16.msra.mxu0 0
      %1108 = vmatprep.subr.bf16.mxu0 0
      %1109 = vmatpush1.bf16.msra.mxu0 0
      %1110 = vmatprep.subr.bf16.mxu0 0
      %1111 = vmatpush1.bf16.msra.mxu0 0
      %1112 = vmatprep.mubr.bf16.mxu0 0
      %1113 = vmatmul.mubr.bf16.gmra.mrb[0].mxu0 %v1057
      %v1114 = vpop.f32.mrb[0].mxu0
      %v1115 = vadd.f32 %v1030, %v1114
      %v1116 = vpop.f32.mrb[0].mxu0
      %v1117 = vpop.f32.mrb[0].mxu0
      %v1118 = vadd.f32 %v1030, %v1117
      %v1119 = vpop.f32.mrb[0].mxu0
      %1120 = vmatprep.mubr.bf16.mxu0 0
      %1121 = vmatmul.mubr.bf16.gmra.mrb[0].mxu0 %v1060
      %v1122 = vpop.f32.mrb[0].mxu0
      %v1123 = vadd.f32 %v1030, %v1122
      %v1124 = vpop.f32.mrb[0].mxu0
      %v1125 = vpop.f32.mrb[0].mxu0
      %v1126 = vadd.f32 %v1030, %v1125
      %v1127 = vpop.f32.mrb[0].mxu0
      %1128 = vmatprep.mubr.bf16.mxu0 0
      %1129 = vmatmul.mubr.bf16.gmra.mrb[0].mxu0 %v1063
      %v1130 = vpop.f32.mrb[0].mxu0
      %v1131 = vadd.f32 %v1030, %v1130
      %v1132 = vpop.f32.mrb[0].mxu0
      %v1133 = vpop.f32.mrb[0].mxu0
      %v1134 = vadd.f32 %v1030, %v1133
      %v1135 = vpop.f32.mrb[0].mxu0
      %1136 = vmatprep.mubr.bf16.mxu0 0
      %1137 = vmatmul.mubr.bf16.gmra.mrb[0].mxu0 %v1066
      %v1138 = vpop.f32.mrb[0].mxu0
      %v1139 = vadd.f32 %v1030, %v1138
      %v1140 = vpop.f32.mrb[0].mxu0
      %v1141 = vpop.f32.mrb[0].mxu0
      %v1142 = vadd.f32 %v1030, %v1141
      %v1143 = vpop.f32.mrb[0].mxu0
      %1144 = vmatprep.mubr.bf16.mxu0 0
      %1145 = vmatmul.mubr.bf16.gmra.mrb[0].mxu0 %v1069
      %v1146 = vpop.f32.mrb[0].mxu0
      %v1147 = vadd.f32 %v1030, %v1146
      %v1148 = vpop.f32.mrb[0].mxu0
      %v1149 = vpop.f32.mrb[0].mxu0
      %v1150 = vadd.f32 %v1030, %v1149
      %v1151 = vpop.f32.mrb[0].mxu0
      %1152 = vmatprep.mubr.bf16.mxu0 0
      %1153 = vmatmul.mubr.bf16.gmra.mrb[0].mxu0 %v1072
      %v1154 = vpop.f32.mrb[0].mxu0
      %v1155 = vadd.f32 %v1030, %v1154
      %v1156 = vpop.f32.mrb[0].mxu0
      %v1157 = vpop.f32.mrb[0].mxu0
      %v1158 = vadd.f32 %v1030, %v1157
      %v1159 = vpop.f32.mrb[0].mxu0
      %1160 = vmatprep.mubr.bf16.mxu0 0
      %1161 = vmatmul.mubr.bf16.gmra.mrb[0].mxu0 %v1075
      %v1162 = vpop.f32.mrb[0].mxu0
      %v1163 = vadd.f32 %v1030, %v1162
      %v1164 = vpop.f32.mrb[0].mxu0
      %v1165 = vpop.f32.mrb[0].mxu0
      %v1166 = vadd.f32 %v1030, %v1165
      %v1167 = vpop.f32.mrb[0].mxu0
      %1168 = vmatprep.mubr.bf16.mxu0 0
      %1169 = vmatmul.mubr.bf16.gmra.mrb[0].mxu0 %v1078
      %v1170 = vpop.f32.mrb[0].mxu0
      %v1171 = vadd.f32 %v1030, %v1170
      %v1172 = vpop.f32.mrb[0].mxu0
      %v1173 = vpop.f32.mrb[0].mxu0
      %v1174 = vadd.f32 %v1030, %v1173
      %v1175 = vpop.f32.mrb[0].mxu0
      %1176 = vdwg.mxu0
      %v1177 = vld [vmem:[%s9] sm:$0xff]
      %v1178 = vld [vmem:[%s9 + $0x8] sm:$0xff]
      %v1179 = vld [vmem:[%s9 + $0x10] sm:$0xff]
      %v1180 = vld [vmem:[%s9 + $0x18] sm:$0xff]
      %v1181 = vld [vmem:[%s9 + $0x20] sm:$0xff]
      %v1182 = vld [vmem:[%s9 + $0x28] sm:$0xff]
      %v1183 = vld [vmem:[%s9 + $0x30] sm:$0xff]
      %v1184 = vld [vmem:[%s9 + $0x38] sm:$0xff]
      %v1185 = vld [vmem:[%s9 + $0x40] sm:$0xff]
      %v1186 = vld [vmem:[%s9 + $0x48] sm:$0xff]
      %v1187 = vld [vmem:[%s9 + $0x50] sm:$0xff]
      %v1188 = vld [vmem:[%s9 + $0x58] sm:$0xff]
      %v1189 = vld [vmem:[%s9 + $0x60] sm:$0xff]
      %v1190 = vld [vmem:[%s9 + $0x68] sm:$0xff]
      %v1191 = vld [vmem:[%s9 + $0x70] sm:$0xff]
      %v1192 = vld [vmem:[%s9 + $0x78] sm:$0xff]
      %v1193 = vld [vmem:[%s10] sm:$0xff]
      %v1194 = vld [vmem:[%s10 + $0x8] sm:$0xff]
      %v1195 = vld [vmem:[%s10 + $0x10] sm:$0xff]
      %v1196 = vld [vmem:[%s10 + $0x18] sm:$0xff]
      %v1197 = vld [vmem:[%s7] sm:$0x1]
      %v1198 = vld [vmem:[%s8] sm:$0x1]
      %v1199 = vadd.f32 %v1115, %v1118
      %v1200 = vadd.f32 %v1199, %v1123
      %v1201 = vadd.f32 %v1200, %v1126
      %v1202 = vadd.f32 %v1201, %v1131
      %v1203 = vadd.f32 %v1202, %v1134
      %v1204 = vadd.f32 %v1203, %v1139
      %v1205 = vadd.f32 %v1204, %v1142
      %v1206 = vrot.slane %v1205, 4
      %v1207 = vadd.f32 %v1205, %v1206
      %v1208 = vrot.slane %v1207, 2
      %v1209 = vadd.f32 %v1207, %v1208
      %v1210 = vrot.slane %v1209, 1
      %v1211 = vadd.f32 %v1209, %v1210
      %v1212 = vadd.f32 %v1147, %v1150
      %v1213 = vadd.f32 %v1212, %v1155
      %v1214 = vadd.f32 %v1213, %v1158
      %v1215 = vadd.f32 %v1214, %v1163
      %v1216 = vadd.f32 %v1215, %v1166
      %v1217 = vadd.f32 %v1216, %v1171
      %v1218 = vadd.f32 %v1217, %v1174
      %v1219 = vrot.slane %v1218, 4
      %v1220 = vadd.f32 %v1218, %v1219
      %v1221 = vrot.slane %v1220, 2
      %v1222 = vadd.f32 %v1220, %v1221
      %v1223 = vrot.slane %v1222, 1
      %v1224 = vadd.f32 %v1222, %v1223
      %v1225 = vmul.f32 %v1211, 0.015625
      %v1226 = vmul.f32 %v1224, 0.015625
      %v1227 = vmul.f32 %v1115, %v1115
      %v1228 = vmul.f32 %v1118, %v1118
      %v1229 = vmul.f32 %v1123, %v1123
      %v1230 = vmul.f32 %v1126, %v1126
      %v1231 = vmul.f32 %v1131, %v1131
      %v1232 = vmul.f32 %v1134, %v1134
      %v1233 = vmul.f32 %v1139, %v1139
      %v1234 = vmul.f32 %v1142, %v1142
      %v1235 = vmul.f32 %v1147, %v1147
      %v1236 = vmul.f32 %v1150, %v1150
      %v1237 = vmul.f32 %v1155, %v1155
      %v1238 = vmul.f32 %v1158, %v1158
      %v1239 = vmul.f32 %v1163, %v1163
      %v1240 = vmul.f32 %v1166, %v1166
      %v1241 = vmul.f32 %v1171, %v1171
      %v1242 = vmul.f32 %v1174, %v1174
      %v1243 = vadd.f32 %v1227, %v1228
      %v1244 = vadd.f32 %v1243, %v1229
      %v1245 = vadd.f32 %v1244, %v1230
      %v1246 = vadd.f32 %v1245, %v1231
      %v1247 = vadd.f32 %v1246, %v1232
      %v1248 = vadd.f32 %v1247, %v1233
      %v1249 = vadd.f32 %v1248, %v1234
      %v1250 = vrot.slane %v1249, 4
      %v1251 = vadd.f32 %v1249, %v1250
      %v1252 = vrot.slane %v1251, 2
      %v1253 = vadd.f32 %v1251, %v1252
      %v1254 = vrot.slane %v1253, 1
      %v1255 = vadd.f32 %v1253, %v1254
      %v1256 = vadd.f32 %v1235, %v1236
      %v1257 = vadd.f32 %v1256, %v1237
      %v1258 = vadd.f32 %v1257, %v1238
      %v1259 = vadd.f32 %v1258, %v1239
      %v1260 = vadd.f32 %v1259, %v1240
      %v1261 = vadd.f32 %v1260, %v1241
      %v1262 = vadd.f32 %v1261, %v1242
      %v1263 = vrot.slane %v1262, 4
      %v1264 = vadd.f32 %v1262, %v1263
      %v1265 = vrot.slane %v1264, 2
      %v1266 = vadd.f32 %v1264, %v1265
      %v1267 = vrot.slane %v1266, 1
      %v1268 = vadd.f32 %v1266, %v1267
      %v1269 = vmul.f32 %v1255, 0.015625
      %v1270 = vmul.f32 %v1268, 0.015625
      %v1273 = vsel %vm717, %v1226, %v1225
      %v1277 = vsel %vm722, %v1270, %v1269
      %v1279 = vsel %vm725, %v1273, %v1277
      %1280 = vmatprep.subr.mxu0 0.0
      %1281 = vmatpush1.msra.mxu0 %v1177
      %1282 = vmatprep.subr.mxu0 0.0
      %1283 = vmatpush1.msra.mxu0 %v1178
      %1284 = vmatprep.subr.mxu0 0.0
      %1285 = vmatpush1.msra.mxu0 %v1179
      %1286 = vmatprep.subr.mxu0 0.0
      %1287 = vmatpush1.msra.mxu0 %v1180
      %1288 = vmatprep.subr.mxu0 0.0
      %1289 = vmatpush1.msra.mxu0 %v1181
      %1290 = vmatprep.subr.mxu0 0.0
      %1291 = vmatpush1.msra.mxu0 %v1182
      %1292 = vmatprep.subr.mxu0 0.0
      %1293 = vmatpush1.msra.mxu0 %v1183
      %1294 = vmatprep.subr.mxu0 0.0
      %1295 = vmatpush1.msra.mxu0 %v1184
      %1296 = vmatprep.subr.mxu0 0.0
      %1297 = vmatpush1.msra.mxu0 %v1185
      %1298 = vmatprep.subr.mxu0 0.0
      %1299 = vmatpush1.msra.mxu0 %v1186
      %1300 = vmatprep.subr.mxu0 0.0
      %1301 = vmatpush1.msra.mxu0 %v1187
      %1302 = vmatprep.subr.mxu0 0.0
      %1303 = vmatpush1.msra.mxu0 %v1188
      %1304 = vmatprep.subr.mxu0 0.0
      %1305 = vmatpush1.msra.mxu0 %v1189
      %1306 = vmatprep.subr.mxu0 0.0
      %1307 = vmatpush1.msra.mxu0 %v1190
      %1308 = vmatprep.subr.mxu0 0.0
      %1309 = vmatpush1.msra.mxu0 %v1191
      %1310 = vmatprep.subr.mxu0 0.0
      %1311 = vmatpush1.msra.mxu0 %v1192
      %1312 = vmatprep.subr.mxu0 0.0
      %1313 = vmatpush1.msra.mxu0 0.0
      %1314 = vmatprep.subr.mxu0 0.0
      %1315 = vmatpush1.msra.mxu0 0.0
      %1316 = vmatprep.subr.mxu0 0.0
      %1317 = vmatpush1.msra.mxu0 0.0
      %1318 = vmatprep.subr.mxu0 0.0
      %1319 = vmatpush1.msra.mxu0 0.0
      %1320 = vmatprep.subr.mxu0 0.0
      %1321 = vmatpush1.msra.mxu0 0.0
      %1322 = vmatprep.subr.mxu0 0.0
      %1323 = vmatpush1.msra.mxu0 0.0
      %1324 = vmatprep.subr.mxu0 0.0
      %1325 = vmatpush1.msra.mxu0 0.0
      %1326 = vmatprep.subr.mxu0 0.0
      %1327 = vmatpush1.msra.mxu0 0.0
      %1328 = vmatprep.subr.mxu0 0.0
      %1329 = vmatpush1.msra.mxu0 0.0
      %1330 = vmatprep.subr.mxu0 0.0
      %1331 = vmatpush1.msra.mxu0 0.0
      %1332 = vmatprep.subr.mxu0 0.0
      %1333 = vmatpush1.msra.mxu0 0.0
      %1334 = vmatprep.subr.mxu0 0.0
      %1335 = vmatpush1.msra.mxu0 0.0
      %1336 = vmatprep.subr.mxu0 0.0
      %1337 = vmatpush1.msra.mxu0 0.0
      %1338 = vmatprep.subr.mxu0 0.0
      %1339 = vmatpush1.msra.mxu0 0.0
      %1340 = vmatprep.subr.mxu0 0.0
      %1341 = vmatpush1.msra.mxu0 0.0
      %1342 = vmatprep.subr.mxu0 0.0
      %1343 = vmatpush1.msra.mxu0 0.0
      %1344 = vmatprep.mubr.f32.mxu0 0.0
      %1345 = vmatmul.mubr.f32.gmra.mrb[0].mxu0 %v1279
      %v1346 = vpop.f32.mrb[0].mxu0
      %v1347 = vadd.f32 0.0, %v1346
      %v1348 = vpop.f32.mrb[0].mxu0
      %1349 = vdwg.mxu0
      %v1351 = vsel %vm800, %v1347, 0
      %1353 = vmatprep.subr.mxu0 0.0
      %1354 = vmatpush1.msra.mxu0 %v1193
      %1355 = vmatprep.subr.mxu0 0.0
      %1356 = vmatpush1.msra.mxu0 %v1194
      %1357 = vmatprep.subr.mxu0 0.0
      %1358 = vmatpush1.msra.mxu0 %v1195
      %1359 = vmatprep.subr.mxu0 0.0
      %1360 = vmatpush1.msra.mxu0 %v1196
      %1361 = vmatprep.subr.mxu0 0.0
      %1362 = vmatpush1.msra.mxu0 0.0
      %1363 = vmatprep.subr.mxu0 0.0
      %1364 = vmatpush1.msra.mxu0 0.0
      %1365 = vmatprep.subr.mxu0 0.0
      %1366 = vmatpush1.msra.mxu0 0.0
      %1367 = vmatprep.subr.mxu0 0.0
      %1368 = vmatpush1.msra.mxu0 0.0
      %1369 = vmatprep.subr.mxu0 0.0
      %1370 = vmatpush1.msra.mxu0 0.0
      %1371 = vmatprep.subr.mxu0 0.0
      %1372 = vmatpush1.msra.mxu0 0.0
      %1373 = vmatprep.subr.mxu0 0.0
      %1374 = vmatpush1.msra.mxu0 0.0
      %1375 = vmatprep.subr.mxu0 0.0
      %1376 = vmatpush1.msra.mxu0 0.0
      %1377 = vmatprep.subr.mxu0 0.0
      %1378 = vmatpush1.msra.mxu0 0.0
      %1379 = vmatprep.subr.mxu0 0.0
      %1380 = vmatpush1.msra.mxu0 0.0
      %1381 = vmatprep.subr.mxu0 0.0
      %1382 = vmatpush1.msra.mxu0 0.0
      %1383 = vmatprep.subr.mxu0 0.0
      %1384 = vmatpush1.msra.mxu0 0.0
      %1385 = vmatprep.subr.mxu0 0.0
      %1386 = vmatpush1.msra.mxu0 0.0
      %1387 = vmatprep.subr.mxu0 0.0
      %1388 = vmatpush1.msra.mxu0 0.0
      %1389 = vmatprep.subr.mxu0 0.0
      %1390 = vmatpush1.msra.mxu0 0.0
      %1391 = vmatprep.subr.mxu0 0.0
      %1392 = vmatpush1.msra.mxu0 0.0
      %1393 = vmatprep.subr.mxu0 0.0
      %1394 = vmatpush1.msra.mxu0 0.0
      %1395 = vmatprep.subr.mxu0 0.0
      %1396 = vmatpush1.msra.mxu0 0.0
      %1397 = vmatprep.subr.mxu0 0.0
      %1398 = vmatpush1.msra.mxu0 0.0
      %1399 = vmatprep.subr.mxu0 0.0
      %1400 = vmatpush1.msra.mxu0 0.0
      %1401 = vmatprep.subr.mxu0 0.0
      %1402 = vmatpush1.msra.mxu0 0.0
      %1403 = vmatprep.subr.mxu0 0.0
      %1404 = vmatpush1.msra.mxu0 0.0
      %1405 = vmatprep.subr.mxu0 0.0
      %1406 = vmatpush1.msra.mxu0 0.0
      %1407 = vmatprep.subr.mxu0 0.0
      %1408 = vmatpush1.msra.mxu0 0.0
      %1409 = vmatprep.subr.mxu0 0.0
      %1410 = vmatpush1.msra.mxu0 0.0
      %1411 = vmatprep.subr.mxu0 0.0
      %1412 = vmatpush1.msra.mxu0 0.0
      %1413 = vmatprep.subr.mxu0 0.0
      %1414 = vmatpush1.msra.mxu0 0.0
      %1415 = vmatprep.subr.mxu0 0.0
      %1416 = vmatpush1.msra.mxu0 0.0
      %1417 = vmatprep.mubr.f32.mxu0 0.0
      %1418 = vmatmul.mubr.f32.gmra.mrb[0].mxu0 %v1351
      %v1419 = vpop.f32.mrb[0].mxu0
      %v1420 = vadd.f32 0.0, %v1419
      %v1421 = vpop.f32.mrb[0].mxu0
      %1422 = vdwg.mxu0
      %v1425 = vunpack.c.l.s4 1966171168
      %v1426 = vunpack.c.0.s8 %v1425
      %v1427 = vlaneseq
      %v1428 = vshrl.u32 %v1427, 7
      %v1429 = vsub.s32 %v1426, %v1428
      %v1430 = vrot.slane %v1420, %v1429
      %v1431 = vcombine.high %v1430, %v1430
      %v1433 = vunpack.c.l.s4 1966171168
      %v1434 = vunpack.c.0.s8 %v1433
      %v1435 = vlaneseq
      %v1436 = vshrl.u32 %v1435, 7
      %v1437 = vsub.s32 %v1434, %v1436
      %v1438 = vrot.slane %v1430, %v1437
      %v1440 = vunpack.c.l.s4 1966171168
      %v1441 = vunpack.c.0.s8 %v1440
      %v1442 = vlaneseq
      %v1443 = vshrl.u32 %v1442, 7
      %v1444 = vsub.s32 %v1441, %v1443
      %v1445 = vrot.slane %v1431, %v1444
      %v1448 = vcombine.high %v1438, %v1438
      %v1449 = vcombine.high %v1445, %v1445
      %v1452 = vmul.f32 %v1438, %v1438
      %v1453 = vmul.f32 %v1445, %v1445
      %v1454 = vsub.f32 %v1448, %v1452
      %v1455 = vsub.f32 %v1449, %v1453
      %v1456 = vadd.f32 %v1454, 1e-05
      %v1457 = vadd.f32 %v1455, 1e-05
      %v1458 = vrsqrt.pop %v1456
      %v1459 = vrsqrt.pop %v1457
      %v1460 = vlaneseq
      %v1461 = vshrl.u32 %v1460, 7
      %v1462 = vsub.s32 0, %v1461
      %v1463 = vrot.slane %v1438, %v1462
      %v1464 = vlaneseq
      %v1465 = vshrl.u32 %v1464, 7
      %v1466 = vsub.s32 0, %v1465
      %v1467 = vrot.slane %v1445, %v1466
      %v1470 = vsub.f32 %v1115, %v1463
      %v1471 = vsub.f32 %v1118, %v1463
      %v1472 = vsub.f32 %v1123, %v1463
      %v1473 = vsub.f32 %v1126, %v1463
      %v1474 = vsub.f32 %v1131, %v1463
      %v1475 = vsub.f32 %v1134, %v1463
      %v1476 = vsub.f32 %v1139, %v1463
      %v1477 = vsub.f32 %v1142, %v1463
      %v1478 = vsub.f32 %v1147, %v1467
      %v1479 = vsub.f32 %v1150, %v1467
      %v1480 = vsub.f32 %v1155, %v1467
      %v1481 = vsub.f32 %v1158, %v1467
      %v1482 = vsub.f32 %v1163, %v1467
      %v1483 = vsub.f32 %v1166, %v1467
      %v1484 = vsub.f32 %v1171, %v1467
      %v1485 = vsub.f32 %v1174, %v1467
      %v1488 = vlaneseq
      %v1489 = vshrl.u32 %v1488, 7
      %v1490 = vsub.s32 0, %v1489
      %v1491 = vrot.slane %v1458, %v1490
      %v1492 = vlaneseq
      %v1493 = vshrl.u32 %v1492, 7
      %v1494 = vsub.s32 0, %v1493
      %v1495 = vrot.slane %v1459, %v1494
      %v1498 = vmul.f32 %v1470, %v1491
      %v1499 = vmul.f32 %v1471, %v1491
      %v1500 = vmul.f32 %v1472, %v1491
      %v1501 = vmul.f32 %v1473, %v1491
      %v1502 = vmul.f32 %v1474, %v1491
      %v1503 = vmul.f32 %v1475, %v1491
      %v1504 = vmul.f32 %v1476, %v1491
      %v1505 = vmul.f32 %v1477, %v1491
      %v1506 = vmul.f32 %v1478, %v1495
      %v1507 = vmul.f32 %v1479, %v1495
      %v1508 = vmul.f32 %v1480, %v1495
      %v1509 = vmul.f32 %v1481, %v1495
      %v1510 = vmul.f32 %v1482, %v1495
      %v1511 = vmul.f32 %v1483, %v1495
      %v1512 = vmul.f32 %v1484, %v1495
      %v1513 = vmul.f32 %v1485, %v1495
      %v1515 = vlaneseq
      %v1516 = vshrl.u32 %v1515, 7
      %v1517 = vsub.s32 0, %v1516
      %v1518 = vrot.slane %v1197, %v1517
      %v1520 = vmul.f32 %v1498, %v1518
      %v1521 = vmul.f32 %v1499, %v1518
      %v1522 = vmul.f32 %v1500, %v1518
      %v1523 = vmul.f32 %v1501, %v1518
      %v1524 = vmul.f32 %v1502, %v1518
      %v1525 = vmul.f32 %v1503, %v1518
      %v1526 = vmul.f32 %v1504, %v1518
      %v1527 = vmul.f32 %v1505, %v1518
      %v1528 = vmul.f32 %v1506, %v1518
      %v1529 = vmul.f32 %v1507, %v1518
      %v1530 = vmul.f32 %v1508, %v1518
      %v1531 = vmul.f32 %v1509, %v1518
      %v1532 = vmul.f32 %v1510, %v1518
      %v1533 = vmul.f32 %v1511, %v1518
      %v1534 = vmul.f32 %v1512, %v1518
      %v1535 = vmul.f32 %v1513, %v1518
      %v1537 = vlaneseq
      %v1538 = vshrl.u32 %v1537, 7
      %v1539 = vsub.s32 0, %v1538
      %v1540 = vrot.slane %v1198, %v1539
      %v1542 = vadd.f32 %v1520, %v1540
      %v1543 = vadd.f32 %v1521, %v1540
      %v1544 = vadd.f32 %v1522, %v1540
      %v1545 = vadd.f32 %v1523, %v1540
      %v1546 = vadd.f32 %v1524, %v1540
      %v1547 = vadd.f32 %v1525, %v1540
      %v1548 = vadd.f32 %v1526, %v1540
      %v1549 = vadd.f32 %v1527, %v1540
      %v1550 = vadd.f32 %v1528, %v1540
      %v1551 = vadd.f32 %v1529, %v1540
      %v1552 = vadd.f32 %v1530, %v1540
      %v1553 = vadd.f32 %v1531, %v1540
      %v1554 = vadd.f32 %v1532, %v1540
      %v1555 = vadd.f32 %v1533, %v1540
      %v1556 = vadd.f32 %v1534, %v1540
      %v1557 = vadd.f32 %v1535, %v1540
      %v1558 = vld [vmem:[%s11] sm:$0xff]
      %v1559 = vld [vmem:[%s11 + $0x8] sm:$0xf]
      %v1560 = vld [vmem:[%s11 + $0xc] sm:$0xff]
      %v1561 = vld [vmem:[%s11 + $0x14] sm:$0xf]
      %v1562 = vld [vmem:[%s11 + $0x18] sm:$0xff]
      %v1563 = vld [vmem:[%s11 + $0x20] sm:$0xf]
      %v1564 = vld [vmem:[%s11 + $0x24] sm:$0xff]
      %v1565 = vld [vmem:[%s11 + $0x2c] sm:$0xf]
      %v1566 = vld [vmem:[%s11 + $0x30] sm:$0xff]
      %v1567 = vld [vmem:[%s11 + $0x38] sm:$0xf]
      %v1568 = vld [vmem:[%s11 + $0x3c] sm:$0xff]
      %v1569 = vld [vmem:[%s11 + $0x44] sm:$0xf]
      %v1570 = vld [vmem:[%s11 + $0x48] sm:$0xff]
      %v1571 = vld [vmem:[%s11 + $0x50] sm:$0xf]
      %v1572 = vld [vmem:[%s11 + $0x54] sm:$0xff]
      %v1573 = vld [vmem:[%s11 + $0x5c] sm:$0xf]
      %v1574 = vld [vmem:[%s11 + $0x60] sm:$0xff]
      %v1575 = vld [vmem:[%s11 + $0x68] sm:$0xf]
      %v1576 = vld [vmem:[%s11 + $0x6c] sm:$0xff]
      %v1577 = vld [vmem:[%s11 + $0x74] sm:$0xf]
      %v1578 = vld [vmem:[%s11 + $0x78] sm:$0xff]
      %v1579 = vld [vmem:[%s11 + $0x80] sm:$0xf]
      %v1580 = vld [vmem:[%s11 + $0x84] sm:$0xff]
      %v1581 = vld [vmem:[%s11 + $0x8c] sm:$0xf]
      %v1582 = vld [vmem:[%s11 + $0x90] sm:$0xff]
      %v1583 = vld [vmem:[%s11 + $0x98] sm:$0xf]
      %v1584 = vld [vmem:[%s11 + $0x9c] sm:$0xff]
      %v1585 = vld [vmem:[%s11 + $0xa4] sm:$0xf]
      %v1586 = vld [vmem:[%s11 + $0xa8] sm:$0xff]
      %v1587 = vld [vmem:[%s11 + $0xb0] sm:$0xf]
      %v1588 = vld [vmem:[%s11 + $0xb4] sm:$0xff]
      %v1589 = vld [vmem:[%s11 + $0xbc] sm:$0xf]
      %v1590 = vpack.c.bf16 %v1543, %v1542
      %v1591 = vpack.c.bf16 %v1545, %v1544
      %v1592 = vpack.c.bf16 %v1547, %v1546
      %v1593 = vpack.c.bf16 %v1549, %v1548
      %v1594 = vpack.c.bf16 %v1551, %v1550
      %v1595 = vpack.c.bf16 %v1553, %v1552
      %v1596 = vpack.c.bf16 %v1555, %v1554
      %v1597 = vpack.c.bf16 %v1557, %v1556
      %v1630 = vunpack.c.l.b16 %v1558
      %v1631 = vunpack.c.h.b16 %v1558
      %v1632 = vunpack.c.l.b16 %v1559
      %v1633 = vunpack.c.l.b16 %v1560
      %v1634 = vunpack.c.h.b16 %v1560
      %v1635 = vunpack.c.l.b16 %v1561
      %v1636 = vunpack.c.l.b16 %v1562
      %v1637 = vunpack.c.h.b16 %v1562
      %v1638 = vunpack.c.l.b16 %v1563
      %v1639 = vunpack.c.l.b16 %v1564
      %v1640 = vunpack.c.h.b16 %v1564
      %v1641 = vunpack.c.l.b16 %v1565
      %v1642 = vunpack.c.l.b16 %v1566
      %v1643 = vunpack.c.h.b16 %v1566
      %v1644 = vunpack.c.l.b16 %v1567
      %v1645 = vunpack.c.l.b16 %v1568
      %v1646 = vunpack.c.h.b16 %v1568
      %v1647 = vunpack.c.l.b16 %v1569
      %v1648 = vunpack.c.l.b16 %v1570
      %v1649 = vunpack.c.h.b16 %v1570
      %v1650 = vunpack.c.l.b16 %v1571
      %v1651 = vunpack.c.l.b16 %v1572
      %v1652 = vunpack.c.h.b16 %v1572
      %v1653 = vunpack.c.l.b16 %v1573
      %v1654 = vunpack.c.l.b16 %v1574
      %v1655 = vunpack.c.h.b16 %v1574
      %v1656 = vunpack.c.l.b16 %v1575
      %v1657 = vunpack.c.l.b16 %v1576
      %v1658 = vunpack.c.h.b16 %v1576
      %v1659 = vunpack.c.l.b16 %v1577
      %v1660 = vunpack.c.l.b16 %v1578
      %v1661 = vunpack.c.h.b16 %v1578
      %v1662 = vunpack.c.l.b16 %v1579
      %v1663 = vunpack.c.l.b16 %v1580
      %v1664 = vunpack.c.h.b16 %v1580
      %v1665 = vunpack.c.l.b16 %v1581
      %v1666 = vunpack.c.l.b16 %v1582
      %v1667 = vunpack.c.h.b16 %v1582
      %v1668 = vunpack.c.l.b16 %v1583
      %v1669 = vunpack.c.l.b16 %v1584
      %v1670 = vunpack.c.h.b16 %v1584
      %v1671 = vunpack.c.l.b16 %v1585
      %v1672 = vunpack.c.l.b16 %v1586
      %v1673 = vunpack.c.h.b16 %v1586
      %v1674 = vunpack.c.l.b16 %v1587
      %v1675 = vunpack.c.l.b16 %v1588
      %v1676 = vunpack.c.h.b16 %v1588
      %v1677 = vunpack.c.l.b16 %v1589
      %v1678 = vpack.c.b16 %v1633, %v1630
      %v1679 = vpack.c.b16 %v1634, %v1631
      %v1680 = vpack.c.b16 %v1635, %v1632
      %v1681 = vpack.c.b16 %v1639, %v1636
      %v1682 = vpack.c.b16 %v1640, %v1637
      %v1683 = vpack.c.b16 %v1641, %v1638
      %v1684 = vpack.c.b16 %v1645, %v1642
      %v1685 = vpack.c.b16 %v1646, %v1643
      %v1686 = vpack.c.b16 %v1647, %v1644
      %v1687 = vpack.c.b16 %v1651, %v1648
      %v1688 = vpack.c.b16 %v1652, %v1649
      %v1689 = vpack.c.b16 %v1653, %v1650
      %v1690 = vpack.c.b16 %v1657, %v1654
      %v1691 = vpack.c.b16 %v1658, %v1655
      %v1692 = vpack.c.b16 %v1659, %v1656
      %v1693 = vpack.c.b16 %v1663, %v1660
      %v1694 = vpack.c.b16 %v1664, %v1661
      %v1695 = vpack.c.b16 %v1665, %v1662
      %v1696 = vpack.c.b16 %v1669, %v1666
      %v1697 = vpack.c.b16 %v1670, %v1667
      %v1698 = vpack.c.b16 %v1671, %v1668
      %v1699 = vpack.c.b16 %v1675, %v1672
      %v1700 = vpack.c.b16 %v1676, %v1673
      %v1701 = vpack.c.b16 %v1677, %v1674
      %1726 = vmatprep.subr.bf16.mxu0 %v1679
      %1727 = vmatpush1.bf16.msra.mxu0 %v1678
      %1728 = vmatprep.subr.bf16.mxu0 %v1682
      %1729 = vmatpush1.bf16.msra.mxu0 %v1681
      %1730 = vmatprep.subr.bf16.mxu0 %v1685
      %1731 = vmatpush1.bf16.msra.mxu0 %v1684
      %1732 = vmatprep.subr.bf16.mxu0 %v1688
      %1733 = vmatpush1.bf16.msra.mxu0 %v1687
      %1734 = vmatprep.subr.bf16.mxu0 %v1691
      %1735 = vmatpush1.bf16.msra.mxu0 %v1690
      %1736 = vmatprep.subr.bf16.mxu0 %v1694
      %1737 = vmatpush1.bf16.msra.mxu0 %v1693
      %1738 = vmatprep.subr.bf16.mxu0 %v1697
      %1739 = vmatpush1.bf16.msra.mxu0 %v1696
      %1740 = vmatprep.subr.bf16.mxu0 %v1700
      %1741 = vmatpush1.bf16.msra.mxu0 %v1699
      %1742 = vmatprep.subr.bf16.mxu0 0
      %1743 = vmatpush1.bf16.msra.mxu0 0
      %1744 = vmatprep.subr.bf16.mxu0 0
      %1745 = vmatpush1.bf16.msra.mxu0 0
      %1746 = vmatprep.subr.bf16.mxu0 0
      %1747 = vmatpush1.bf16.msra.mxu0 0
      %1748 = vmatprep.subr.bf16.mxu0 0
      %1749 = vmatpush1.bf16.msra.mxu0 0
      %1750 = vmatprep.subr.bf16.mxu0 0
      %1751 = vmatpush1.bf16.msra.mxu0 0
      %1752 = vmatprep.subr.bf16.mxu0 0
      %1753 = vmatpush1.bf16.msra.mxu0 0
      %1754 = vmatprep.subr.bf16.mxu0 0
      %1755 = vmatpush1.bf16.msra.mxu0 0
      %1756 = vmatprep.subr.bf16.mxu0 0
      %1757 = vmatpush1.bf16.msra.mxu0 0
      %1758 = vmatprep.mubr.bf16.mxu0 0
      %1759 = vmatmul.mubr.bf16.gmra.mrb[0].mxu0 %v1590
      %v1760 = vpop.f32.mrb[0].mxu0
      %v1761 = vadd.f32 0.0, %v1760
      %v1762 = vpop.f32.mrb[0].mxu0
      %v1763 = vadd.f32 0.0, %v1762
      %v1764 = vpop.f32.mrb[0].mxu0
      %v1765 = vadd.f32 0.0, %v1764
      %v1766 = vpop.f32.mrb[0].mxu0
      %v1767 = vadd.f32 0.0, %v1766
      %1768 = vmatprep.mubr.bf16.mxu0 0
      %1769 = vmatmul.mubr.bf16.gmra.mrb[0].mxu0 %v1591
      %v1770 = vpop.f32.mrb[0].mxu0
      %v1771 = vadd.f32 0.0, %v1770
      %v1772 = vpop.f32.mrb[0].mxu0
      %v1773 = vadd.f32 0.0, %v1772
      %v1774 = vpop.f32.mrb[0].mxu0
      %v1775 = vadd.f32 0.0, %v1774
      %v1776 = vpop.f32.mrb[0].mxu0
      %v1777 = vadd.f32 0.0, %v1776
      %1778 = vmatprep.mubr.bf16.mxu0 0
      %1779 = vmatmul.mubr.bf16.gmra.mrb[0].mxu0 %v1592
      %v1780 = vpop.f32.mrb[0].mxu0
      %v1781 = vadd.f32 0.0, %v1780
      %v1782 = vpop.f32.mrb[0].mxu0
      %v1783 = vadd.f32 0.0, %v1782
      %v1784 = vpop.f32.mrb[0].mxu0
      %v1785 = vadd.f32 0.0, %v1784
      %v1786 = vpop.f32.mrb[0].mxu0
      %v1787 = vadd.f32 0.0, %v1786
      %1788 = vmatprep.mubr.bf16.mxu0 0
      %1789 = vmatmul.mubr.bf16.gmra.mrb[0].mxu0 %v1593
      %v1790 = vpop.f32.mrb[0].mxu0
      %v1791 = vadd.f32 0.0, %v1790
      %v1792 = vpop.f32.mrb[0].mxu0
      %v1793 = vadd.f32 0.0, %v1792
      %v1794 = vpop.f32.mrb[0].mxu0
      %v1795 = vadd.f32 0.0, %v1794
      %v1796 = vpop.f32.mrb[0].mxu0
      %v1797 = vadd.f32 0.0, %v1796
      %1798 = vmatprep.mubr.bf16.mxu0 0
      %1799 = vmatmul.mubr.bf16.gmra.mrb[0].mxu0 %v1594
      %v1800 = vpop.f32.mrb[0].mxu0
      %v1801 = vadd.f32 0.0, %v1800
      %v1802 = vpop.f32.mrb[0].mxu0
      %v1803 = vadd.f32 0.0, %v1802
      %v1804 = vpop.f32.mrb[0].mxu0
      %v1805 = vadd.f32 0.0, %v1804
      %v1806 = vpop.f32.mrb[0].mxu0
      %v1807 = vadd.f32 0.0, %v1806
      %1808 = vmatprep.mubr.bf16.mxu0 0
      %1809 = vmatmul.mubr.bf16.gmra.mrb[0].mxu0 %v1595
      %v1810 = vpop.f32.mrb[0].mxu0
      %v1811 = vadd.f32 0.0, %v1810
      %v1812 = vpop.f32.mrb[0].mxu0
      %v1813 = vadd.f32 0.0, %v1812
      %v1814 = vpop.f32.mrb[0].mxu0
      %v1815 = vadd.f32 0.0, %v1814
      %v1816 = vpop.f32.mrb[0].mxu0
      %v1817 = vadd.f32 0.0, %v1816
      %1818 = vmatprep.mubr.bf16.mxu0 0
      %1819 = vmatmul.mubr.bf16.gmra.mrb[0].mxu0 %v1596
      %v1820 = vpop.f32.mrb[0].mxu0
      %v1821 = vadd.f32 0.0, %v1820
      %v1822 = vpop.f32.mrb[0].mxu0
      %v1823 = vadd.f32 0.0, %v1822
      %v1824 = vpop.f32.mrb[0].mxu0
      %v1825 = vadd.f32 0.0, %v1824
      %v1826 = vpop.f32.mrb[0].mxu0
      %v1827 = vadd.f32 0.0, %v1826
      %1828 = vmatprep.mubr.bf16.mxu0 0
      %1829 = vmatmul.mubr.bf16.gmra.mrb[0].mxu0 %v1597
      %v1830 = vpop.f32.mrb[0].mxu0
      %v1831 = vadd.f32 0.0, %v1830
      %v1832 = vpop.f32.mrb[0].mxu0
      %v1833 = vadd.f32 0.0, %v1832
      %v1834 = vpop.f32.mrb[0].mxu0
      %v1835 = vadd.f32 0.0, %v1834
      %v1836 = vpop.f32.mrb[0].mxu0
      %v1837 = vadd.f32 0.0, %v1836
      %1838 = vdwg.mxu0
      %1839 = vmatprep.subr.bf16.mxu0 0
      %1840 = vmatpush1.bf16.msra.mxu0 %v1680
      %1841 = vmatprep.subr.bf16.mxu0 0
      %1842 = vmatpush1.bf16.msra.mxu0 %v1683
      %1843 = vmatprep.subr.bf16.mxu0 0
      %1844 = vmatpush1.bf16.msra.mxu0 %v1686
      %1845 = vmatprep.subr.bf16.mxu0 0
      %1846 = vmatpush1.bf16.msra.mxu0 %v1689
      %1847 = vmatprep.subr.bf16.mxu0 0
      %1848 = vmatpush1.bf16.msra.mxu0 %v1692
      %1849 = vmatprep.subr.bf16.mxu0 0
      %1850 = vmatpush1.bf16.msra.mxu0 %v1695
      %1851 = vmatprep.subr.bf16.mxu0 0
      %1852 = vmatpush1.bf16.msra.mxu0 %v1698
      %1853 = vmatprep.subr.bf16.mxu0 0
      %1854 = vmatpush1.bf16.msra.mxu0 %v1701
      %1855 = vmatprep.subr.bf16.mxu0 0
      %1856 = vmatpush1.bf16.msra.mxu0 0
      %1857 = vmatprep.subr.bf16.mxu0 0
      %1858 = vmatpush1.bf16.msra.mxu0 0
      %1859 = vmatprep.subr.bf16.mxu0 0
      %1860 = vmatpush1.bf16.msra.mxu0 0
      %1861 = vmatprep.subr.bf16.mxu0 0
      %1862 = vmatpush1.bf16.msra.mxu0 0
      %1863 = vmatprep.subr.bf16.mxu0 0
      %1864 = vmatpush1.bf16.msra.mxu0 0
      %1865 = vmatprep.subr.bf16.mxu0 0
      %1866 = vmatpush1.bf16.msra.mxu0 0
      %1867 = vmatprep.subr.bf16.mxu0 0
      %1868 = vmatpush1.bf16.msra.mxu0 0
      %1869 = vmatprep.subr.bf16.mxu0 0
      %1870 = vmatpush1.bf16.msra.mxu0 0
      %1871 = vmatprep.mubr.bf16.mxu0 0
      %1872 = vmatmul.mubr.bf16.gmra.mrb[0].mxu0 %v1590
      %v1873 = vpop.f32.mrb[0].mxu0
      %v1874 = vadd.f32 0.0, %v1873
      %v1875 = vpop.f32.mrb[0].mxu0
      %v1876 = vpop.f32.mrb[0].mxu0
      %v1877 = vadd.f32 0.0, %v1876
      %v1878 = vpop.f32.mrb[0].mxu0
      %1879 = vmatprep.mubr.bf16.mxu0 0
      %1880 = vmatmul.mubr.bf16.gmra.mrb[0].mxu0 %v1591
      %v1881 = vpop.f32.mrb[0].mxu0
      %v1882 = vadd.f32 0.0, %v1881
      %v1883 = vpop.f32.mrb[0].mxu0
      %v1884 = vpop.f32.mrb[0].mxu0
      %v1885 = vadd.f32 0.0, %v1884
      %v1886 = vpop.f32.mrb[0].mxu0
      %1887 = vmatprep.mubr.bf16.mxu0 0
      %1888 = vmatmul.mubr.bf16.gmra.mrb[0].mxu0 %v1592
      %v1889 = vpop.f32.mrb[0].mxu0
      %v1890 = vadd.f32 0.0, %v1889
      %v1891 = vpop.f32.mrb[0].mxu0
      %v1892 = vpop.f32.mrb[0].mxu0
      %v1893 = vadd.f32 0.0, %v1892
      %v1894 = vpop.f32.mrb[0].mxu0
      %1895 = vmatprep.mubr.bf16.mxu0 0
      %1896 = vmatmul.mubr.bf16.gmra.mrb[0].mxu0 %v1593
      %v1897 = vpop.f32.mrb[0].mxu0
      %v1898 = vadd.f32 0.0, %v1897
      %v1899 = vpop.f32.mrb[0].mxu0
      %v1900 = vpop.f32.mrb[0].mxu0
      %v1901 = vadd.f32 0.0, %v1900
      %v1902 = vpop.f32.mrb[0].mxu0
      %1903 = vmatprep.mubr.bf16.mxu0 0
      %1904 = vmatmul.mubr.bf16.gmra.mrb[0].mxu0 %v1594
      %v1905 = vpop.f32.mrb[0].mxu0
      %v1906 = vadd.f32 0.0, %v1905
      %v1907 = vpop.f32.mrb[0].mxu0
      %v1908 = vpop.f32.mrb[0].mxu0
      %v1909 = vadd.f32 0.0, %v1908
      %v1910 = vpop.f32.mrb[0].mxu0
      %1911 = vmatprep.mubr.bf16.mxu0 0
      %1912 = vmatmul.mubr.bf16.gmra.mrb[0].mxu0 %v1595
      %v1913 = vpop.f32.mrb[0].mxu0
      %v1914 = vadd.f32 0.0, %v1913
      %v1915 = vpop.f32.mrb[0].mxu0
      %v1916 = vpop.f32.mrb[0].mxu0
      %v1917 = vadd.f32 0.0, %v1916
      %v1918 = vpop.f32.mrb[0].mxu0
      %1919 = vmatprep.mubr.bf16.mxu0 0
      %1920 = vmatmul.mubr.bf16.gmra.mrb[0].mxu0 %v1596
      %v1921 = vpop.f32.mrb[0].mxu0
      %v1922 = vadd.f32 0.0, %v1921
      %v1923 = vpop.f32.mrb[0].mxu0
      %v1924 = vpop.f32.mrb[0].mxu0
      %v1925 = vadd.f32 0.0, %v1924
      %v1926 = vpop.f32.mrb[0].mxu0
      %1927 = vmatprep.mubr.bf16.mxu0 0
      %1928 = vmatmul.mubr.bf16.gmra.mrb[0].mxu0 %v1597
      %v1929 = vpop.f32.mrb[0].mxu0
      %v1930 = vadd.f32 0.0, %v1929
      %v1931 = vpop.f32.mrb[0].mxu0
      %v1932 = vpop.f32.mrb[0].mxu0
      %v1933 = vadd.f32 0.0, %v1932
      %v1934 = vpop.f32.mrb[0].mxu0
      %1935 = vdwg.mxu0
      %v1936 = vpack.c.bf16 %v1765, %v1761
      %v1937 = vpack.c.bf16 %v1767, %v1763
      %v1938 = vpack.c.bf16 %v1877, %v1874
      %v1939 = vpack.c.bf16 %v1775, %v1771
      %v1940 = vpack.c.bf16 %v1777, %v1773
      %v1941 = vpack.c.bf16 %v1885, %v1882
      %v1942 = vpack.c.bf16 %v1785, %v1781
      %v1943 = vpack.c.bf16 %v1787, %v1783
      %v1944 = vpack.c.bf16 %v1893, %v1890
      %v1945 = vpack.c.bf16 %v1795, %v1791
      %v1946 = vpack.c.bf16 %v1797, %v1793
      %v1947 = vpack.c.bf16 %v1901, %v1898
      %v1948 = vpack.c.bf16 %v1805, %v1801
      %v1949 = vpack.c.bf16 %v1807, %v1803
      %v1950 = vpack.c.bf16 %v1909, %v1906
      %v1951 = vpack.c.bf16 %v1815, %v1811
      %v1952 = vpack.c.bf16 %v1817, %v1813
      %v1953 = vpack.c.bf16 %v1917, %v1914
      %v1954 = vpack.c.bf16 %v1825, %v1821
      %v1955 = vpack.c.bf16 %v1827, %v1823
      %v1956 = vpack.c.bf16 %v1925, %v1922
      %v1957 = vpack.c.bf16 %v1835, %v1831
      %v1958 = vpack.c.bf16 %v1837, %v1833
      %v1959 = vpack.c.bf16 %v1933, %v1930
      %1960 = vmatprep.subr.bf16.mxu0 0
      %1961 = vmatpush1.bf16.xpose.msra.mxu0 %v1937
      %1962 = vmatprep.subr.bf16.mxu0 0
      %1963 = vmatpush1.bf16.xpose.msra.mxu0 %v1940
      %1964 = vmatprep.subr.bf16.mxu0 0
      %1965 = vmatpush1.bf16.xpose.msra.mxu0 %v1943
      %1966 = vmatprep.subr.bf16.mxu0 0
      %1967 = vmatpush1.bf16.xpose.msra.mxu0 %v1946
      %1968 = vmatprep.subr.bf16.mxu0 0
      %1969 = vmatpush1.bf16.xpose.msra.mxu0 0
      %1970 = vmatprep.subr.bf16.mxu0 0
      %1971 = vmatpush1.bf16.xpose.msra.mxu0 0
      %1972 = vmatprep.subr.bf16.mxu0 0
      %1973 = vmatpush1.bf16.xpose.msra.mxu0 0
      %1974 = vmatprep.subr.bf16.mxu0 0
      %1975 = vmatpush1.bf16.xpose.msra.mxu0 0
      %1976 = vmatprep.subr.bf16.mxu0 0
      %1977 = vmatpush1.bf16.xpose.msra.mxu0 0
      %1978 = vmatprep.subr.bf16.mxu0 0
      %1979 = vmatpush1.bf16.xpose.msra.mxu0 0
      %1980 = vmatprep.subr.bf16.mxu0 0
      %1981 = vmatpush1.bf16.xpose.msra.mxu0 0
      %1982 = vmatprep.subr.bf16.mxu0 0
      %1983 = vmatpush1.bf16.xpose.msra.mxu0 0
      %1984 = vmatprep.subr.bf16.mxu0 0
      %1985 = vmatpush1.bf16.xpose.msra.mxu0 0
      %1986 = vmatprep.subr.bf16.mxu0 0
      %1987 = vmatpush1.bf16.xpose.msra.mxu0 0
      %1988 = vmatprep.subr.bf16.mxu0 0
      %1989 = vmatpush1.bf16.xpose.msra.mxu0 0
      %1990 = vmatprep.subr.bf16.mxu0 0
      %1991 = vmatpush1.bf16.xpose.msra.mxu0 0
      %1992 = vmatprep.mubr.bf16.mxu0 0
      %1993 = vmatmul.mubr.bf16.gmra.mrb[0].mxu0 %v1936
      %v1994 = vpop.f32.mrb[0].mxu0
      %v1995 = vadd.f32 0.0, %v1994
      %v1996 = vpop.f32.mrb[0].mxu0
      %v1997 = vpop.f32.mrb[0].mxu0
      %v1998 = vadd.f32 0.0, %v1997
      %v1999 = vpop.f32.mrb[0].mxu0
      %2000 = vmatprep.mubr.bf16.mxu0 0
      %2001 = vmatmul.mubr.bf16.gmra.mrb[0].mxu0 %v1939
      %v2002 = vpop.f32.mrb[0].mxu0
      %v2003 = vadd.f32 0.0, %v2002
      %v2004 = vpop.f32.mrb[0].mxu0
      %v2005 = vpop.f32.mrb[0].mxu0
      %v2006 = vadd.f32 0.0, %v2005
      %v2007 = vpop.f32.mrb[0].mxu0
      %2008 = vmatprep.mubr.bf16.mxu0 0
      %2009 = vmatmul.mubr.bf16.gmra.mrb[0].mxu0 %v1942
      %v2010 = vpop.f32.mrb[0].mxu0
      %v2011 = vadd.f32 0.0, %v2010
      %v2012 = vpop.f32.mrb[0].mxu0
      %v2013 = vpop.f32.mrb[0].mxu0
      %v2014 = vadd.f32 0.0, %v2013
      %v2015 = vpop.f32.mrb[0].mxu0
      %2016 = vmatprep.mubr.bf16.mxu0 0
      %2017 = vmatmul.mubr.bf16.gmra.mrb[0].mxu0 %v1945
      %v2018 = vpop.f32.mrb[0].mxu0
      %v2019 = vadd.f32 0.0, %v2018
      %v2020 = vpop.f32.mrb[0].mxu0
      %v2021 = vpop.f32.mrb[0].mxu0
      %v2022 = vadd.f32 0.0, %v2021
      %v2023 = vpop.f32.mrb[0].mxu0
      %2024 = vdwg.mxu0
      %2025 = vmatprep.subr.bf16.mxu0 0
      %2026 = vmatpush1.bf16.xpose.msra.mxu0 %v1949
      %2027 = vmatprep.subr.bf16.mxu0 0
      %2028 = vmatpush1.bf16.xpose.msra.mxu0 %v1952
      %2029 = vmatprep.subr.bf16.mxu0 0
      %2030 = vmatpush1.bf16.xpose.msra.mxu0 %v1955
      %2031 = vmatprep.subr.bf16.mxu0 0
      %2032 = vmatpush1.bf16.xpose.msra.mxu0 %v1958
      %2033 = vmatprep.subr.bf16.mxu0 0
      %2034 = vmatpush1.bf16.xpose.msra.mxu0 0
      %2035 = vmatprep.subr.bf16.mxu0 0
      %2036 = vmatpush1.bf16.xpose.msra.mxu0 0
      %2037 = vmatprep.subr.bf16.mxu0 0
      %2038 = vmatpush1.bf16.xpose.msra.mxu0 0
      %2039 = vmatprep.subr.bf16.mxu0 0
      %2040 = vmatpush1.bf16.xpose.msra.mxu0 0
      %2041 = vmatprep.subr.bf16.mxu0 0
      %2042 = vmatpush1.bf16.xpose.msra.mxu0 0
      %2043 = vmatprep.subr.bf16.mxu0 0
      %2044 = vmatpush1.bf16.xpose.msra.mxu0 0
      %2045 = vmatprep.subr.bf16.mxu0 0
      %2046 = vmatpush1.bf16.xpose.msra.mxu0 0
      %2047 = vmatprep.subr.bf16.mxu0 0
      %2048 = vmatpush1.bf16.xpose.msra.mxu0 0
      %2049 = vmatprep.subr.bf16.mxu0 0
      %2050 = vmatpush1.bf16.xpose.msra.mxu0 0
      %2051 = vmatprep.subr.bf16.mxu0 0
      %2052 = vmatpush1.bf16.xpose.msra.mxu0 0
      %2053 = vmatprep.subr.bf16.mxu0 0
      %2054 = vmatpush1.bf16.xpose.msra.mxu0 0
      %2055 = vmatprep.subr.bf16.mxu0 0
      %2056 = vmatpush1.bf16.xpose.msra.mxu0 0
      %2057 = vmatprep.mubr.bf16.mxu0 0
      %2058 = vmatmul.mubr.bf16.gmra.mrb[0].mxu0 %v1948
      %v2059 = vpop.f32.mrb[0].mxu0
      %v2060 = vadd.f32 0.0, %v2059
      %v2061 = vpop.f32.mrb[0].mxu0
      %v2062 = vpop.f32.mrb[0].mxu0
      %v2063 = vadd.f32 0.0, %v2062
      %v2064 = vpop.f32.mrb[0].mxu0
      %2065 = vmatprep.mubr.bf16.mxu0 0
      %2066 = vmatmul.mubr.bf16.gmra.mrb[0].mxu0 %v1951
      %v2067 = vpop.f32.mrb[0].mxu0
      %v2068 = vadd.f32 0.0, %v2067
      %v2069 = vpop.f32.mrb[0].mxu0
      %v2070 = vpop.f32.mrb[0].mxu0
      %v2071 = vadd.f32 0.0, %v2070
      %v2072 = vpop.f32.mrb[0].mxu0
      %2073 = vmatprep.mubr.bf16.mxu0 0
      %2074 = vmatmul.mubr.bf16.gmra.mrb[0].mxu0 %v1954
      %v2075 = vpop.f32.mrb[0].mxu0
      %v2076 = vadd.f32 0.0, %v2075
      %v2077 = vpop.f32.mrb[0].mxu0
      %v2078 = vpop.f32.mrb[0].mxu0
      %v2079 = vadd.f32 0.0, %v2078
      %v2080 = vpop.f32.mrb[0].mxu0
      %2081 = vmatprep.mubr.bf16.mxu0 0
      %2082 = vmatmul.mubr.bf16.gmra.mrb[0].mxu0 %v1957
      %v2083 = vpop.f32.mrb[0].mxu0
      %v2084 = vadd.f32 0.0, %v2083
      %v2085 = vpop.f32.mrb[0].mxu0
      %v2086 = vpop.f32.mrb[0].mxu0
      %v2087 = vadd.f32 0.0, %v2086
      %v2088 = vpop.f32.mrb[0].mxu0
      %2089 = vdwg.mxu0
      %v2090 = vsel %vm610, %v1995, -inf
      %2091 = vmax.xlane.f32.xlu0 %v2090
      %v2092 = vpop.xlane.xlu0 %2091
      %v2093 = vsel %vm610, %v1998, -inf
      %2094 = vmax.xlane.f32.xlu0 %v2093
      %v2095 = vpop.xlane.xlu0 %2094
      %v2096 = vsel %vm610, %v2003, -inf
      %2097 = vmax.xlane.f32.xlu0 %v2096
      %v2098 = vpop.xlane.xlu0 %2097
      %v2099 = vsel %vm610, %v2006, -inf
      %2100 = vmax.xlane.f32.xlu0 %v2099
      %v2101 = vpop.xlane.xlu0 %2100
      %v2102 = vsel %vm610, %v2011, -inf
      %2103 = vmax.xlane.f32.xlu0 %v2102
      %v2104 = vpop.xlane.xlu0 %2103
      %v2105 = vsel %vm610, %v2014, -inf
      %2106 = vmax.xlane.f32.xlu0 %v2105
      %v2107 = vpop.xlane.xlu0 %2106
      %v2108 = vsel %vm610, %v2019, -inf
      %2109 = vmax.xlane.f32.xlu0 %v2108
      %v2110 = vpop.xlane.xlu0 %2109
      %v2111 = vsel %vm610, %v2022, -inf
      %2112 = vmax.xlane.f32.xlu0 %v2111
      %v2113 = vpop.xlane.xlu0 %2112
      %v2114 = vsel %vm610, %v2060, -inf
      %2115 = vmax.xlane.f32.xlu0 %v2114
      %v2116 = vpop.xlane.xlu0 %2115
      %v2117 = vsel %vm610, %v2063, -inf
      %2118 = vmax.xlane.f32.xlu0 %v2117
      %v2119 = vpop.xlane.xlu0 %2118
      %v2120 = vsel %vm610, %v2068, -inf
      %2121 = vmax.xlane.f32.xlu0 %v2120
      %v2122 = vpop.xlane.xlu0 %2121
      %v2123 = vsel %vm610, %v2071, -inf
      %2124 = vmax.xlane.f32.xlu0 %v2123
      %v2125 = vpop.xlane.xlu0 %2124
      %v2126 = vsel %vm610, %v2076, -inf
      %2127 = vmax.xlane.f32.xlu0 %v2126
      %v2128 = vpop.xlane.xlu0 %2127
      %v2129 = vsel %vm610, %v2079, -inf
      %2130 = vmax.xlane.f32.xlu0 %v2129
      %v2131 = vpop.xlane.xlu0 %2130
      %v2132 = vsel %vm610, %v2084, -inf
      %2133 = vmax.xlane.f32.xlu0 %v2132
      %v2134 = vpop.xlane.xlu0 %2133
      %v2135 = vsel %vm610, %v2087, -inf
      %2136 = vmax.xlane.f32.xlu0 %v2135
      %v2137 = vpop.xlane.xlu0 %2136
      %v2138 = vsub.f32 %v1995, %v2092
      %v2139 = vsub.f32 %v1998, %v2095
      %v2140 = vsub.f32 %v2003, %v2098
      %v2141 = vsub.f32 %v2006, %v2101
      %v2142 = vsub.f32 %v2011, %v2104
      %v2143 = vsub.f32 %v2014, %v2107
      %v2144 = vsub.f32 %v2019, %v2110
      %v2145 = vsub.f32 %v2022, %v2113
      %v2146 = vsub.f32 %v2060, %v2116
      %v2147 = vsub.f32 %v2063, %v2119
      %v2148 = vsub.f32 %v2068, %v2122
      %v2149 = vsub.f32 %v2071, %v2125
      %v2150 = vsub.f32 %v2076, %v2128
      %v2151 = vsub.f32 %v2079, %v2131
      %v2152 = vsub.f32 %v2084, %v2134
      %v2153 = vsub.f32 %v2087, %v2137
      %v2154 = vmul.f32 %v2138, 1.442695
      %v2155 = vpow.pop %v2154
      %v2156 = vmul.f32 %v2139, 1.442695
      %v2157 = vpow.pop %v2156
      %v2158 = vmul.f32 %v2140, 1.442695
      %v2159 = vpow.pop %v2158
      %v2160 = vmul.f32 %v2141, 1.442695
      %v2161 = vpow.pop %v2160
      %v2162 = vmul.f32 %v2142, 1.442695
      %v2163 = vpow.pop %v2162
      %v2164 = vmul.f32 %v2143, 1.442695
      %v2165 = vpow.pop %v2164
      %v2166 = vmul.f32 %v2144, 1.442695
      %v2167 = vpow.pop %v2166
      %v2168 = vmul.f32 %v2145, 1.442695
      %v2169 = vpow.pop %v2168
      %v2170 = vmul.f32 %v2146, 1.442695
      %v2171 = vpow.pop %v2170
      %v2172 = vmul.f32 %v2147, 1.442695
      %v2173 = vpow.pop %v2172
      %v2174 = vmul.f32 %v2148, 1.442695
      %v2175 = vpow.pop %v2174
      %v2176 = vmul.f32 %v2149, 1.442695
      %v2177 = vpow.pop %v2176
      %v2178 = vmul.f32 %v2150, 1.442695
      %v2179 = vpow.pop %v2178
      %v2180 = vmul.f32 %v2151, 1.442695
      %v2181 = vpow.pop %v2180
      %v2182 = vmul.f32 %v2152, 1.442695
      %v2183 = vpow.pop %v2182
      %v2184 = vmul.f32 %v2153, 1.442695
      %v2185 = vpow.pop %v2184
      %v2186 = vsel %vm610, %v2155, 0.0
      %2187 = vadd.xlane.f32.xlu0 %v2186
      %v2188 = vpop.xlane.xlu0 %2187
      %v2189 = vsel %vm610, %v2157, 0.0
      %2190 = vadd.xlane.f32.xlu0 %v2189
      %v2191 = vpop.xlane.xlu0 %2190
      %v2192 = vsel %vm610, %v2159, 0.0
      %2193 = vadd.xlane.f32.xlu0 %v2192
      %v2194 = vpop.xlane.xlu0 %2193
      %v2195 = vsel %vm610, %v2161, 0.0
      %2196 = vadd.xlane.f32.xlu0 %v2195
      %v2197 = vpop.xlane.xlu0 %2196
      %v2198 = vsel %vm610, %v2163, 0.0
      %2199 = vadd.xlane.f32.xlu0 %v2198
      %v2200 = vpop.xlane.xlu0 %2199
      %v2201 = vsel %vm610, %v2165, 0.0
      %2202 = vadd.xlane.f32.xlu0 %v2201
      %v2203 = vpop.xlane.xlu0 %2202
      %v2204 = vsel %vm610, %v2167, 0.0
      %2205 = vadd.xlane.f32.xlu0 %v2204
      %v2206 = vpop.xlane.xlu0 %2205
      %v2207 = vsel %vm610, %v2169, 0.0
      %2208 = vadd.xlane.f32.xlu0 %v2207
      %v2209 = vpop.xlane.xlu0 %2208
      %v2210 = vsel %vm610, %v2171, 0.0
      %2211 = vadd.xlane.f32.xlu0 %v2210
      %v2212 = vpop.xlane.xlu0 %2211
      %v2213 = vsel %vm610, %v2173, 0.0
      %2214 = vadd.xlane.f32.xlu0 %v2213
      %v2215 = vpop.xlane.xlu0 %2214
      %v2216 = vsel %vm610, %v2175, 0.0
      %2217 = vadd.xlane.f32.xlu0 %v2216
      %v2218 = vpop.xlane.xlu0 %2217
      %v2219 = vsel %vm610, %v2177, 0.0
      %2220 = vadd.xlane.f32.xlu0 %v2219
      %v2221 = vpop.xlane.xlu0 %2220
      %v2222 = vsel %vm610, %v2179, 0.0
      %2223 = vadd.xlane.f32.xlu0 %v2222
      %v2224 = vpop.xlane.xlu0 %2223
      %v2225 = vsel %vm610, %v2181, 0.0
      %2226 = vadd.xlane.f32.xlu0 %v2225
      %v2227 = vpop.xlane.xlu0 %2226
      %v2228 = vsel %vm610, %v2183, 0.0
      %2229 = vadd.xlane.f32.xlu0 %v2228
      %v2230 = vpop.xlane.xlu0 %2229
      %v2231 = vsel %vm610, %v2185, 0.0
      %2232 = vadd.xlane.f32.xlu0 %v2231
      %v2233 = vpop.xlane.xlu0 %2232
      %v2234 = vpack.c.bf16 %v2157, %v2155
      %v2235 = vpack.c.bf16 %v2161, %v2159
      %v2236 = vpack.c.bf16 %v2165, %v2163
      %v2237 = vpack.c.bf16 %v2169, %v2167
      %v2238 = vpack.c.bf16 %v2173, %v2171
      %v2239 = vpack.c.bf16 %v2177, %v2175
      %v2240 = vpack.c.bf16 %v2181, %v2179
      %v2241 = vpack.c.bf16 %v2185, %v2183
      %v2243 = vsel %vm610, %v2234, 0
      %v2246 = vsel %vm610, %v2235, 0
      %v2249 = vsel %vm610, %v2236, 0
      %v2252 = vsel %vm610, %v2237, 0
      %2254 = vmatprep.subr.bf16.mxu0 0
      %2255 = vmatpush1.bf16.msra.mxu0 %v1938
      %2256 = vmatprep.subr.bf16.mxu0 0
      %2257 = vmatpush1.bf16.msra.mxu0 %v1941
      %2258 = vmatprep.subr.bf16.mxu0 0
      %2259 = vmatpush1.bf16.msra.mxu0 %v1944
      %2260 = vmatprep.subr.bf16.mxu0 0
      %2261 = vmatpush1.bf16.msra.mxu0 %v1947
      %2262 = vmatprep.subr.bf16.mxu0 0
      %2263 = vmatpush1.bf16.msra.mxu0 0
      %2264 = vmatprep.subr.bf16.mxu0 0
      %2265 = vmatpush1.bf16.msra.mxu0 0
      %2266 = vmatprep.subr.bf16.mxu0 0
      %2267 = vmatpush1.bf16.msra.mxu0 0
      %2268 = vmatprep.subr.bf16.mxu0 0
      %2269 = vmatpush1.bf16.msra.mxu0 0
      %2270 = vmatprep.subr.bf16.mxu0 0
      %2271 = vmatpush1.bf16.msra.mxu0 0
      %2272 = vmatprep.subr.bf16.mxu0 0
      %2273 = vmatpush1.bf16.msra.mxu0 0
      %2274 = vmatprep.subr.bf16.mxu0 0
      %2275 = vmatpush1.bf16.msra.mxu0 0
      %2276 = vmatprep.subr.bf16.mxu0 0
      %2277 = vmatpush1.bf16.msra.mxu0 0
      %2278 = vmatprep.subr.bf16.mxu0 0
      %2279 = vmatpush1.bf16.msra.mxu0 0
      %2280 = vmatprep.subr.bf16.mxu0 0
      %2281 = vmatpush1.bf16.msra.mxu0 0
      %2282 = vmatprep.subr.bf16.mxu0 0
      %2283 = vmatpush1.bf16.msra.mxu0 0
      %2284 = vmatprep.subr.bf16.mxu0 0
      %2285 = vmatpush1.bf16.msra.mxu0 0
      %2286 = vmatprep.mubr.bf16.mxu0 0
      %2287 = vmatmul.mubr.bf16.gmra.mrb[0].mxu0 %v2243
      %v2288 = vpop.f32.mrb[0].mxu0
      %v2289 = vadd.f32 0.0, %v2288
      %v2290 = vpop.f32.mrb[0].mxu0
      %v2291 = vpop.f32.mrb[0].mxu0
      %v2292 = vadd.f32 0.0, %v2291
      %v2293 = vpop.f32.mrb[0].mxu0
      %2294 = vmatprep.mubr.bf16.mxu0 0
      %2295 = vmatmul.mubr.bf16.gmra.mrb[0].mxu0 %v2246
      %v2296 = vpop.f32.mrb[0].mxu0
      %v2297 = vadd.f32 0.0, %v2296
      %v2298 = vpop.f32.mrb[0].mxu0
      %v2299 = vpop.f32.mrb[0].mxu0
      %v2300 = vadd.f32 0.0, %v2299
      %v2301 = vpop.f32.mrb[0].mxu0
      %2302 = vmatprep.mubr.bf16.mxu0 0
      %2303 = vmatmul.mubr.bf16.gmra.mrb[0].mxu0 %v2249
      %v2304 = vpop.f32.mrb[0].mxu0
      %v2305 = vadd.f32 0.0, %v2304
      %v2306 = vpop.f32.mrb[0].mxu0
      %v2307 = vpop.f32.mrb[0].mxu0
      %v2308 = vadd.f32 0.0, %v2307
      %v2309 = vpop.f32.mrb[0].mxu0
      %2310 = vmatprep.mubr.bf16.mxu0 0
      %2311 = vmatmul.mubr.bf16.gmra.mrb[0].mxu0 %v2252
      %v2312 = vpop.f32.mrb[0].mxu0
      %v2313 = vadd.f32 0.0, %v2312
      %v2314 = vpop.f32.mrb[0].mxu0
      %v2315 = vpop.f32.mrb[0].mxu0
      %v2316 = vadd.f32 0.0, %v2315
      %v2317 = vpop.f32.mrb[0].mxu0
      %2318 = vdwg.mxu0
      %v2320 = vsel %vm610, %v2238, 0
      %v2323 = vsel %vm610, %v2239, 0
      %v2326 = vsel %vm610, %v2240, 0
      %v2329 = vsel %vm610, %v2241, 0
      %2331 = vmatprep.subr.bf16.mxu0 0
      %2332 = vmatpush1.bf16.msra.mxu0 %v1950
      %2333 = vmatprep.subr.bf16.mxu0 0
      %2334 = vmatpush1.bf16.msra.mxu0 %v1953
      %2335 = vmatprep.subr.bf16.mxu0 0
      %2336 = vmatpush1.bf16.msra.mxu0 %v1956
      %2337 = vmatprep.subr.bf16.mxu0 0
      %2338 = vmatpush1.bf16.msra.mxu0 %v1959
      %2339 = vmatprep.subr.bf16.mxu0 0
      %2340 = vmatpush1.bf16.msra.mxu0 0
      %2341 = vmatprep.subr.bf16.mxu0 0
      %2342 = vmatpush1.bf16.msra.mxu0 0
      %2343 = vmatprep.subr.bf16.mxu0 0
      %2344 = vmatpush1.bf16.msra.mxu0 0
      %2345 = vmatprep.subr.bf16.mxu0 0
      %2346 = vmatpush1.bf16.msra.mxu0 0
      %2347 = vmatprep.subr.bf16.mxu0 0
      %2348 = vmatpush1.bf16.msra.mxu0 0
      %2349 = vmatprep.subr.bf16.mxu0 0
      %2350 = vmatpush1.bf16.msra.mxu0 0
      %2351 = vmatprep.subr.bf16.mxu0 0
      %2352 = vmatpush1.bf16.msra.mxu0 0
      %2353 = vmatprep.subr.bf16.mxu0 0
      %2354 = vmatpush1.bf16.msra.mxu0 0
      %2355 = vmatprep.subr.bf16.mxu0 0
      %2356 = vmatpush1.bf16.msra.mxu0 0
      %2357 = vmatprep.subr.bf16.mxu0 0
      %2358 = vmatpush1.bf16.msra.mxu0 0
      %2359 = vmatprep.subr.bf16.mxu0 0
      %2360 = vmatpush1.bf16.msra.mxu0 0
      %2361 = vmatprep.subr.bf16.mxu0 0
      %2362 = vmatpush1.bf16.msra.mxu0 0
      %2363 = vmatprep.mubr.bf16.mxu0 0
      %2364 = vmatmul.mubr.bf16.gmra.mrb[0].mxu0 %v2320
      %v2365 = vpop.f32.mrb[0].mxu0
      %v2366 = vadd.f32 0.0, %v2365
      %v2367 = vpop.f32.mrb[0].mxu0
      %v2368 = vpop.f32.mrb[0].mxu0
      %v2369 = vadd.f32 0.0, %v2368
      %v2370 = vpop.f32.mrb[0].mxu0
      %2371 = vmatprep.mubr.bf16.mxu0 0
      %2372 = vmatmul.mubr.bf16.gmra.mrb[0].mxu0 %v2323
      %v2373 = vpop.f32.mrb[0].mxu0
      %v2374 = vadd.f32 0.0, %v2373
      %v2375 = vpop.f32.mrb[0].mxu0
      %v2376 = vpop.f32.mrb[0].mxu0
      %v2377 = vadd.f32 0.0, %v2376
      %v2378 = vpop.f32.mrb[0].mxu0
      %2379 = vmatprep.mubr.bf16.mxu0 0
      %2380 = vmatmul.mubr.bf16.gmra.mrb[0].mxu0 %v2326
      %v2381 = vpop.f32.mrb[0].mxu0
      %v2382 = vadd.f32 0.0, %v2381
      %v2383 = vpop.f32.mrb[0].mxu0
      %v2384 = vpop.f32.mrb[0].mxu0
      %v2385 = vadd.f32 0.0, %v2384
      %v2386 = vpop.f32.mrb[0].mxu0
      %2387 = vmatprep.mubr.bf16.mxu0 0
      %2388 = vmatmul.mubr.bf16.gmra.mrb[0].mxu0 %v2329
      %v2389 = vpop.f32.mrb[0].mxu0
      %v2390 = vadd.f32 0.0, %v2389
      %v2391 = vpop.f32.mrb[0].mxu0
      %v2392 = vpop.f32.mrb[0].mxu0
      %v2393 = vadd.f32 0.0, %v2392
      %v2394 = vpop.f32.mrb[0].mxu0
      %2395 = vdwg.mxu0
      %v2396 = vrcp.pop %v2188
      %v2397 = vrcp.pop %v2191
      %v2398 = vrcp.pop %v2194
      %v2399 = vrcp.pop %v2197
      %v2400 = vrcp.pop %v2200
      %v2401 = vrcp.pop %v2203
      %v2402 = vrcp.pop %v2206
      %v2403 = vrcp.pop %v2209
      %v2404 = vrcp.pop %v2212
      %v2405 = vrcp.pop %v2215
      %v2406 = vrcp.pop %v2218
      %v2407 = vrcp.pop %v2221
      %v2408 = vrcp.pop %v2224
      %v2409 = vrcp.pop %v2227
      %v2410 = vrcp.pop %v2230
      %v2411 = vrcp.pop %v2233
      %v2412 = vmul.f32 %v2289, %v2396
      %v2413 = vmul.f32 %v2292, %v2397
      %v2414 = vmul.f32 %v2297, %v2398
      %v2415 = vmul.f32 %v2300, %v2399
      %v2416 = vmul.f32 %v2305, %v2400
      %v2417 = vmul.f32 %v2308, %v2401
      %v2418 = vmul.f32 %v2313, %v2402
      %v2419 = vmul.f32 %v2316, %v2403
      %v2420 = vmul.f32 %v2366, %v2404
      %v2421 = vmul.f32 %v2369, %v2405
      %v2422 = vmul.f32 %v2374, %v2406
      %v2423 = vmul.f32 %v2377, %v2407
      %v2424 = vmul.f32 %v2382, %v2408
      %v2425 = vmul.f32 %v2385, %v2409
      %v2426 = vmul.f32 %v2390, %v2410
      %v2427 = vmul.f32 %v2393, %v2411
      %v2428 = vld [vmem:[%s12] sm:$0xf]
      %v2429 = vld [vmem:[%s12 + $0x4] sm:$0xf]
      %v2430 = vld [vmem:[%s12 + $0x8] sm:$0xf]
      %v2431 = vld [vmem:[%s12 + $0xc] sm:$0xf]
      %v2432 = vld [vmem:[%s12 + $0x10] sm:$0xf]
      %v2433 = vld [vmem:[%s12 + $0x14] sm:$0xf]
      %v2434 = vld [vmem:[%s12 + $0x18] sm:$0xf]
      %v2435 = vld [vmem:[%s12 + $0x1c] sm:$0xf]
      %v2436 = vld [vmem:[%s12 + $0x20] sm:$0xf]
      %v2437 = vld [vmem:[%s12 + $0x24] sm:$0xf]
      %v2438 = vld [vmem:[%s12 + $0x28] sm:$0xf]
      %v2439 = vld [vmem:[%s12 + $0x2c] sm:$0xf]
      %v2440 = vld [vmem:[%s12 + $0x30] sm:$0xf]
      %v2441 = vld [vmem:[%s12 + $0x34] sm:$0xf]
      %v2442 = vld [vmem:[%s12 + $0x38] sm:$0xf]
      %v2443 = vld [vmem:[%s12 + $0x3c] sm:$0xf]
      %v2444 = vpack.c.bf16 %v2413, %v2412
      %v2445 = vpack.c.bf16 %v2415, %v2414
      %v2446 = vpack.c.bf16 %v2417, %v2416
      %v2447 = vpack.c.bf16 %v2419, %v2418
      %v2448 = vpack.c.bf16 %v2421, %v2420
      %v2449 = vpack.c.bf16 %v2423, %v2422
      %v2450 = vpack.c.bf16 %v2425, %v2424
      %v2451 = vpack.c.bf16 %v2427, %v2426
      %v2468 = vunpack.c.l.b16 %v2428
      %v2469 = vunpack.c.l.b16 %v2429
      %v2470 = vunpack.c.l.b16 %v2430
      %v2471 = vunpack.c.l.b16 %v2431
      %v2472 = vunpack.c.l.b16 %v2432
      %v2473 = vunpack.c.l.b16 %v2433
      %v2474 = vunpack.c.l.b16 %v2434
      %v2475 = vunpack.c.l.b16 %v2435
      %v2476 = vunpack.c.l.b16 %v2436
      %v2477 = vunpack.c.l.b16 %v2437
      %v2478 = vunpack.c.l.b16 %v2438
      %v2479 = vunpack.c.l.b16 %v2439
      %v2480 = vunpack.c.l.b16 %v2440
      %v2481 = vunpack.c.l.b16 %v2441
      %v2482 = vunpack.c.l.b16 %v2442
      %v2483 = vunpack.c.l.b16 %v2443
      %v2484 = vpack.c.b16 %v2469, %v2468
      %v2485 = vpack.c.b16 %v2471, %v2470
      %v2486 = vpack.c.b16 %v2473, %v2472
      %v2487 = vpack.c.b16 %v2475, %v2474
      %v2488 = vpack.c.b16 %v2477, %v2476
      %v2489 = vpack.c.b16 %v2479, %v2478
      %v2490 = vpack.c.b16 %v2481, %v2480
      %v2491 = vpack.c.b16 %v2483, %v2482
      %2500 = vmatprep.subr.bf16.mxu0 0
      %2501 = vmatpush1.bf16.msra.mxu0 %v2484
      %2502 = vmatprep.subr.bf16.mxu0 0
      %2503 = vmatpush1.bf16.msra.mxu0 %v2485
      %2504 = vmatprep.subr.bf16.mxu0 0
      %2505 = vmatpush1.bf16.msra.mxu0 %v2486
      %2506 = vmatprep.subr.bf16.mxu0 0
      %2507 = vmatpush1.bf16.msra.mxu0 %v2487
      %2508 = vmatprep.subr.bf16.mxu0 0
      %2509 = vmatpush1.bf16.msra.mxu0 %v2488
      %2510 = vmatprep.subr.bf16.mxu0 0
      %2511 = vmatpush1.bf16.msra.mxu0 %v2489
      %2512 = vmatprep.subr.bf16.mxu0 0
      %2513 = vmatpush1.bf16.msra.mxu0 %v2490
      %2514 = vmatprep.subr.bf16.mxu0 0
      %2515 = vmatpush1.bf16.msra.mxu0 %v2491
      %2516 = vmatprep.subr.bf16.mxu0 0
      %2517 = vmatpush1.bf16.msra.mxu0 0
      %2518 = vmatprep.subr.bf16.mxu0 0
      %2519 = vmatpush1.bf16.msra.mxu0 0
      %2520 = vmatprep.subr.bf16.mxu0 0
      %2521 = vmatpush1.bf16.msra.mxu0 0
      %2522 = vmatprep.subr.bf16.mxu0 0
      %2523 = vmatpush1.bf16.msra.mxu0 0
      %2524 = vmatprep.subr.bf16.mxu0 0
      %2525 = vmatpush1.bf16.msra.mxu0 0
      %2526 = vmatprep.subr.bf16.mxu0 0
      %2527 = vmatpush1.bf16.msra.mxu0 0
      %2528 = vmatprep.subr.bf16.mxu0 0
      %2529 = vmatpush1.bf16.msra.mxu0 0
      %2530 = vmatprep.subr.bf16.mxu0 0
      %2531 = vmatpush1.bf16.msra.mxu0 0
      %2532 = vmatprep.mubr.bf16.mxu0 0
      %2533 = vmatmul.mubr.bf16.gmra.mrb[0].mxu0 %v2444
      %v2534 = vpop.f32.mrb[0].mxu0
      %v2535 = vadd.f32 0.0, %v2534
      %v2536 = vpop.f32.mrb[0].mxu0
      %v2537 = vpop.f32.mrb[0].mxu0
      %v2538 = vadd.f32 0.0, %v2537
      %v2539 = vpop.f32.mrb[0].mxu0
      %2540 = vmatprep.mubr.bf16.mxu0 0
      %2541 = vmatmul.mubr.bf16.gmra.mrb[0].mxu0 %v2445
      %v2542 = vpop.f32.mrb[0].mxu0
      %v2543 = vadd.f32 0.0, %v2542
      %v2544 = vpop.f32.mrb[0].mxu0
      %v2545 = vpop.f32.mrb[0].mxu0
      %v2546 = vadd.f32 0.0, %v2545
      %v2547 = vpop.f32.mrb[0].mxu0
      %2548 = vmatprep.mubr.bf16.mxu0 0
      %2549 = vmatmul.mubr.bf16.gmra.mrb[0].mxu0 %v2446
      %v2550 = vpop.f32.mrb[0].mxu0
      %v2551 = vadd.f32 0.0, %v2550
      %v2552 = vpop.f32.mrb[0].mxu0
      %v2553 = vpop.f32.mrb[0].mxu0
      %v2554 = vadd.f32 0.0, %v2553
      %v2555 = vpop.f32.mrb[0].mxu0
      %2556 = vmatprep.mubr.bf16.mxu0 0
      %2557 = vmatmul.mubr.bf16.gmra.mrb[0].mxu0 %v2447
      %v2558 = vpop.f32.mrb[0].mxu0
      %v2559 = vadd.f32 0.0, %v2558
      %v2560 = vpop.f32.mrb[0].mxu0
      %v2561 = vpop.f32.mrb[0].mxu0
      %v2562 = vadd.f32 0.0, %v2561
      %v2563 = vpop.f32.mrb[0].mxu0
      %2564 = vmatprep.mubr.bf16.mxu0 0
      %2565 = vmatmul.mubr.bf16.gmra.mrb[0].mxu0 %v2448
      %v2566 = vpop.f32.mrb[0].mxu0
      %v2567 = vadd.f32 0.0, %v2566
      %v2568 = vpop.f32.mrb[0].mxu0
      %v2569 = vpop.f32.mrb[0].mxu0
      %v2570 = vadd.f32 0.0, %v2569
      %v2571 = vpop.f32.mrb[0].mxu0
      %2572 = vmatprep.mubr.bf16.mxu0 0
      %2573 = vmatmul.mubr.bf16.gmra.mrb[0].mxu0 %v2449
      %v2574 = vpop.f32.mrb[0].mxu0
      %v2575 = vadd.f32 0.0, %v2574
      %v2576 = vpop.f32.mrb[0].mxu0
      %v2577 = vpop.f32.mrb[0].mxu0
      %v2578 = vadd.f32 0.0, %v2577
      %v2579 = vpop.f32.mrb[0].mxu0
      %2580 = vmatprep.mubr.bf16.mxu0 0
      %2581 = vmatmul.mubr.bf16.gmra.mrb[0].mxu0 %v2450
      %v2582 = vpop.f32.mrb[0].mxu0
      %v2583 = vadd.f32 0.0, %v2582
      %v2584 = vpop.f32.mrb[0].mxu0
      %v2585 = vpop.f32.mrb[0].mxu0
      %v2586 = vadd.f32 0.0, %v2585
      %v2587 = vpop.f32.mrb[0].mxu0
      %2588 = vmatprep.mubr.bf16.mxu0 0
      %2589 = vmatmul.mubr.bf16.gmra.mrb[0].mxu0 %v2451
      %v2590 = vpop.f32.mrb[0].mxu0
      %v2591 = vadd.f32 0.0, %v2590
      %v2592 = vpop.f32.mrb[0].mxu0
      %v2593 = vpop.f32.mrb[0].mxu0
      %v2594 = vadd.f32 0.0, %v2593
      %v2595 = vpop.f32.mrb[0].mxu0
      %2596 = vdwg.mxu0
      %v2597 = vadd.f32 %v1115, %v1115
      %v2598 = vadd.f32 %v1118, %v1118
      %v2599 = vadd.f32 %v1123, %v1123
      %v2600 = vadd.f32 %v1126, %v1126
      %v2601 = vadd.f32 %v1131, %v1131
      %v2602 = vadd.f32 %v1134, %v1134
      %v2603 = vadd.f32 %v1139, %v1139
      %v2604 = vadd.f32 %v1142, %v1142
      %v2605 = vadd.f32 %v1147, %v1147
      %v2606 = vadd.f32 %v1150, %v1150
      %v2607 = vadd.f32 %v1155, %v1155
      %v2608 = vadd.f32 %v1158, %v1158
      %v2609 = vadd.f32 %v1163, %v1163
      %v2610 = vadd.f32 %v1166, %v1166
      %v2611 = vadd.f32 %v1171, %v1171
      %v2612 = vadd.f32 %v1174, %v1174
      %v2613 = vadd.f32 %v2597, %v2535
      %v2614 = vadd.f32 %v2598, %v2538
      %v2615 = vadd.f32 %v2599, %v2543
      %v2616 = vadd.f32 %v2600, %v2546
      %v2617 = vadd.f32 %v2601, %v2551
      %v2618 = vadd.f32 %v2602, %v2554
      %v2619 = vadd.f32 %v2603, %v2559
      %v2620 = vadd.f32 %v2604, %v2562
      %v2621 = vadd.f32 %v2605, %v2567
      %v2622 = vadd.f32 %v2606, %v2570
      %v2623 = vadd.f32 %v2607, %v2575
      %v2624 = vadd.f32 %v2608, %v2578
      %v2625 = vadd.f32 %v2609, %v2583
      %v2626 = vadd.f32 %v2610, %v2586
      %v2627 = vadd.f32 %v2611, %v2591
      %v2628 = vadd.f32 %v2612, %v2594
      %v2629 = vld [vmem:[%s13] sm:$0xff]
      %v2630 = vld [vmem:[%s13 + $0x8] sm:$0xf]
      %v2631 = vld [vmem:[%s13 + $0xc] sm:$0xff]
      %v2632 = vld [vmem:[%s13 + $0x14] sm:$0xf]
      %v2633 = vld [vmem:[%s13 + $0x18] sm:$0xff]
      %v2634 = vld [vmem:[%s13 + $0x20] sm:$0xf]
      %v2635 = vld [vmem:[%s13 + $0x24] sm:$0xff]
      %v2636 = vld [vmem:[%s13 + $0x2c] sm:$0xf]
      %v2637 = vld [vmem:[%s13 + $0x30] sm:$0xff]
      %v2638 = vld [vmem:[%s13 + $0x38] sm:$0xf]
      %v2639 = vld [vmem:[%s13 + $0x3c] sm:$0xff]
      %v2640 = vld [vmem:[%s13 + $0x44] sm:$0xf]
      %v2641 = vld [vmem:[%s13 + $0x48] sm:$0xff]
      %v2642 = vld [vmem:[%s13 + $0x50] sm:$0xf]
      %v2643 = vld [vmem:[%s13 + $0x54] sm:$0xff]
      %v2644 = vld [vmem:[%s13 + $0x5c] sm:$0xf]
      %v2645 = vld [vmem:[%s13 + $0x60] sm:$0xff]
      %v2646 = vld [vmem:[%s13 + $0x68] sm:$0xf]
      %v2647 = vld [vmem:[%s13 + $0x6c] sm:$0xff]
      %v2648 = vld [vmem:[%s13 + $0x74] sm:$0xf]
      %v2649 = vld [vmem:[%s13 + $0x78] sm:$0xff]
      %v2650 = vld [vmem:[%s13 + $0x80] sm:$0xf]
      %v2651 = vld [vmem:[%s13 + $0x84] sm:$0xff]
      %v2652 = vld [vmem:[%s13 + $0x8c] sm:$0xf]
      %v2653 = vld [vmem:[%s13 + $0x90] sm:$0xff]
      %v2654 = vld [vmem:[%s13 + $0x98] sm:$0xf]
      %v2655 = vld [vmem:[%s13 + $0x9c] sm:$0xff]
      %v2656 = vld [vmem:[%s13 + $0xa4] sm:$0xf]
      %v2657 = vld [vmem:[%s13 + $0xa8] sm:$0xff]
      %v2658 = vld [vmem:[%s13 + $0xb0] sm:$0xf]
      %v2659 = vld [vmem:[%s13 + $0xb4] sm:$0xff]
      %v2660 = vld [vmem:[%s13 + $0xbc] sm:$0xf]
      %v2661 = vpack.c.bf16 %v2614, %v2613
      %v2662 = vpack.c.bf16 %v2616, %v2615
      %v2663 = vpack.c.bf16 %v2618, %v2617
      %v2664 = vpack.c.bf16 %v2620, %v2619
      %v2665 = vpack.c.bf16 %v2622, %v2621
      %v2666 = vpack.c.bf16 %v2624, %v2623
      %v2667 = vpack.c.bf16 %v2626, %v2625
      %v2668 = vpack.c.bf16 %v2628, %v2627
      %v2701 = vunpack.c.l.b16 %v2629
      %v2702 = vunpack.c.h.b16 %v2629
      %v2703 = vunpack.c.l.b16 %v2630
      %v2704 = vunpack.c.l.b16 %v2631
      %v2705 = vunpack.c.h.b16 %v2631
      %v2706 = vunpack.c.l.b16 %v2632
      %v2707 = vunpack.c.l.b16 %v2633
      %v2708 = vunpack.c.h.b16 %v2633
      %v2709 = vunpack.c.l.b16 %v2634
      %v2710 = vunpack.c.l.b16 %v2635
      %v2711 = vunpack.c.h.b16 %v2635
      %v2712 = vunpack.c.l.b16 %v2636
      %v2713 = vunpack.c.l.b16 %v2637
      %v2714 = vunpack.c.h.b16 %v2637
      %v2715 = vunpack.c.l.b16 %v2638
      %v2716 = vunpack.c.l.b16 %v2639
      %v2717 = vunpack.c.h.b16 %v2639
      %v2718 = vunpack.c.l.b16 %v2640
      %v2719 = vunpack.c.l.b16 %v2641
      %v2720 = vunpack.c.h.b16 %v2641
      %v2721 = vunpack.c.l.b16 %v2642
      %v2722 = vunpack.c.l.b16 %v2643
      %v2723 = vunpack.c.h.b16 %v2643
      %v2724 = vunpack.c.l.b16 %v2644
      %v2725 = vunpack.c.l.b16 %v2645
      %v2726 = vunpack.c.h.b16 %v2645
      %v2727 = vunpack.c.l.b16 %v2646
      %v2728 = vunpack.c.l.b16 %v2647
      %v2729 = vunpack.c.h.b16 %v2647
      %v2730 = vunpack.c.l.b16 %v2648
      %v2731 = vunpack.c.l.b16 %v2649
      %v2732 = vunpack.c.h.b16 %v2649
      %v2733 = vunpack.c.l.b16 %v2650
      %v2734 = vunpack.c.l.b16 %v2651
      %v2735 = vunpack.c.h.b16 %v2651
      %v2736 = vunpack.c.l.b16 %v2652
      %v2737 = vunpack.c.l.b16 %v2653
      %v2738 = vunpack.c.h.b16 %v2653
      %v2739 = vunpack.c.l.b16 %v2654
      %v2740 = vunpack.c.l.b16 %v2655
      %v2741 = vunpack.c.h.b16 %v2655
      %v2742 = vunpack.c.l.b16 %v2656
      %v2743 = vunpack.c.l.b16 %v2657
      %v2744 = vunpack.c.h.b16 %v2657
      %v2745 = vunpack.c.l.b16 %v2658
      %v2746 = vunpack.c.l.b16 %v2659
      %v2747 = vunpack.c.h.b16 %v2659
      %v2748 = vunpack.c.l.b16 %v2660
      %v2749 = vpack.c.b16 %v2704, %v2701
      %v2750 = vpack.c.b16 %v2705, %v2702
      %v2751 = vpack.c.b16 %v2706, %v2703
      %v2752 = vpack.c.b16 %v2710, %v2707
      %v2753 = vpack.c.b16 %v2711, %v2708
      %v2754 = vpack.c.b16 %v2712, %v2709
      %v2755 = vpack.c.b16 %v2716, %v2713
      %v2756 = vpack.c.b16 %v2717, %v2714
      %v2757 = vpack.c.b16 %v2718, %v2715
      %v2758 = vpack.c.b16 %v2722, %v2719
      %v2759 = vpack.c.b16 %v2723, %v2720
      %v2760 = vpack.c.b16 %v2724, %v2721
      %v2761 = vpack.c.b16 %v2728, %v2725
      %v2762 = vpack.c.b16 %v2729, %v2726
      %v2763 = vpack.c.b16 %v2730, %v2727
      %v2764 = vpack.c.b16 %v2734, %v2731
      %v2765 = vpack.c.b16 %v2735, %v2732
      %v2766 = vpack.c.b16 %v2736, %v2733
      %v2767 = vpack.c.b16 %v2740, %v2737
      %v2768 = vpack.c.b16 %v2741, %v2738
      %v2769 = vpack.c.b16 %v2742, %v2739
      %v2770 = vpack.c.b16 %v2746, %v2743
      %v2771 = vpack.c.b16 %v2747, %v2744
      %v2772 = vpack.c.b16 %v2748, %v2745
      %2797 = vmatprep.subr.bf16.mxu0 %v2750
      %2798 = vmatpush1.bf16.msra.mxu0 %v2749
      %2799 = vmatprep.subr.bf16.mxu0 %v2753
      %2800 = vmatpush1.bf16.msra.mxu0 %v2752
      %2801 = vmatprep.subr.bf16.mxu0 %v2756
      %2802 = vmatpush1.bf16.msra.mxu0 %v2755
      %2803 = vmatprep.subr.bf16.mxu0 %v2759
      %2804 = vmatpush1.bf16.msra.mxu0 %v2758
      %2805 = vmatprep.subr.bf16.mxu0 %v2762
      %2806 = vmatpush1.bf16.msra.mxu0 %v2761
      %2807 = vmatprep.subr.bf16.mxu0 %v2765
      %2808 = vmatpush1.bf16.msra.mxu0 %v2764
      %2809 = vmatprep.subr.bf16.mxu0 %v2768
      %2810 = vmatpush1.bf16.msra.mxu0 %v2767
      %2811 = vmatprep.subr.bf16.mxu0 %v2771
      %2812 = vmatpush1.bf16.msra.mxu0 %v2770
      %2813 = vmatprep.subr.bf16.mxu0 0
      %2814 = vmatpush1.bf16.msra.mxu0 0
      %2815 = vmatprep.subr.bf16.mxu0 0
      %2816 = vmatpush1.bf16.msra.mxu0 0
      %2817 = vmatprep.subr.bf16.mxu0 0
      %2818 = vmatpush1.bf16.msra.mxu0 0
      %2819 = vmatprep.subr.bf16.mxu0 0
      %2820 = vmatpush1.bf16.msra.mxu0 0
      %2821 = vmatprep.subr.bf16.mxu0 0
      %2822 = vmatpush1.bf16.msra.mxu0 0
      %2823 = vmatprep.subr.bf16.mxu0 0
      %2824 = vmatpush1.bf16.msra.mxu0 0
      %2825 = vmatprep.subr.bf16.mxu0 0
      %2826 = vmatpush1.bf16.msra.mxu0 0
      %2827 = vmatprep.subr.bf16.mxu0 0
      %2828 = vmatpush1.bf16.msra.mxu0 0
      %2829 = vmatprep.mubr.bf16.mxu0 0
      %2830 = vmatmul.mubr.bf16.gmra.mrb[0].mxu0 %v2661
      %v2831 = vpop.f32.mrb[0].mxu0
      %v2832 = vadd.f32 0.0, %v2831
      %v2833 = vpop.f32.mrb[0].mxu0
      %v2834 = vadd.f32 0.0, %v2833
      %v2835 = vpop.f32.mrb[0].mxu0
      %v2836 = vadd.f32 0.0, %v2835
      %v2837 = vpop.f32.mrb[0].mxu0
      %v2838 = vadd.f32 0.0, %v2837
      %2839 = vmatprep.mubr.bf16.mxu0 0
      %2840 = vmatmul.mubr.bf16.gmra.mrb[0].mxu0 %v2662
      %v2841 = vpop.f32.mrb[0].mxu0
      %v2842 = vadd.f32 0.0, %v2841
      %v2843 = vpop.f32.mrb[0].mxu0
      %v2844 = vadd.f32 0.0, %v2843
      %v2845 = vpop.f32.mrb[0].mxu0
      %v2846 = vadd.f32 0.0, %v2845
      %v2847 = vpop.f32.mrb[0].mxu0
      %v2848 = vadd.f32 0.0, %v2847
      %2849 = vmatprep.mubr.bf16.mxu0 0
      %2850 = vmatmul.mubr.bf16.gmra.mrb[0].mxu0 %v2663
      %v2851 = vpop.f32.mrb[0].mxu0
      %v2852 = vadd.f32 0.0, %v2851
      %v2853 = vpop.f32.mrb[0].mxu0
      %v2854 = vadd.f32 0.0, %v2853
      %v2855 = vpop.f32.mrb[0].mxu0
      %v2856 = vadd.f32 0.0, %v2855
      %v2857 = vpop.f32.mrb[0].mxu0
      %v2858 = vadd.f32 0.0, %v2857
      %2859 = vmatprep.mubr.bf16.mxu0 0
      %2860 = vmatmul.mubr.bf16.gmra.mrb[0].mxu0 %v2664
      %v2861 = vpop.f32.mrb[0].mxu0
      %v2862 = vadd.f32 0.0, %v2861
      %v2863 = vpop.f32.mrb[0].mxu0
      %v2864 = vadd.f32 0.0, %v2863
      %v2865 = vpop.f32.mrb[0].mxu0
      %v2866 = vadd.f32 0.0, %v2865
      %v2867 = vpop.f32.mrb[0].mxu0
      %v2868 = vadd.f32 0.0, %v2867
      %2869 = vmatprep.mubr.bf16.mxu0 0
      %2870 = vmatmul.mubr.bf16.gmra.mrb[0].mxu0 %v2665
      %v2871 = vpop.f32.mrb[0].mxu0
      %v2872 = vadd.f32 0.0, %v2871
      %v2873 = vpop.f32.mrb[0].mxu0
      %v2874 = vadd.f32 0.0, %v2873
      %v2875 = vpop.f32.mrb[0].mxu0
      %v2876 = vadd.f32 0.0, %v2875
      %v2877 = vpop.f32.mrb[0].mxu0
      %v2878 = vadd.f32 0.0, %v2877
      %2879 = vmatprep.mubr.bf16.mxu0 0
      %2880 = vmatmul.mubr.bf16.gmra.mrb[0].mxu0 %v2666
      %v2881 = vpop.f32.mrb[0].mxu0
      %v2882 = vadd.f32 0.0, %v2881
      %v2883 = vpop.f32.mrb[0].mxu0
      %v2884 = vadd.f32 0.0, %v2883
      %v2885 = vpop.f32.mrb[0].mxu0
      %v2886 = vadd.f32 0.0, %v2885
      %v2887 = vpop.f32.mrb[0].mxu0
      %v2888 = vadd.f32 0.0, %v2887
      %2889 = vmatprep.mubr.bf16.mxu0 0
      %2890 = vmatmul.mubr.bf16.gmra.mrb[0].mxu0 %v2667
      %v2891 = vpop.f32.mrb[0].mxu0
      %v2892 = vadd.f32 0.0, %v2891
      %v2893 = vpop.f32.mrb[0].mxu0
      %v2894 = vadd.f32 0.0, %v2893
      %v2895 = vpop.f32.mrb[0].mxu0
      %v2896 = vadd.f32 0.0, %v2895
      %v2897 = vpop.f32.mrb[0].mxu0
      %v2898 = vadd.f32 0.0, %v2897
      %2899 = vmatprep.mubr.bf16.mxu0 0
      %2900 = vmatmul.mubr.bf16.gmra.mrb[0].mxu0 %v2668
      %v2901 = vpop.f32.mrb[0].mxu0
      %v2902 = vadd.f32 0.0, %v2901
      %v2903 = vpop.f32.mrb[0].mxu0
      %v2904 = vadd.f32 0.0, %v2903
      %v2905 = vpop.f32.mrb[0].mxu0
      %v2906 = vadd.f32 0.0, %v2905
      %v2907 = vpop.f32.mrb[0].mxu0
      %v2908 = vadd.f32 0.0, %v2907
      %2909 = vdwg.mxu0
      %2910 = vmatprep.subr.bf16.mxu0 0
      %2911 = vmatpush1.bf16.msra.mxu0 %v2751
      %2912 = vmatprep.subr.bf16.mxu0 0
      %2913 = vmatpush1.bf16.msra.mxu0 %v2754
      %2914 = vmatprep.subr.bf16.mxu0 0
      %2915 = vmatpush1.bf16.msra.mxu0 %v2757
      %2916 = vmatprep.subr.bf16.mxu0 0
      %2917 = vmatpush1.bf16.msra.mxu0 %v2760
      %2918 = vmatprep.subr.bf16.mxu0 0
      %2919 = vmatpush1.bf16.msra.mxu0 %v2763
      %2920 = vmatprep.subr.bf16.mxu0 0
      %2921 = vmatpush1.bf16.msra.mxu0 %v2766
      %2922 = vmatprep.subr.bf16.mxu0 0
      %2923 = vmatpush1.bf16.msra.mxu0 %v2769
      %2924 = vmatprep.subr.bf16.mxu0 0
      %2925 = vmatpush1.bf16.msra.mxu0 %v2772
      %2926 = vmatprep.subr.bf16.mxu0 0
      %2927 = vmatpush1.bf16.msra.mxu0 0
      %2928 = vmatprep.subr.bf16.mxu0 0
      %2929 = vmatpush1.bf16.msra.mxu0 0
      %2930 = vmatprep.subr.bf16.mxu0 0
      %2931 = vmatpush1.bf16.msra.mxu0 0
      %2932 = vmatprep.subr.bf16.mxu0 0
      %2933 = vmatpush1.bf16.msra.mxu0 0
      %2934 = vmatprep.subr.bf16.mxu0 0
      %2935 = vmatpush1.bf16.msra.mxu0 0
      %2936 = vmatprep.subr.bf16.mxu0 0
      %2937 = vmatpush1.bf16.msra.mxu0 0
      %2938 = vmatprep.subr.bf16.mxu0 0
      %2939 = vmatpush1.bf16.msra.mxu0 0
      %2940 = vmatprep.subr.bf16.mxu0 0
      %2941 = vmatpush1.bf16.msra.mxu0 0
      %2942 = vmatprep.mubr.bf16.mxu0 0
      %2943 = vmatmul.mubr.bf16.gmra.mrb[0].mxu0 %v2661
      %v2944 = vpop.f32.mrb[0].mxu0
      %v2945 = vadd.f32 0.0, %v2944
      %v2946 = vpop.f32.mrb[0].mxu0
      %v2947 = vpop.f32.mrb[0].mxu0
      %v2948 = vadd.f32 0.0, %v2947
      %v2949 = vpop.f32.mrb[0].mxu0
      %2950 = vmatprep.mubr.bf16.mxu0 0
      %2951 = vmatmul.mubr.bf16.gmra.mrb[0].mxu0 %v2662
      %v2952 = vpop.f32.mrb[0].mxu0
      %v2953 = vadd.f32 0.0, %v2952
      %v2954 = vpop.f32.mrb[0].mxu0
      %v2955 = vpop.f32.mrb[0].mxu0
      %v2956 = vadd.f32 0.0, %v2955
      %v2957 = vpop.f32.mrb[0].mxu0
      %2958 = vmatprep.mubr.bf16.mxu0 0
      %2959 = vmatmul.mubr.bf16.gmra.mrb[0].mxu0 %v2663
      %v2960 = vpop.f32.mrb[0].mxu0
      %v2961 = vadd.f32 0.0, %v2960
      %v2962 = vpop.f32.mrb[0].mxu0
      %v2963 = vpop.f32.mrb[0].mxu0
      %v2964 = vadd.f32 0.0, %v2963
      %v2965 = vpop.f32.mrb[0].mxu0
      %2966 = vmatprep.mubr.bf16.mxu0 0
      %2967 = vmatmul.mubr.bf16.gmra.mrb[0].mxu0 %v2664
      %v2968 = vpop.f32.mrb[0].mxu0
      %v2969 = vadd.f32 0.0, %v2968
      %v2970 = vpop.f32.mrb[0].mxu0
      %v2971 = vpop.f32.mrb[0].mxu0
      %v2972 = vadd.f32 0.0, %v2971
      %v2973 = vpop.f32.mrb[0].mxu0
      %2974 = vmatprep.mubr.bf16.mxu0 0
      %2975 = vmatmul.mubr.bf16.gmra.mrb[0].mxu0 %v2665
      %v2976 = vpop.f32.mrb[0].mxu0
      %v2977 = vadd.f32 0.0, %v2976
      %v2978 = vpop.f32.mrb[0].mxu0
      %v2979 = vpop.f32.mrb[0].mxu0
      %v2980 = vadd.f32 0.0, %v2979
      %v2981 = vpop.f32.mrb[0].mxu0
      %2982 = vmatprep.mubr.bf16.mxu0 0
      %2983 = vmatmul.mubr.bf16.gmra.mrb[0].mxu0 %v2666
      %v2984 = vpop.f32.mrb[0].mxu0
      %v2985 = vadd.f32 0.0, %v2984
      %v2986 = vpop.f32.mrb[0].mxu0
      %v2987 = vpop.f32.mrb[0].mxu0
      %v2988 = vadd.f32 0.0, %v2987
      %v2989 = vpop.f32.mrb[0].mxu0
      %2990 = vmatprep.mubr.bf16.mxu0 0
      %2991 = vmatmul.mubr.bf16.gmra.mrb[0].mxu0 %v2667
      %v2992 = vpop.f32.mrb[0].mxu0
      %v2993 = vadd.f32 0.0, %v2992
      %v2994 = vpop.f32.mrb[0].mxu0
      %v2995 = vpop.f32.mrb[0].mxu0
      %v2996 = vadd.f32 0.0, %v2995
      %v2997 = vpop.f32.mrb[0].mxu0
      %2998 = vmatprep.mubr.bf16.mxu0 0
      %2999 = vmatmul.mubr.bf16.gmra.mrb[0].mxu0 %v2668
      %v3000 = vpop.f32.mrb[0].mxu0
      %v3001 = vadd.f32 0.0, %v3000
      %v3002 = vpop.f32.mrb[0].mxu0
      %v3003 = vpop.f32.mrb[0].mxu0
      %v3004 = vadd.f32 0.0, %v3003
      %v3005 = vpop.f32.mrb[0].mxu0
      %3006 = vdwg.mxu0
      %v3007 = vpack.c.bf16 %v2836, %v2832
      %v3008 = vpack.c.bf16 %v2838, %v2834
      %v3009 = vpack.c.bf16 %v2948, %v2945
      %v3010 = vpack.c.bf16 %v2846, %v2842
      %v3011 = vpack.c.bf16 %v2848, %v2844
      %v3012 = vpack.c.bf16 %v2956, %v2953
      %v3013 = vpack.c.bf16 %v2856, %v2852
      %v3014 = vpack.c.bf16 %v2858, %v2854
      %v3015 = vpack.c.bf16 %v2964, %v2961
      %v3016 = vpack.c.bf16 %v2866, %v2862
      %v3017 = vpack.c.bf16 %v2868, %v2864
      %v3018 = vpack.c.bf16 %v2972, %v2969
      %v3019 = vpack.c.bf16 %v2876, %v2872
      %v3020 = vpack.c.bf16 %v2878, %v2874
      %v3021 = vpack.c.bf16 %v2980, %v2977
      %v3022 = vpack.c.bf16 %v2886, %v2882
      %v3023 = vpack.c.bf16 %v2888, %v2884
      %v3024 = vpack.c.bf16 %v2988, %v2985
      %v3025 = vpack.c.bf16 %v2896, %v2892
      %v3026 = vpack.c.bf16 %v2898, %v2894
      %v3027 = vpack.c.bf16 %v2996, %v2993
      %v3028 = vpack.c.bf16 %v2906, %v2902
      %v3029 = vpack.c.bf16 %v2908, %v2904
      %v3030 = vpack.c.bf16 %v3004, %v3001
      %3039 = vrot.lane.b32.xlu0 %v3007, 96
      %v3040 = vpop.permute.xlu0 %3039
      %3041 = vrot.lane.b32.xlu0 %v3010, 96
      %v3042 = vpop.permute.xlu0 %3041
      %3043 = vrot.lane.b32.xlu0 %v3013, 96
      %v3044 = vpop.permute.xlu0 %3043
      %3045 = vrot.lane.b32.xlu0 %v3016, 96
      %v3046 = vpop.permute.xlu0 %3045
      %3047 = vrot.lane.b32.xlu0 %v3019, 96
      %v3048 = vpop.permute.xlu0 %3047
      %3049 = vrot.lane.b32.xlu0 %v3022, 96
      %v3050 = vpop.permute.xlu0 %3049
      %3051 = vrot.lane.b32.xlu0 %v3025, 96
      %v3052 = vpop.permute.xlu0 %3051
      %3053 = vrot.lane.b32.xlu0 %v3028, 96
      %v3054 = vpop.permute.xlu0 %3053
      %3055 = vrot.lane.b32.xlu0 %v3007, 64
      %v3056 = vpop.permute.xlu0 %3055
      %3057 = vrot.lane.b32.xlu0 %v3010, 64
      %v3058 = vpop.permute.xlu0 %3057
      %3059 = vrot.lane.b32.xlu0 %v3013, 64
      %v3060 = vpop.permute.xlu0 %3059
      %3061 = vrot.lane.b32.xlu0 %v3016, 64
      %v3062 = vpop.permute.xlu0 %3061
      %3063 = vrot.lane.b32.xlu0 %v3019, 64
      %v3064 = vpop.permute.xlu0 %3063
      %3065 = vrot.lane.b32.xlu0 %v3022, 64
      %v3066 = vpop.permute.xlu0 %3065
      %3067 = vrot.lane.b32.xlu0 %v3025, 64
      %v3068 = vpop.permute.xlu0 %3067
      %3069 = vrot.lane.b32.xlu0 %v3028, 64
      %v3070 = vpop.permute.xlu0 %3069
      %3071 = vrot.lane.b32.xlu0 %v3007, 32
      %v3072 = vpop.permute.xlu0 %3071
      %3073 = vrot.lane.b32.xlu0 %v3010, 32
      %v3074 = vpop.permute.xlu0 %3073
      %3075 = vrot.lane.b32.xlu0 %v3013, 32
      %v3076 = vpop.permute.xlu0 %3075
      %3077 = vrot.lane.b32.xlu0 %v3016, 32
      %v3078 = vpop.permute.xlu0 %3077
      %3079 = vrot.lane.b32.xlu0 %v3019, 32
      %v3080 = vpop.permute.xlu0 %3079
      %3081 = vrot.lane.b32.xlu0 %v3022, 32
      %v3082 = vpop.permute.xlu0 %3081
      %3083 = vrot.lane.b32.xlu0 %v3025, 32
      %v3084 = vpop.permute.xlu0 %3083
      %3085 = vrot.lane.b32.xlu0 %v3028, 32
      %v3086 = vpop.permute.xlu0 %3085
      %3095 = vrot.lane.b32.xlu0 %v3008, 96
      %v3096 = vpop.permute.xlu0 %3095
      %3097 = vrot.lane.b32.xlu0 %v3011, 96
      %v3098 = vpop.permute.xlu0 %3097
      %3099 = vrot.lane.b32.xlu0 %v3014, 96
      %v3100 = vpop.permute.xlu0 %3099
      %3101 = vrot.lane.b32.xlu0 %v3017, 96
      %v3102 = vpop.permute.xlu0 %3101
      %3103 = vrot.lane.b32.xlu0 %v3020, 96
      %v3104 = vpop.permute.xlu0 %3103
      %3105 = vrot.lane.b32.xlu0 %v3023, 96
      %v3106 = vpop.permute.xlu0 %3105
      %3107 = vrot.lane.b32.xlu0 %v3026, 96
      %v3108 = vpop.permute.xlu0 %3107
      %3109 = vrot.lane.b32.xlu0 %v3029, 96
      %v3110 = vpop.permute.xlu0 %3109
      %3111 = vrot.lane.b32.xlu0 %v3008, 64
      %v3112 = vpop.permute.xlu0 %3111
      %3113 = vrot.lane.b32.xlu0 %v3011, 64
      %v3114 = vpop.permute.xlu0 %3113
      %3115 = vrot.lane.b32.xlu0 %v3014, 64
      %v3116 = vpop.permute.xlu0 %3115
      %3117 = vrot.lane.b32.xlu0 %v3017, 64
      %v3118 = vpop.permute.xlu0 %3117
      %3119 = vrot.lane.b32.xlu0 %v3020, 64
      %v3120 = vpop.permute.xlu0 %3119
      %3121 = vrot.lane.b32.xlu0 %v3023, 64
      %v3122 = vpop.permute.xlu0 %3121
      %3123 = vrot.lane.b32.xlu0 %v3026, 64
      %v3124 = vpop.permute.xlu0 %3123
      %3125 = vrot.lane.b32.xlu0 %v3029, 64
      %v3126 = vpop.permute.xlu0 %3125
      %3127 = vrot.lane.b32.xlu0 %v3008, 32
      %v3128 = vpop.permute.xlu0 %3127
      %3129 = vrot.lane.b32.xlu0 %v3011, 32
      %v3130 = vpop.permute.xlu0 %3129
      %3131 = vrot.lane.b32.xlu0 %v3014, 32
      %v3132 = vpop.permute.xlu0 %3131
      %3133 = vrot.lane.b32.xlu0 %v3017, 32
      %v3134 = vpop.permute.xlu0 %3133
      %3135 = vrot.lane.b32.xlu0 %v3020, 32
      %v3136 = vpop.permute.xlu0 %3135
      %3137 = vrot.lane.b32.xlu0 %v3023, 32
      %v3138 = vpop.permute.xlu0 %3137
      %3139 = vrot.lane.b32.xlu0 %v3026, 32
      %v3140 = vpop.permute.xlu0 %3139
      %3141 = vrot.lane.b32.xlu0 %v3029, 32
      %v3142 = vpop.permute.xlu0 %3141
      %3151 = vrot.lane.b32.xlu0 %v3009, 96
      %v3152 = vpop.permute.xlu0 %3151
      %3153 = vrot.lane.b32.xlu0 %v3012, 96
      %v3154 = vpop.permute.xlu0 %3153
      %3155 = vrot.lane.b32.xlu0 %v3015, 96
      %v3156 = vpop.permute.xlu0 %3155
      %3157 = vrot.lane.b32.xlu0 %v3018, 96
      %v3158 = vpop.permute.xlu0 %3157
      %3159 = vrot.lane.b32.xlu0 %v3021, 96
      %v3160 = vpop.permute.xlu0 %3159
      %3161 = vrot.lane.b32.xlu0 %v3024, 96
      %v3162 = vpop.permute.xlu0 %3161
      %3163 = vrot.lane.b32.xlu0 %v3027, 96
      %v3164 = vpop.permute.xlu0 %3163
      %3165 = vrot.lane.b32.xlu0 %v3030, 96
      %v3166 = vpop.permute.xlu0 %3165
      %3175 = vrot.lane.b32.xlu0 %v3009, 64
      %v3176 = vpop.permute.xlu0 %3175
      %3177 = vrot.lane.b32.xlu0 %v3012, 64
      %v3178 = vpop.permute.xlu0 %3177
      %3179 = vrot.lane.b32.xlu0 %v3015, 64
      %v3180 = vpop.permute.xlu0 %3179
      %3181 = vrot.lane.b32.xlu0 %v3018, 64
      %v3182 = vpop.permute.xlu0 %3181
      %3183 = vrot.lane.b32.xlu0 %v3021, 64
      %v3184 = vpop.permute.xlu0 %3183
      %3185 = vrot.lane.b32.xlu0 %v3024, 64
      %v3186 = vpop.permute.xlu0 %3185
      %3187 = vrot.lane.b32.xlu0 %v3027, 64
      %v3188 = vpop.permute.xlu0 %3187
      %3189 = vrot.lane.b32.xlu0 %v3030, 64
      %v3190 = vpop.permute.xlu0 %3189
      %3199 = vrot.lane.b32.xlu0 %v3009, 32
      %v3200 = vpop.permute.xlu0 %3199
      %3201 = vrot.lane.b32.xlu0 %v3012, 32
      %v3202 = vpop.permute.xlu0 %3201
      %3203 = vrot.lane.b32.xlu0 %v3015, 32
      %v3204 = vpop.permute.xlu0 %3203
      %3205 = vrot.lane.b32.xlu0 %v3018, 32
      %v3206 = vpop.permute.xlu0 %3205
      %3207 = vrot.lane.b32.xlu0 %v3021, 32
      %v3208 = vpop.permute.xlu0 %3207
      %3209 = vrot.lane.b32.xlu0 %v3024, 32
      %v3210 = vpop.permute.xlu0 %3209
      %3211 = vrot.lane.b32.xlu0 %v3027, 32
      %v3212 = vpop.permute.xlu0 %3211
      %3213 = vrot.lane.b32.xlu0 %v3030, 32
      %v3214 = vpop.permute.xlu0 %3213
      %v3224 = vsel %vm800, %v3007, 0
      %v3227 = vsel %vm800, %v3010, 0
      %v3230 = vsel %vm800, %v3013, 0
      %v3233 = vsel %vm800, %v3016, 0
      %v3236 = vsel %vm800, %v3008, 0
      %v3239 = vsel %vm800, %v3011, 0
      %v3242 = vsel %vm800, %v3014, 0
      %v3245 = vsel %vm800, %v3017, 0
      %3247 = vmatprep.subr.bf16.mxu0 0
      %3248 = vmatpush1.bf16.xpose.msra.mxu0 %v3236
      %3249 = vmatprep.subr.bf16.mxu0 0
      %3250 = vmatpush1.bf16.xpose.msra.mxu0 %v3239
      %3251 = vmatprep.subr.bf16.mxu0 0
      %3252 = vmatpush1.bf16.xpose.msra.mxu0 %v3242
      %3253 = vmatprep.subr.bf16.mxu0 0
      %3254 = vmatpush1.bf16.xpose.msra.mxu0 %v3245
      %3255 = vmatprep.subr.bf16.mxu0 0
      %3256 = vmatpush1.bf16.xpose.msra.mxu0 0
      %3257 = vmatprep.subr.bf16.mxu0 0
      %3258 = vmatpush1.bf16.xpose.msra.mxu0 0
      %3259 = vmatprep.subr.bf16.mxu0 0
      %3260 = vmatpush1.bf16.xpose.msra.mxu0 0
      %3261 = vmatprep.subr.bf16.mxu0 0
      %3262 = vmatpush1.bf16.xpose.msra.mxu0 0
      %3263 = vmatprep.subr.bf16.mxu0 0
      %3264 = vmatpush1.bf16.xpose.msra.mxu0 0
      %3265 = vmatprep.subr.bf16.mxu0 0
      %3266 = vmatpush1.bf16.xpose.msra.mxu0 0
      %3267 = vmatprep.subr.bf16.mxu0 0
      %3268 = vmatpush1.bf16.xpose.msra.mxu0 0
      %3269 = vmatprep.subr.bf16.mxu0 0
      %3270 = vmatpush1.bf16.xpose.msra.mxu0 0
      %3271 = vmatprep.subr.bf16.mxu0 0
      %3272 = vmatpush1.bf16.xpose.msra.mxu0 0
      %3273 = vmatprep.subr.bf16.mxu0 0
      %3274 = vmatpush1.bf16.xpose.msra.mxu0 0
      %3275 = vmatprep.subr.bf16.mxu0 0
      %3276 = vmatpush1.bf16.xpose.msra.mxu0 0
      %3277 = vmatprep.subr.bf16.mxu0 0
      %3278 = vmatpush1.bf16.xpose.msra.mxu0 0
      %3279 = vmatprep.mubr.bf16.mxu0 0
      %3280 = vmatmul.mubr.bf16.gmra.mrb[0].mxu0 %v3224
      %v3281 = vpop.f32.mrb[0].mxu0
      %v3282 = vadd.f32 0.0, %v3281
      %v3283 = vpop.f32.mrb[0].mxu0
      %v3284 = vpop.f32.mrb[0].mxu0
      %v3285 = vadd.f32 0.0, %v3284
      %v3286 = vpop.f32.mrb[0].mxu0
      %3287 = vmatprep.mubr.bf16.mxu0 0
      %3288 = vmatmul.mubr.bf16.gmra.mrb[0].mxu0 %v3227
      %v3289 = vpop.f32.mrb[0].mxu0
      %v3290 = vadd.f32 0.0, %v3289
      %v3291 = vpop.f32.mrb[0].mxu0
      %v3292 = vpop.f32.mrb[0].mxu0
      %v3293 = vadd.f32 0.0, %v3292
      %v3294 = vpop.f32.mrb[0].mxu0
      %3295 = vmatprep.mubr.bf16.mxu0 0
      %3296 = vmatmul.mubr.bf16.gmra.mrb[0].mxu0 %v3230
      %v3297 = vpop.f32.mrb[0].mxu0
      %v3298 = vadd.f32 0.0, %v3297
      %v3299 = vpop.f32.mrb[0].mxu0
      %v3300 = vpop.f32.mrb[0].mxu0
      %v3301 = vadd.f32 0.0, %v3300
      %v3302 = vpop.f32.mrb[0].mxu0
      %3303 = vmatprep.mubr.bf16.mxu0 0
      %3304 = vmatmul.mubr.bf16.gmra.mrb[0].mxu0 %v3233
      %v3305 = vpop.f32.mrb[0].mxu0
      %v3306 = vadd.f32 0.0, %v3305
      %v3307 = vpop.f32.mrb[0].mxu0
      %v3308 = vpop.f32.mrb[0].mxu0
      %v3309 = vadd.f32 0.0, %v3308
      %v3310 = vpop.f32.mrb[0].mxu0
      %3311 = vdwg.mxu0
      %v3313 = vsel %vm800, %v3019, 0
      %v3316 = vsel %vm800, %v3022, 0
      %v3319 = vsel %vm800, %v3025, 0
      %v3322 = vsel %vm800, %v3028, 0
      %v3325 = vsel %vm800, %v3020, 0
      %v3328 = vsel %vm800, %v3023, 0
      %v3331 = vsel %vm800, %v3026, 0
      %v3334 = vsel %vm800, %v3029, 0
      %3336 = vmatprep.subr.bf16.mxu0 0
      %3337 = vmatpush1.bf16.xpose.msra.mxu0 %v3325
      %3338 = vmatprep.subr.bf16.mxu0 0
      %3339 = vmatpush1.bf16.xpose.msra.mxu0 %v3328
      %3340 = vmatprep.subr.bf16.mxu0 0
      %3341 = vmatpush1.bf16.xpose.msra.mxu0 %v3331
      %3342 = vmatprep.subr.bf16.mxu0 0
      %3343 = vmatpush1.bf16.xpose.msra.mxu0 %v3334
      %3344 = vmatprep.subr.bf16.mxu0 0
      %3345 = vmatpush1.bf16.xpose.msra.mxu0 0
      %3346 = vmatprep.subr.bf16.mxu0 0
      %3347 = vmatpush1.bf16.xpose.msra.mxu0 0
      %3348 = vmatprep.subr.bf16.mxu0 0
      %3349 = vmatpush1.bf16.xpose.msra.mxu0 0
      %3350 = vmatprep.subr.bf16.mxu0 0
      %3351 = vmatpush1.bf16.xpose.msra.mxu0 0
      %3352 = vmatprep.subr.bf16.mxu0 0
      %3353 = vmatpush1.bf16.xpose.msra.mxu0 0
      %3354 = vmatprep.subr.bf16.mxu0 0
      %3355 = vmatpush1.bf16.xpose.msra.mxu0 0
      %3356 = vmatprep.subr.bf16.mxu0 0
      %3357 = vmatpush1.bf16.xpose.msra.mxu0 0
      %3358 = vmatprep.subr.bf16.mxu0 0
      %3359 = vmatpush1.bf16.xpose.msra.mxu0 0
      %3360 = vmatprep.subr.bf16.mxu0 0
      %3361 = vmatpush1.bf16.xpose.msra.mxu0 0
      %3362 = vmatprep.subr.bf16.mxu0 0
      %3363 = vmatpush1.bf16.xpose.msra.mxu0 0
      %3364 = vmatprep.subr.bf16.mxu0 0
      %3365 = vmatpush1.bf16.xpose.msra.mxu0 0
      %3366 = vmatprep.subr.bf16.mxu0 0
      %3367 = vmatpush1.bf16.xpose.msra.mxu0 0
      %3368 = vmatprep.mubr.bf16.mxu0 0
      %3369 = vmatmul.mubr.bf16.gmra.mrb[0].mxu0 %v3313
      %v3370 = vpop.f32.mrb[0].mxu0
      %v3371 = vadd.f32 0.0, %v3370
      %v3372 = vpop.f32.mrb[0].mxu0
      %v3373 = vpop.f32.mrb[0].mxu0
      %v3374 = vadd.f32 0.0, %v3373
      %v3375 = vpop.f32.mrb[0].mxu0
      %3376 = vmatprep.mubr.bf16.mxu0 0
      %3377 = vmatmul.mubr.bf16.gmra.mrb[0].mxu0 %v3316
      %v3378 = vpop.f32.mrb[0].mxu0
      %v3379 = vadd.f32 0.0, %v3378
      %v3380 = vpop.f32.mrb[0].mxu0
      %v3381 = vpop.f32.mrb[0].mxu0
      %v3382 = vadd.f32 0.0, %v3381
      %v3383 = vpop.f32.mrb[0].mxu0
      %3384 = vmatprep.mubr.bf16.mxu0 0
      %3385 = vmatmul.mubr.bf16.gmra.mrb[0].mxu0 %v3319
      %v3386 = vpop.f32.mrb[0].mxu0
      %v3387 = vadd.f32 0.0, %v3386
      %v3388 = vpop.f32.mrb[0].mxu0
      %v3389 = vpop.f32.mrb[0].mxu0
      %v3390 = vadd.f32 0.0, %v3389
      %v3391 = vpop.f32.mrb[0].mxu0
      %3392 = vmatprep.mubr.bf16.mxu0 0
      %3393 = vmatmul.mubr.bf16.gmra.mrb[0].mxu0 %v3322
      %v3394 = vpop.f32.mrb[0].mxu0
      %v3395 = vadd.f32 0.0, %v3394
      %v3396 = vpop.f32.mrb[0].mxu0
      %v3397 = vpop.f32.mrb[0].mxu0
      %v3398 = vadd.f32 0.0, %v3397
      %v3399 = vpop.f32.mrb[0].mxu0
      %3400 = vdwg.mxu0
      %v3402 = vsel %vm800, %v3040, 0
      %v3405 = vsel %vm800, %v3042, 0
      %v3408 = vsel %vm800, %v3044, 0
      %v3411 = vsel %vm800, %v3046, 0
      %v3414 = vsel %vm800, %v3096, 0
      %v3417 = vsel %vm800, %v3098, 0
      %v3420 = vsel %vm800, %v3100, 0
      %v3423 = vsel %vm800, %v3102, 0
      %3425 = vmatprep.subr.bf16.mxu0 0
      %3426 = vmatpush1.bf16.xpose.msra.mxu0 %v3414
      %3427 = vmatprep.subr.bf16.mxu0 0
      %3428 = vmatpush1.bf16.xpose.msra.mxu0 %v3417
      %3429 = vmatprep.subr.bf16.mxu0 0
      %3430 = vmatpush1.bf16.xpose.msra.mxu0 %v3420
      %3431 = vmatprep.subr.bf16.mxu0 0
      %3432 = vmatpush1.bf16.xpose.msra.mxu0 %v3423
      %3433 = vmatprep.subr.bf16.mxu0 0
      %3434 = vmatpush1.bf16.xpose.msra.mxu0 0
      %3435 = vmatprep.subr.bf16.mxu0 0
      %3436 = vmatpush1.bf16.xpose.msra.mxu0 0
      %3437 = vmatprep.subr.bf16.mxu0 0
      %3438 = vmatpush1.bf16.xpose.msra.mxu0 0
      %3439 = vmatprep.subr.bf16.mxu0 0
      %3440 = vmatpush1.bf16.xpose.msra.mxu0 0
      %3441 = vmatprep.subr.bf16.mxu0 0
      %3442 = vmatpush1.bf16.xpose.msra.mxu0 0
      %3443 = vmatprep.subr.bf16.mxu0 0
      %3444 = vmatpush1.bf16.xpose.msra.mxu0 0
      %3445 = vmatprep.subr.bf16.mxu0 0
      %3446 = vmatpush1.bf16.xpose.msra.mxu0 0
      %3447 = vmatprep.subr.bf16.mxu0 0
      %3448 = vmatpush1.bf16.xpose.msra.mxu0 0
      %3449 = vmatprep.subr.bf16.mxu0 0
      %3450 = vmatpush1.bf16.xpose.msra.mxu0 0
      %3451 = vmatprep.subr.bf16.mxu0 0
      %3452 = vmatpush1.bf16.xpose.msra.mxu0 0
      %3453 = vmatprep.subr.bf16.mxu0 0
      %3454 = vmatpush1.bf16.xpose.msra.mxu0 0
      %3455 = vmatprep.subr.bf16.mxu0 0
      %3456 = vmatpush1.bf16.xpose.msra.mxu0 0
      %3457 = vmatprep.mubr.bf16.mxu0 0
      %3458 = vmatmul.mubr.bf16.gmra.mrb[0].mxu0 %v3402
      %v3459 = vpop.f32.mrb[0].mxu0
      %v3460 = vadd.f32 0.0, %v3459
      %v3461 = vpop.f32.mrb[0].mxu0
      %v3462 = vpop.f32.mrb[0].mxu0
      %v3463 = vadd.f32 0.0, %v3462
      %v3464 = vpop.f32.mrb[0].mxu0
      %3465 = vmatprep.mubr.bf16.mxu0 0
      %3466 = vmatmul.mubr.bf16.gmra.mrb[0].mxu0 %v3405
      %v3467 = vpop.f32.mrb[0].mxu0
      %v3468 = vadd.f32 0.0, %v3467
      %v3469 = vpop.f32.mrb[0].mxu0
      %v3470 = vpop.f32.mrb[0].mxu0
      %v3471 = vadd.f32 0.0, %v3470
      %v3472 = vpop.f32.mrb[0].mxu0
      %3473 = vmatprep.mubr.bf16.mxu0 0
      %3474 = vmatmul.mubr.bf16.gmra.mrb[0].mxu0 %v3408
      %v3475 = vpop.f32.mrb[0].mxu0
      %v3476 = vadd.f32 0.0, %v3475
      %v3477 = vpop.f32.mrb[0].mxu0
      %v3478 = vpop.f32.mrb[0].mxu0
      %v3479 = vadd.f32 0.0, %v3478
      %v3480 = vpop.f32.mrb[0].mxu0
      %3481 = vmatprep.mubr.bf16.mxu0 0
      %3482 = vmatmul.mubr.bf16.gmra.mrb[0].mxu0 %v3411
      %v3483 = vpop.f32.mrb[0].mxu0
      %v3484 = vadd.f32 0.0, %v3483
      %v3485 = vpop.f32.mrb[0].mxu0
      %v3486 = vpop.f32.mrb[0].mxu0
      %v3487 = vadd.f32 0.0, %v3486
      %v3488 = vpop.f32.mrb[0].mxu0
      %3489 = vdwg.mxu0
      %v3491 = vsel %vm800, %v3048, 0
      %v3494 = vsel %vm800, %v3050, 0
      %v3497 = vsel %vm800, %v3052, 0
      %v3500 = vsel %vm800, %v3054, 0
      %v3503 = vsel %vm800, %v3104, 0
      %v3506 = vsel %vm800, %v3106, 0
      %v3509 = vsel %vm800, %v3108, 0
      %v3512 = vsel %vm800, %v3110, 0
      %3514 = vmatprep.subr.bf16.mxu0 0
      %3515 = vmatpush1.bf16.xpose.msra.mxu0 %v3503
      %3516 = vmatprep.subr.bf16.mxu0 0
      %3517 = vmatpush1.bf16.xpose.msra.mxu0 %v3506
      %3518 = vmatprep.subr.bf16.mxu0 0
      %3519 = vmatpush1.bf16.xpose.msra.mxu0 %v3509
      %3520 = vmatprep.subr.bf16.mxu0 0
      %3521 = vmatpush1.bf16.xpose.msra.mxu0 %v3512
      %3522 = vmatprep.subr.bf16.mxu0 0
      %3523 = vmatpush1.bf16.xpose.msra.mxu0 0
      %3524 = vmatprep.subr.bf16.mxu0 0
      %3525 = vmatpush1.bf16.xpose.msra.mxu0 0
      %3526 = vmatprep.subr.bf16.mxu0 0
      %3527 = vmatpush1.bf16.xpose.msra.mxu0 0
      %3528 = vmatprep.subr.bf16.mxu0 0
      %3529 = vmatpush1.bf16.xpose.msra.mxu0 0
      %3530 = vmatprep.subr.bf16.mxu0 0
      %3531 = vmatpush1.bf16.xpose.msra.mxu0 0
      %3532 = vmatprep.subr.bf16.mxu0 0
      %3533 = vmatpush1.bf16.xpose.msra.mxu0 0
      %3534 = vmatprep.subr.bf16.mxu0 0
      %3535 = vmatpush1.bf16.xpose.msra.mxu0 0
      %3536 = vmatprep.subr.bf16.mxu0 0
      %3537 = vmatpush1.bf16.xpose.msra.mxu0 0
      %3538 = vmatprep.subr.bf16.mxu0 0
      %3539 = vmatpush1.bf16.xpose.msra.mxu0 0
      %3540 = vmatprep.subr.bf16.mxu0 0
      %3541 = vmatpush1.bf16.xpose.msra.mxu0 0
      %3542 = vmatprep.subr.bf16.mxu0 0
      %3543 = vmatpush1.bf16.xpose.msra.mxu0 0
      %3544 = vmatprep.subr.bf16.mxu0 0
      %3545 = vmatpush1.bf16.xpose.msra.mxu0 0
      %3546 = vmatprep.mubr.bf16.mxu0 0
      %3547 = vmatmul.mubr.bf16.gmra.mrb[0].mxu0 %v3491
      %v3548 = vpop.f32.mrb[0].mxu0
      %v3549 = vadd.f32 0.0, %v3548
      %v3550 = vpop.f32.mrb[0].mxu0
      %v3551 = vpop.f32.mrb[0].mxu0
      %v3552 = vadd.f32 0.0, %v3551
      %v3553 = vpop.f32.mrb[0].mxu0
      %3554 = vmatprep.mubr.bf16.mxu0 0
      %3555 = vmatmul.mubr.bf16.gmra.mrb[0].mxu0 %v3494
      %v3556 = vpop.f32.mrb[0].mxu0
      %v3557 = vadd.f32 0.0, %v3556
      %v3558 = vpop.f32.mrb[0].mxu0
      %v3559 = vpop.f32.mrb[0].mxu0
      %v3560 = vadd.f32 0.0, %v3559
      %v3561 = vpop.f32.mrb[0].mxu0
      %3562 = vmatprep.mubr.bf16.mxu0 0
      %3563 = vmatmul.mubr.bf16.gmra.mrb[0].mxu0 %v3497
      %v3564 = vpop.f32.mrb[0].mxu0
      %v3565 = vadd.f32 0.0, %v3564
      %v3566 = vpop.f32.mrb[0].mxu0
      %v3567 = vpop.f32.mrb[0].mxu0
      %v3568 = vadd.f32 0.0, %v3567
      %v3569 = vpop.f32.mrb[0].mxu0
      %3570 = vmatprep.mubr.bf16.mxu0 0
      %3571 = vmatmul.mubr.bf16.gmra.mrb[0].mxu0 %v3500
      %v3572 = vpop.f32.mrb[0].mxu0
      %v3573 = vadd.f32 0.0, %v3572
      %v3574 = vpop.f32.mrb[0].mxu0
      %v3575 = vpop.f32.mrb[0].mxu0
      %v3576 = vadd.f32 0.0, %v3575
      %v3577 = vpop.f32.mrb[0].mxu0
      %3578 = vdwg.mxu0
      %v3580 = vsel %vm800, %v3056, 0
      %v3583 = vsel %vm800, %v3058, 0
      %v3586 = vsel %vm800, %v3060, 0
      %v3589 = vsel %vm800, %v3062, 0
      %v3592 = vsel %vm800, %v3112, 0
      %v3595 = vsel %vm800, %v3114, 0
      %v3598 = vsel %vm800, %v3116, 0
      %v3601 = vsel %vm800, %v3118, 0
      %3603 = vmatprep.subr.bf16.mxu0 0
      %3604 = vmatpush1.bf16.xpose.msra.mxu0 %v3592
      %3605 = vmatprep.subr.bf16.mxu0 0
      %3606 = vmatpush1.bf16.xpose.msra.mxu0 %v3595
      %3607 = vmatprep.subr.bf16.mxu0 0
      %3608 = vmatpush1.bf16.xpose.msra.mxu0 %v3598
      %3609 = vmatprep.subr.bf16.mxu0 0
      %3610 = vmatpush1.bf16.xpose.msra.mxu0 %v3601
      %3611 = vmatprep.subr.bf16.mxu0 0
      %3612 = vmatpush1.bf16.xpose.msra.mxu0 0
      %3613 = vmatprep.subr.bf16.mxu0 0
      %3614 = vmatpush1.bf16.xpose.msra.mxu0 0
      %3615 = vmatprep.subr.bf16.mxu0 0
      %3616 = vmatpush1.bf16.xpose.msra.mxu0 0
      %3617 = vmatprep.subr.bf16.mxu0 0
      %3618 = vmatpush1.bf16.xpose.msra.mxu0 0
      %3619 = vmatprep.subr.bf16.mxu0 0
      %3620 = vmatpush1.bf16.xpose.msra.mxu0 0
      %3621 = vmatprep.subr.bf16.mxu0 0
      %3622 = vmatpush1.bf16.xpose.msra.mxu0 0
      %3623 = vmatprep.subr.bf16.mxu0 0
      %3624 = vmatpush1.bf16.xpose.msra.mxu0 0
      %3625 = vmatprep.subr.bf16.mxu0 0
      %3626 = vmatpush1.bf16.xpose.msra.mxu0 0
      %3627 = vmatprep.subr.bf16.mxu0 0
      %3628 = vmatpush1.bf16.xpose.msra.mxu0 0
      %3629 = vmatprep.subr.bf16.mxu0 0
      %3630 = vmatpush1.bf16.xpose.msra.mxu0 0
      %3631 = vmatprep.subr.bf16.mxu0 0
      %3632 = vmatpush1.bf16.xpose.msra.mxu0 0
      %3633 = vmatprep.subr.bf16.mxu0 0
      %3634 = vmatpush1.bf16.xpose.msra.mxu0 0
      %3635 = vmatprep.mubr.bf16.mxu0 0
      %3636 = vmatmul.mubr.bf16.gmra.mrb[0].mxu0 %v3580
      %v3637 = vpop.f32.mrb[0].mxu0
      %v3638 = vadd.f32 0.0, %v3637
      %v3639 = vpop.f32.mrb[0].mxu0
      %v3640 = vpop.f32.mrb[0].mxu0
      %v3641 = vadd.f32 0.0, %v3640
      %v3642 = vpop.f32.mrb[0].mxu0
      %3643 = vmatprep.mubr.bf16.mxu0 0
      %3644 = vmatmul.mubr.bf16.gmra.mrb[0].mxu0 %v3583
      %v3645 = vpop.f32.mrb[0].mxu0
      %v3646 = vadd.f32 0.0, %v3645
      %v3647 = vpop.f32.mrb[0].mxu0
      %v3648 = vpop.f32.mrb[0].mxu0
      %v3649 = vadd.f32 0.0, %v3648
      %v3650 = vpop.f32.mrb[0].mxu0
      %3651 = vmatprep.mubr.bf16.mxu0 0
      %3652 = vmatmul.mubr.bf16.gmra.mrb[0].mxu0 %v3586
      %v3653 = vpop.f32.mrb[0].mxu0
      %v3654 = vadd.f32 0.0, %v3653
      %v3655 = vpop.f32.mrb[0].mxu0
      %v3656 = vpop.f32.mrb[0].mxu0
      %v3657 = vadd.f32 0.0, %v3656
      %v3658 = vpop.f32.mrb[0].mxu0
      %3659 = vmatprep.mubr.bf16.mxu0 0
      %3660 = vmatmul.mubr.bf16.gmra.mrb[0].mxu0 %v3589
      %v3661 = vpop.f32.mrb[0].mxu0
      %v3662 = vadd.f32 0.0, %v3661
      %v3663 = vpop.f32.mrb[0].mxu0
      %v3664 = vpop.f32.mrb[0].mxu0
      %v3665 = vadd.f32 0.0, %v3664
      %v3666 = vpop.f32.mrb[0].mxu0
      %3667 = vdwg.mxu0
      %v3669 = vsel %vm800, %v3064, 0
      %v3672 = vsel %vm800, %v3066, 0
      %v3675 = vsel %vm800, %v3068, 0
      %v3678 = vsel %vm800, %v3070, 0
      %v3681 = vsel %vm800, %v3120, 0
      %v3684 = vsel %vm800, %v3122, 0
      %v3687 = vsel %vm800, %v3124, 0
      %v3690 = vsel %vm800, %v3126, 0
      %3692 = vmatprep.subr.bf16.mxu0 0
      %3693 = vmatpush1.bf16.xpose.msra.mxu0 %v3681
      %3694 = vmatprep.subr.bf16.mxu0 0
      %3695 = vmatpush1.bf16.xpose.msra.mxu0 %v3684
      %3696 = vmatprep.subr.bf16.mxu0 0
      %3697 = vmatpush1.bf16.xpose.msra.mxu0 %v3687
      %3698 = vmatprep.subr.bf16.mxu0 0
      %3699 = vmatpush1.bf16.xpose.msra.mxu0 %v3690
      %3700 = vmatprep.subr.bf16.mxu0 0
      %3701 = vmatpush1.bf16.xpose.msra.mxu0 0
      %3702 = vmatprep.subr.bf16.mxu0 0
      %3703 = vmatpush1.bf16.xpose.msra.mxu0 0
      %3704 = vmatprep.subr.bf16.mxu0 0
      %3705 = vmatpush1.bf16.xpose.msra.mxu0 0
      %3706 = vmatprep.subr.bf16.mxu0 0
      %3707 = vmatpush1.bf16.xpose.msra.mxu0 0
      %3708 = vmatprep.subr.bf16.mxu0 0
      %3709 = vmatpush1.bf16.xpose.msra.mxu0 0
      %3710 = vmatprep.subr.bf16.mxu0 0
      %3711 = vmatpush1.bf16.xpose.msra.mxu0 0
      %3712 = vmatprep.subr.bf16.mxu0 0
      %3713 = vmatpush1.bf16.xpose.msra.mxu0 0
      %3714 = vmatprep.subr.bf16.mxu0 0
      %3715 = vmatpush1.bf16.xpose.msra.mxu0 0
      %3716 = vmatprep.subr.bf16.mxu0 0
      %3717 = vmatpush1.bf16.xpose.msra.mxu0 0
      %3718 = vmatprep.subr.bf16.mxu0 0
      %3719 = vmatpush1.bf16.xpose.msra.mxu0 0
      %3720 = vmatprep.subr.bf16.mxu0 0
      %3721 = vmatpush1.bf16.xpose.msra.mxu0 0
      %3722 = vmatprep.subr.bf16.mxu0 0
      %3723 = vmatpush1.bf16.xpose.msra.mxu0 0
      %3724 = vmatprep.mubr.bf16.mxu0 0
      %3725 = vmatmul.mubr.bf16.gmra.mrb[0].mxu0 %v3669
      %v3726 = vpop.f32.mrb[0].mxu0
      %v3727 = vadd.f32 0.0, %v3726
      %v3728 = vpop.f32.mrb[0].mxu0
      %v3729 = vpop.f32.mrb[0].mxu0
      %v3730 = vadd.f32 0.0, %v3729
      %v3731 = vpop.f32.mrb[0].mxu0
      %3732 = vmatprep.mubr.bf16.mxu0 0
      %3733 = vmatmul.mubr.bf16.gmra.mrb[0].mxu0 %v3672
      %v3734 = vpop.f32.mrb[0].mxu0
      %v3735 = vadd.f32 0.0, %v3734
      %v3736 = vpop.f32.mrb[0].mxu0
      %v3737 = vpop.f32.mrb[0].mxu0
      %v3738 = vadd.f32 0.0, %v3737
      %v3739 = vpop.f32.mrb[0].mxu0
      %3740 = vmatprep.mubr.bf16.mxu0 0
      %3741 = vmatmul.mubr.bf16.gmra.mrb[0].mxu0 %v3675
      %v3742 = vpop.f32.mrb[0].mxu0
      %v3743 = vadd.f32 0.0, %v3742
      %v3744 = vpop.f32.mrb[0].mxu0
      %v3745 = vpop.f32.mrb[0].mxu0
      %v3746 = vadd.f32 0.0, %v3745
      %v3747 = vpop.f32.mrb[0].mxu0
      %3748 = vmatprep.mubr.bf16.mxu0 0
      %3749 = vmatmul.mubr.bf16.gmra.mrb[0].mxu0 %v3678
      %v3750 = vpop.f32.mrb[0].mxu0
      %v3751 = vadd.f32 0.0, %v3750
      %v3752 = vpop.f32.mrb[0].mxu0
      %v3753 = vpop.f32.mrb[0].mxu0
      %v3754 = vadd.f32 0.0, %v3753
      %v3755 = vpop.f32.mrb[0].mxu0
      %3756 = vdwg.mxu0
      %v3758 = vsel %vm800, %v3072, 0
      %v3761 = vsel %vm800, %v3074, 0
      %v3764 = vsel %vm800, %v3076, 0
      %v3767 = vsel %vm800, %v3078, 0
      %v3770 = vsel %vm800, %v3128, 0
      %v3773 = vsel %vm800, %v3130, 0
      %v3776 = vsel %vm800, %v3132, 0
      %v3779 = vsel %vm800, %v3134, 0
      %3781 = vmatprep.subr.bf16.mxu0 0
      %3782 = vmatpush1.bf16.xpose.msra.mxu0 %v3770
      %3783 = vmatprep.subr.bf16.mxu0 0
      %3784 = vmatpush1.bf16.xpose.msra.mxu0 %v3773
      %3785 = vmatprep.subr.bf16.mxu0 0
      %3786 = vmatpush1.bf16.xpose.msra.mxu0 %v3776
      %3787 = vmatprep.subr.bf16.mxu0 0
      %3788 = vmatpush1.bf16.xpose.msra.mxu0 %v3779
      %3789 = vmatprep.subr.bf16.mxu0 0
      %3790 = vmatpush1.bf16.xpose.msra.mxu0 0
      %3791 = vmatprep.subr.bf16.mxu0 0
      %3792 = vmatpush1.bf16.xpose.msra.mxu0 0
      %3793 = vmatprep.subr.bf16.mxu0 0
      %3794 = vmatpush1.bf16.xpose.msra.mxu0 0
      %3795 = vmatprep.subr.bf16.mxu0 0
      %3796 = vmatpush1.bf16.xpose.msra.mxu0 0
      %3797 = vmatprep.subr.bf16.mxu0 0
      %3798 = vmatpush1.bf16.xpose.msra.mxu0 0
      %3799 = vmatprep.subr.bf16.mxu0 0
      %3800 = vmatpush1.bf16.xpose.msra.mxu0 0
      %3801 = vmatprep.subr.bf16.mxu0 0
      %3802 = vmatpush1.bf16.xpose.msra.mxu0 0
      %3803 = vmatprep.subr.bf16.mxu0 0
      %3804 = vmatpush1.bf16.xpose.msra.mxu0 0
      %3805 = vmatprep.subr.bf16.mxu0 0
      %3806 = vmatpush1.bf16.xpose.msra.mxu0 0
      %3807 = vmatprep.subr.bf16.mxu0 0
      %3808 = vmatpush1.bf16.xpose.msra.mxu0 0
      %3809 = vmatprep.subr.bf16.mxu0 0
      %3810 = vmatpush1.bf16.xpose.msra.mxu0 0
      %3811 = vmatprep.subr.bf16.mxu0 0
      %3812 = vmatpush1.bf16.xpose.msra.mxu0 0
      %3813 = vmatprep.mubr.bf16.mxu0 0
      %3814 = vmatmul.mubr.bf16.gmra.mrb[0].mxu0 %v3758
      %v3815 = vpop.f32.mrb[0].mxu0
      %v3816 = vadd.f32 0.0, %v3815
      %v3817 = vpop.f32.mrb[0].mxu0
      %v3818 = vpop.f32.mrb[0].mxu0
      %v3819 = vadd.f32 0.0, %v3818
      %v3820 = vpop.f32.mrb[0].mxu0
      %3821 = vmatprep.mubr.bf16.mxu0 0
      %3822 = vmatmul.mubr.bf16.gmra.mrb[0].mxu0 %v3761
      %v3823 = vpop.f32.mrb[0].mxu0
      %v3824 = vadd.f32 0.0, %v3823
      %v3825 = vpop.f32.mrb[0].mxu0
      %v3826 = vpop.f32.mrb[0].mxu0
      %v3827 = vadd.f32 0.0, %v3826
      %v3828 = vpop.f32.mrb[0].mxu0
      %3829 = vmatprep.mubr.bf16.mxu0 0
      %3830 = vmatmul.mubr.bf16.gmra.mrb[0].mxu0 %v3764
      %v3831 = vpop.f32.mrb[0].mxu0
      %v3832 = vadd.f32 0.0, %v3831
      %v3833 = vpop.f32.mrb[0].mxu0
      %v3834 = vpop.f32.mrb[0].mxu0
      %v3835 = vadd.f32 0.0, %v3834
      %v3836 = vpop.f32.mrb[0].mxu0
      %3837 = vmatprep.mubr.bf16.mxu0 0
      %3838 = vmatmul.mubr.bf16.gmra.mrb[0].mxu0 %v3767
      %v3839 = vpop.f32.mrb[0].mxu0
      %v3840 = vadd.f32 0.0, %v3839
      %v3841 = vpop.f32.mrb[0].mxu0
      %v3842 = vpop.f32.mrb[0].mxu0
      %v3843 = vadd.f32 0.0, %v3842
      %v3844 = vpop.f32.mrb[0].mxu0
      %3845 = vdwg.mxu0
      %v3847 = vsel %vm800, %v3080, 0
      %v3850 = vsel %vm800, %v3082, 0
      %v3853 = vsel %vm800, %v3084, 0
      %v3856 = vsel %vm800, %v3086, 0
      %v3859 = vsel %vm800, %v3136, 0
      %v3862 = vsel %vm800, %v3138, 0
      %v3865 = vsel %vm800, %v3140, 0
      %v3868 = vsel %vm800, %v3142, 0
      %3870 = vmatprep.subr.bf16.mxu0 0
      %3871 = vmatpush1.bf16.xpose.msra.mxu0 %v3859
      %3872 = vmatprep.subr.bf16.mxu0 0
      %3873 = vmatpush1.bf16.xpose.msra.mxu0 %v3862
      %3874 = vmatprep.subr.bf16.mxu0 0
      %3875 = vmatpush1.bf16.xpose.msra.mxu0 %v3865
      %3876 = vmatprep.subr.bf16.mxu0 0
      %3877 = vmatpush1.bf16.xpose.msra.mxu0 %v3868
      %3878 = vmatprep.subr.bf16.mxu0 0
      %3879 = vmatpush1.bf16.xpose.msra.mxu0 0
      %3880 = vmatprep.subr.bf16.mxu0 0
      %3881 = vmatpush1.bf16.xpose.msra.mxu0 0
      %3882 = vmatprep.subr.bf16.mxu0 0
      %3883 = vmatpush1.bf16.xpose.msra.mxu0 0
      %3884 = vmatprep.subr.bf16.mxu0 0
      %3885 = vmatpush1.bf16.xpose.msra.mxu0 0
      %3886 = vmatprep.subr.bf16.mxu0 0
      %3887 = vmatpush1.bf16.xpose.msra.mxu0 0
      %3888 = vmatprep.subr.bf16.mxu0 0
      %3889 = vmatpush1.bf16.xpose.msra.mxu0 0
      %3890 = vmatprep.subr.bf16.mxu0 0
      %3891 = vmatpush1.bf16.xpose.msra.mxu0 0
      %3892 = vmatprep.subr.bf16.mxu0 0
      %3893 = vmatpush1.bf16.xpose.msra.mxu0 0
      %3894 = vmatprep.subr.bf16.mxu0 0
      %3895 = vmatpush1.bf16.xpose.msra.mxu0 0
      %3896 = vmatprep.subr.bf16.mxu0 0
      %3897 = vmatpush1.bf16.xpose.msra.mxu0 0
      %3898 = vmatprep.subr.bf16.mxu0 0
      %3899 = vmatpush1.bf16.xpose.msra.mxu0 0
      %3900 = vmatprep.subr.bf16.mxu0 0
      %3901 = vmatpush1.bf16.xpose.msra.mxu0 0
      %3902 = vmatprep.mubr.bf16.mxu0 0
      %3903 = vmatmul.mubr.bf16.gmra.mrb[0].mxu0 %v3847
      %v3904 = vpop.f32.mrb[0].mxu0
      %v3905 = vadd.f32 0.0, %v3904
      %v3906 = vpop.f32.mrb[0].mxu0
      %v3907 = vpop.f32.mrb[0].mxu0
      %v3908 = vadd.f32 0.0, %v3907
      %v3909 = vpop.f32.mrb[0].mxu0
      %3910 = vmatprep.mubr.bf16.mxu0 0
      %3911 = vmatmul.mubr.bf16.gmra.mrb[0].mxu0 %v3850
      %v3912 = vpop.f32.mrb[0].mxu0
      %v3913 = vadd.f32 0.0, %v3912
      %v3914 = vpop.f32.mrb[0].mxu0
      %v3915 = vpop.f32.mrb[0].mxu0
      %v3916 = vadd.f32 0.0, %v3915
      %v3917 = vpop.f32.mrb[0].mxu0
      %3918 = vmatprep.mubr.bf16.mxu0 0
      %3919 = vmatmul.mubr.bf16.gmra.mrb[0].mxu0 %v3853
      %v3920 = vpop.f32.mrb[0].mxu0
      %v3921 = vadd.f32 0.0, %v3920
      %v3922 = vpop.f32.mrb[0].mxu0
      %v3923 = vpop.f32.mrb[0].mxu0
      %v3924 = vadd.f32 0.0, %v3923
      %v3925 = vpop.f32.mrb[0].mxu0
      %3926 = vmatprep.mubr.bf16.mxu0 0
      %3927 = vmatmul.mubr.bf16.gmra.mrb[0].mxu0 %v3856
      %v3928 = vpop.f32.mrb[0].mxu0
      %v3929 = vadd.f32 0.0, %v3928
      %v3930 = vpop.f32.mrb[0].mxu0
      %v3931 = vpop.f32.mrb[0].mxu0
      %v3932 = vadd.f32 0.0, %v3931
      %v3933 = vpop.f32.mrb[0].mxu0
      %3934 = vdwg.mxu0
      %v3935 = vsel %vm610, %v3282, -inf
      %3936 = vmax.xlane.f32.xlu0 %v3935
      %v3937 = vpop.xlane.xlu0 %3936
      %v3938 = vsel %vm610, %v3285, -inf
      %3939 = vmax.xlane.f32.xlu0 %v3938
      %v3940 = vpop.xlane.xlu0 %3939
      %v3941 = vsel %vm610, %v3290, -inf
      %3942 = vmax.xlane.f32.xlu0 %v3941
      %v3943 = vpop.xlane.xlu0 %3942
      %v3944 = vsel %vm610, %v3293, -inf
      %3945 = vmax.xlane.f32.xlu0 %v3944
      %v3946 = vpop.xlane.xlu0 %3945
      %v3947 = vsel %vm610, %v3298, -inf
      %3948 = vmax.xlane.f32.xlu0 %v3947
      %v3949 = vpop.xlane.xlu0 %3948
      %v3950 = vsel %vm610, %v3301, -inf
      %3951 = vmax.xlane.f32.xlu0 %v3950
      %v3952 = vpop.xlane.xlu0 %3951
      %v3953 = vsel %vm610, %v3306, -inf
      %3954 = vmax.xlane.f32.xlu0 %v3953
      %v3955 = vpop.xlane.xlu0 %3954
      %v3956 = vsel %vm610, %v3309, -inf
      %3957 = vmax.xlane.f32.xlu0 %v3956
      %v3958 = vpop.xlane.xlu0 %3957
      %v3959 = vsel %vm610, %v3371, -inf
      %3960 = vmax.xlane.f32.xlu0 %v3959
      %v3961 = vpop.xlane.xlu0 %3960
      %v3962 = vsel %vm610, %v3374, -inf
      %3963 = vmax.xlane.f32.xlu0 %v3962
      %v3964 = vpop.xlane.xlu0 %3963
      %v3965 = vsel %vm610, %v3379, -inf
      %3966 = vmax.xlane.f32.xlu0 %v3965
      %v3967 = vpop.xlane.xlu0 %3966
      %v3968 = vsel %vm610, %v3382, -inf
      %3969 = vmax.xlane.f32.xlu0 %v3968
      %v3970 = vpop.xlane.xlu0 %3969
      %v3971 = vsel %vm610, %v3387, -inf
      %3972 = vmax.xlane.f32.xlu0 %v3971
      %v3973 = vpop.xlane.xlu0 %3972
      %v3974 = vsel %vm610, %v3390, -inf
      %3975 = vmax.xlane.f32.xlu0 %v3974
      %v3976 = vpop.xlane.xlu0 %3975
      %v3977 = vsel %vm610, %v3395, -inf
      %3978 = vmax.xlane.f32.xlu0 %v3977
      %v3979 = vpop.xlane.xlu0 %3978
      %v3980 = vsel %vm610, %v3398, -inf
      %3981 = vmax.xlane.f32.xlu0 %v3980
      %v3982 = vpop.xlane.xlu0 %3981
      %v3983 = vsel %vm610, %v3460, -inf
      %3984 = vmax.xlane.f32.xlu0 %v3983
      %v3985 = vpop.xlane.xlu0 %3984
      %v3986 = vsel %vm610, %v3463, -inf
      %3987 = vmax.xlane.f32.xlu0 %v3986
      %v3988 = vpop.xlane.xlu0 %3987
      %v3989 = vsel %vm610, %v3468, -inf
      %3990 = vmax.xlane.f32.xlu0 %v3989
      %v3991 = vpop.xlane.xlu0 %3990
      %v3992 = vsel %vm610, %v3471, -inf
      %3993 = vmax.xlane.f32.xlu0 %v3992
      %v3994 = vpop.xlane.xlu0 %3993
      %v3995 = vsel %vm610, %v3476, -inf
      %3996 = vmax.xlane.f32.xlu0 %v3995
      %v3997 = vpop.xlane.xlu0 %3996
      %v3998 = vsel %vm610, %v3479, -inf
      %3999 = vmax.xlane.f32.xlu0 %v3998
      %v4000 = vpop.xlane.xlu0 %3999
      %v4001 = vsel %vm610, %v3484, -inf
      %4002 = vmax.xlane.f32.xlu0 %v4001
      %v4003 = vpop.xlane.xlu0 %4002
      %v4004 = vsel %vm610, %v3487, -inf
      %4005 = vmax.xlane.f32.xlu0 %v4004
      %v4006 = vpop.xlane.xlu0 %4005
      %v4007 = vsel %vm610, %v3549, -inf
      %4008 = vmax.xlane.f32.xlu0 %v4007
      %v4009 = vpop.xlane.xlu0 %4008
      %v4010 = vsel %vm610, %v3552, -inf
      %4011 = vmax.xlane.f32.xlu0 %v4010
      %v4012 = vpop.xlane.xlu0 %4011
      %v4013 = vsel %vm610, %v3557, -inf
      %4014 = vmax.xlane.f32.xlu0 %v4013
      %v4015 = vpop.xlane.xlu0 %4014
      %v4016 = vsel %vm610, %v3560, -inf
      %4017 = vmax.xlane.f32.xlu0 %v4016
      %v4018 = vpop.xlane.xlu0 %4017
      %v4019 = vsel %vm610, %v3565, -inf
      %4020 = vmax.xlane.f32.xlu0 %v4019
      %v4021 = vpop.xlane.xlu0 %4020
      %v4022 = vsel %vm610, %v3568, -inf
      %4023 = vmax.xlane.f32.xlu0 %v4022
      %v4024 = vpop.xlane.xlu0 %4023
      %v4025 = vsel %vm610, %v3573, -inf
      %4026 = vmax.xlane.f32.xlu0 %v4025
      %v4027 = vpop.xlane.xlu0 %4026
      %v4028 = vsel %vm610, %v3576, -inf
      %4029 = vmax.xlane.f32.xlu0 %v4028
      %v4030 = vpop.xlane.xlu0 %4029
      %v4031 = vsel %vm610, %v3638, -inf
      %4032 = vmax.xlane.f32.xlu0 %v4031
      %v4033 = vpop.xlane.xlu0 %4032
      %v4034 = vsel %vm610, %v3641, -inf
      %4035 = vmax.xlane.f32.xlu0 %v4034
      %v4036 = vpop.xlane.xlu0 %4035
      %v4037 = vsel %vm610, %v3646, -inf
      %4038 = vmax.xlane.f32.xlu0 %v4037
      %v4039 = vpop.xlane.xlu0 %4038
      %v4040 = vsel %vm610, %v3649, -inf
      %4041 = vmax.xlane.f32.xlu0 %v4040
      %v4042 = vpop.xlane.xlu0 %4041
      %v4043 = vsel %vm610, %v3654, -inf
      %4044 = vmax.xlane.f32.xlu0 %v4043
      %v4045 = vpop.xlane.xlu0 %4044
      %v4046 = vsel %vm610, %v3657, -inf
      %4047 = vmax.xlane.f32.xlu0 %v4046
      %v4048 = vpop.xlane.xlu0 %4047
      %v4049 = vsel %vm610, %v3662, -inf
      %4050 = vmax.xlane.f32.xlu0 %v4049
      %v4051 = vpop.xlane.xlu0 %4050
      %v4052 = vsel %vm610, %v3665, -inf
      %4053 = vmax.xlane.f32.xlu0 %v4052
      %v4054 = vpop.xlane.xlu0 %4053
      %v4055 = vsel %vm610, %v3727, -inf
      %4056 = vmax.xlane.f32.xlu0 %v4055
      %v4057 = vpop.xlane.xlu0 %4056
      %v4058 = vsel %vm610, %v3730, -inf
      %4059 = vmax.xlane.f32.xlu0 %v4058
      %v4060 = vpop.xlane.xlu0 %4059
      %v4061 = vsel %vm610, %v3735, -inf
      %4062 = vmax.xlane.f32.xlu0 %v4061
      %v4063 = vpop.xlane.xlu0 %4062
      %v4064 = vsel %vm610, %v3738, -inf
      %4065 = vmax.xlane.f32.xlu0 %v4064
      %v4066 = vpop.xlane.xlu0 %4065
      %v4067 = vsel %vm610, %v3743, -inf
      %4068 = vmax.xlane.f32.xlu0 %v4067
      %v4069 = vpop.xlane.xlu0 %4068
      %v4070 = vsel %vm610, %v3746, -inf
      %4071 = vmax.xlane.f32.xlu0 %v4070
      %v4072 = vpop.xlane.xlu0 %4071
      %v4073 = vsel %vm610, %v3751, -inf
      %4074 = vmax.xlane.f32.xlu0 %v4073
      %v4075 = vpop.xlane.xlu0 %4074
      %v4076 = vsel %vm610, %v3754, -inf
      %4077 = vmax.xlane.f32.xlu0 %v4076
      %v4078 = vpop.xlane.xlu0 %4077
      %v4079 = vsel %vm610, %v3816, -inf
      %4080 = vmax.xlane.f32.xlu0 %v4079
      %v4081 = vpop.xlane.xlu0 %4080
      %v4082 = vsel %vm610, %v3819, -inf
      %4083 = vmax.xlane.f32.xlu0 %v4082
      %v4084 = vpop.xlane.xlu0 %4083
      %v4085 = vsel %vm610, %v3824, -inf
      %4086 = vmax.xlane.f32.xlu0 %v4085
      %v4087 = vpop.xlane.xlu0 %4086
      %v4088 = vsel %vm610, %v3827, -inf
      %4089 = vmax.xlane.f32.xlu0 %v4088
      %v4090 = vpop.xlane.xlu0 %4089
      %v4091 = vsel %vm610, %v3832, -inf
      %4092 = vmax.xlane.f32.xlu0 %v4091
      %v4093 = vpop.xlane.xlu0 %4092
      %v4094 = vsel %vm610, %v3835, -inf
      %4095 = vmax.xlane.f32.xlu0 %v4094
      %v4096 = vpop.xlane.xlu0 %4095
      %v4097 = vsel %vm610, %v3840, -inf
      %4098 = vmax.xlane.f32.xlu0 %v4097
      %v4099 = vpop.xlane.xlu0 %4098
      %v4100 = vsel %vm610, %v3843, -inf
      %4101 = vmax.xlane.f32.xlu0 %v4100
      %v4102 = vpop.xlane.xlu0 %4101
      %v4103 = vsel %vm610, %v3905, -inf
      %4104 = vmax.xlane.f32.xlu0 %v4103
      %v4105 = vpop.xlane.xlu0 %4104
      %v4106 = vsel %vm610, %v3908, -inf
      %4107 = vmax.xlane.f32.xlu0 %v4106
      %v4108 = vpop.xlane.xlu0 %4107
      %v4109 = vsel %vm610, %v3913, -inf
      %4110 = vmax.xlane.f32.xlu0 %v4109
      %v4111 = vpop.xlane.xlu0 %4110
      %v4112 = vsel %vm610, %v3916, -inf
      %4113 = vmax.xlane.f32.xlu0 %v4112
      %v4114 = vpop.xlane.xlu0 %4113
      %v4115 = vsel %vm610, %v3921, -inf
      %4116 = vmax.xlane.f32.xlu0 %v4115
      %v4117 = vpop.xlane.xlu0 %4116
      %v4118 = vsel %vm610, %v3924, -inf
      %4119 = vmax.xlane.f32.xlu0 %v4118
      %v4120 = vpop.xlane.xlu0 %4119
      %v4121 = vsel %vm610, %v3929, -inf
      %4122 = vmax.xlane.f32.xlu0 %v4121
      %v4123 = vpop.xlane.xlu0 %4122
      %v4124 = vsel %vm610, %v3932, -inf
      %4125 = vmax.xlane.f32.xlu0 %v4124
      %v4126 = vpop.xlane.xlu0 %4125
      %v4127 = vsub.f32 %v3282, %v3937
      %v4128 = vsub.f32 %v3285, %v3940
      %v4129 = vsub.f32 %v3290, %v3943
      %v4130 = vsub.f32 %v3293, %v3946
      %v4131 = vsub.f32 %v3298, %v3949
      %v4132 = vsub.f32 %v3301, %v3952
      %v4133 = vsub.f32 %v3306, %v3955
      %v4134 = vsub.f32 %v3309, %v3958
      %v4135 = vsub.f32 %v3371, %v3961
      %v4136 = vsub.f32 %v3374, %v3964
      %v4137 = vsub.f32 %v3379, %v3967
      %v4138 = vsub.f32 %v3382, %v3970
      %v4139 = vsub.f32 %v3387, %v3973
      %v4140 = vsub.f32 %v3390, %v3976
      %v4141 = vsub.f32 %v3395, %v3979
      %v4142 = vsub.f32 %v3398, %v3982
      %v4143 = vsub.f32 %v3460, %v3985
      %v4144 = vsub.f32 %v3463, %v3988
      %v4145 = vsub.f32 %v3468, %v3991
      %v4146 = vsub.f32 %v3471, %v3994
      %v4147 = vsub.f32 %v3476, %v3997
      %v4148 = vsub.f32 %v3479, %v4000
      %v4149 = vsub.f32 %v3484, %v4003
      %v4150 = vsub.f32 %v3487, %v4006
      %v4151 = vsub.f32 %v3549, %v4009
      %v4152 = vsub.f32 %v3552, %v4012
      %v4153 = vsub.f32 %v3557, %v4015
      %v4154 = vsub.f32 %v3560, %v4018
      %v4155 = vsub.f32 %v3565, %v4021
      %v4156 = vsub.f32 %v3568, %v4024
      %v4157 = vsub.f32 %v3573, %v4027
      %v4158 = vsub.f32 %v3576, %v4030
      %v4159 = vsub.f32 %v3638, %v4033
      %v4160 = vsub.f32 %v3641, %v4036
      %v4161 = vsub.f32 %v3646, %v4039
      %v4162 = vsub.f32 %v3649, %v4042
      %v4163 = vsub.f32 %v3654, %v4045
      %v4164 = vsub.f32 %v3657, %v4048
      %v4165 = vsub.f32 %v3662, %v4051
      %v4166 = vsub.f32 %v3665, %v4054
      %v4167 = vsub.f32 %v3727, %v4057
      %v4168 = vsub.f32 %v3730, %v4060
      %v4169 = vsub.f32 %v3735, %v4063
      %v4170 = vsub.f32 %v3738, %v4066
      %v4171 = vsub.f32 %v3743, %v4069
      %v4172 = vsub.f32 %v3746, %v4072
      %v4173 = vsub.f32 %v3751, %v4075
      %v4174 = vsub.f32 %v3754, %v4078
      %v4175 = vsub.f32 %v3816, %v4081
      %v4176 = vsub.f32 %v3819, %v4084
      %v4177 = vsub.f32 %v3824, %v4087
      %v4178 = vsub.f32 %v3827, %v4090
      %v4179 = vsub.f32 %v3832, %v4093
      %v4180 = vsub.f32 %v3835, %v4096
      %v4181 = vsub.f32 %v3840, %v4099
      %v4182 = vsub.f32 %v3843, %v4102
      %v4183 = vsub.f32 %v3905, %v4105
      %v4184 = vsub.f32 %v3908, %v4108
      %v4185 = vsub.f32 %v3913, %v4111
      %v4186 = vsub.f32 %v3916, %v4114
      %v4187 = vsub.f32 %v3921, %v4117
      %v4188 = vsub.f32 %v3924, %v4120
      %v4189 = vsub.f32 %v3929, %v4123
      %v4190 = vsub.f32 %v3932, %v4126
      %v4191 = vmul.f32 %v4127, 1.442695
      %v4192 = vpow.pop %v4191
      %v4193 = vmul.f32 %v4128, 1.442695
      %v4194 = vpow.pop %v4193
      %v4195 = vmul.f32 %v4129, 1.442695
      %v4196 = vpow.pop %v4195
      %v4197 = vmul.f32 %v4130, 1.442695
      %v4198 = vpow.pop %v4197
      %v4199 = vmul.f32 %v4131, 1.442695
      %v4200 = vpow.pop %v4199
      %v4201 = vmul.f32 %v4132, 1.442695
      %v4202 = vpow.pop %v4201
      %v4203 = vmul.f32 %v4133, 1.442695
      %v4204 = vpow.pop %v4203
      %v4205 = vmul.f32 %v4134, 1.442695
      %v4206 = vpow.pop %v4205
      %v4207 = vmul.f32 %v4135, 1.442695
      %v4208 = vpow.pop %v4207
      %v4209 = vmul.f32 %v4136, 1.442695
      %v4210 = vpow.pop %v4209
      %v4211 = vmul.f32 %v4137, 1.442695
      %v4212 = vpow.pop %v4211
      %v4213 = vmul.f32 %v4138, 1.442695
      %v4214 = vpow.pop %v4213
      %v4215 = vmul.f32 %v4139, 1.442695
      %v4216 = vpow.pop %v4215
      %v4217 = vmul.f32 %v4140, 1.442695
      %v4218 = vpow.pop %v4217
      %v4219 = vmul.f32 %v4141, 1.442695
      %v4220 = vpow.pop %v4219
      %v4221 = vmul.f32 %v4142, 1.442695
      %v4222 = vpow.pop %v4221
      %v4223 = vmul.f32 %v4143, 1.442695
      %v4224 = vpow.pop %v4223
      %v4225 = vmul.f32 %v4144, 1.442695
      %v4226 = vpow.pop %v4225
      %v4227 = vmul.f32 %v4145, 1.442695
      %v4228 = vpow.pop %v4227
      %v4229 = vmul.f32 %v4146, 1.442695
      %v4230 = vpow.pop %v4229
      %v4231 = vmul.f32 %v4147, 1.442695
      %v4232 = vpow.pop %v4231
      %v4233 = vmul.f32 %v4148, 1.442695
      %v4234 = vpow.pop %v4233
      %v4235 = vmul.f32 %v4149, 1.442695
      %v4236 = vpow.pop %v4235
      %v4237 = vmul.f32 %v4150, 1.442695
      %v4238 = vpow.pop %v4237
      %v4239 = vmul.f32 %v4151, 1.442695
      %v4240 = vpow.pop %v4239
      %v4241 = vmul.f32 %v4152, 1.442695
      %v4242 = vpow.pop %v4241
      %v4243 = vmul.f32 %v4153, 1.442695
      %v4244 = vpow.pop %v4243
      %v4245 = vmul.f32 %v4154, 1.442695
      %v4246 = vpow.pop %v4245
      %v4247 = vmul.f32 %v4155, 1.442695
      %v4248 = vpow.pop %v4247
      %v4249 = vmul.f32 %v4156, 1.442695
      %v4250 = vpow.pop %v4249
      %v4251 = vmul.f32 %v4157, 1.442695
      %v4252 = vpow.pop %v4251
      %v4253 = vmul.f32 %v4158, 1.442695
      %v4254 = vpow.pop %v4253
      %v4255 = vmul.f32 %v4159, 1.442695
      %v4256 = vpow.pop %v4255
      %v4257 = vmul.f32 %v4160, 1.442695
      %v4258 = vpow.pop %v4257
      %v4259 = vmul.f32 %v4161, 1.442695
      %v4260 = vpow.pop %v4259
      %v4261 = vmul.f32 %v4162, 1.442695
      %v4262 = vpow.pop %v4261
      %v4263 = vmul.f32 %v4163, 1.442695
      %v4264 = vpow.pop %v4263
      %v4265 = vmul.f32 %v4164, 1.442695
      %v4266 = vpow.pop %v4265
      %v4267 = vmul.f32 %v4165, 1.442695
      %v4268 = vpow.pop %v4267
      %v4269 = vmul.f32 %v4166, 1.442695
      %v4270 = vpow.pop %v4269
      %v4271 = vmul.f32 %v4167, 1.442695
      %v4272 = vpow.pop %v4271
      %v4273 = vmul.f32 %v4168, 1.442695
      %v4274 = vpow.pop %v4273
      %v4275 = vmul.f32 %v4169, 1.442695
      %v4276 = vpow.pop %v4275
      %v4277 = vmul.f32 %v4170, 1.442695
      %v4278 = vpow.pop %v4277
      %v4279 = vmul.f32 %v4171, 1.442695
      %v4280 = vpow.pop %v4279
      %v4281 = vmul.f32 %v4172, 1.442695
      %v4282 = vpow.pop %v4281
      %v4283 = vmul.f32 %v4173, 1.442695
      %v4284 = vpow.pop %v4283
      %v4285 = vmul.f32 %v4174, 1.442695
      %v4286 = vpow.pop %v4285
      %v4287 = vmul.f32 %v4175, 1.442695
      %v4288 = vpow.pop %v4287
      %v4289 = vmul.f32 %v4176, 1.442695
      %v4290 = vpow.pop %v4289
      %v4291 = vmul.f32 %v4177, 1.442695
      %v4292 = vpow.pop %v4291
      %v4293 = vmul.f32 %v4178, 1.442695
      %v4294 = vpow.pop %v4293
      %v4295 = vmul.f32 %v4179, 1.442695
      %v4296 = vpow.pop %v4295
      %v4297 = vmul.f32 %v4180, 1.442695
      %v4298 = vpow.pop %v4297
      %v4299 = vmul.f32 %v4181, 1.442695
      %v4300 = vpow.pop %v4299
      %v4301 = vmul.f32 %v4182, 1.442695
      %v4302 = vpow.pop %v4301
      %v4303 = vmul.f32 %v4183, 1.442695
      %v4304 = vpow.pop %v4303
      %v4305 = vmul.f32 %v4184, 1.442695
      %v4306 = vpow.pop %v4305
      %v4307 = vmul.f32 %v4185, 1.442695
      %v4308 = vpow.pop %v4307
      %v4309 = vmul.f32 %v4186, 1.442695
      %v4310 = vpow.pop %v4309
      %v4311 = vmul.f32 %v4187, 1.442695
      %v4312 = vpow.pop %v4311
      %v4313 = vmul.f32 %v4188, 1.442695
      %v4314 = vpow.pop %v4313
      %v4315 = vmul.f32 %v4189, 1.442695
      %v4316 = vpow.pop %v4315
      %v4317 = vmul.f32 %v4190, 1.442695
      %v4318 = vpow.pop %v4317
      %v4319 = vsel %vm610, %v4192, 0.0
      %4320 = vadd.xlane.f32.xlu0 %v4319
      %v4321 = vpop.xlane.xlu0 %4320
      %v4322 = vsel %vm610, %v4194, 0.0
      %4323 = vadd.xlane.f32.xlu0 %v4322
      %v4324 = vpop.xlane.xlu0 %4323
      %v4325 = vsel %vm610, %v4196, 0.0
      %4326 = vadd.xlane.f32.xlu0 %v4325
      %v4327 = vpop.xlane.xlu0 %4326
      %v4328 = vsel %vm610, %v4198, 0.0
      %4329 = vadd.xlane.f32.xlu0 %v4328
      %v4330 = vpop.xlane.xlu0 %4329
      %v4331 = vsel %vm610, %v4200, 0.0
      %4332 = vadd.xlane.f32.xlu0 %v4331
      %v4333 = vpop.xlane.xlu0 %4332
      %v4334 = vsel %vm610, %v4202, 0.0
      %4335 = vadd.xlane.f32.xlu0 %v4334
      %v4336 = vpop.xlane.xlu0 %4335
      %v4337 = vsel %vm610, %v4204, 0.0
      %4338 = vadd.xlane.f32.xlu0 %v4337
      %v4339 = vpop.xlane.xlu0 %4338
      %v4340 = vsel %vm610, %v4206, 0.0
      %4341 = vadd.xlane.f32.xlu0 %v4340
      %v4342 = vpop.xlane.xlu0 %4341
      %v4343 = vsel %vm610, %v4208, 0.0
      %4344 = vadd.xlane.f32.xlu0 %v4343
      %v4345 = vpop.xlane.xlu0 %4344
      %v4346 = vsel %vm610, %v4210, 0.0
      %4347 = vadd.xlane.f32.xlu0 %v4346
      %v4348 = vpop.xlane.xlu0 %4347
      %v4349 = vsel %vm610, %v4212, 0.0
      %4350 = vadd.xlane.f32.xlu0 %v4349
      %v4351 = vpop.xlane.xlu0 %4350
      %v4352 = vsel %vm610, %v4214, 0.0
      %4353 = vadd.xlane.f32.xlu0 %v4352
      %v4354 = vpop.xlane.xlu0 %4353
      %v4355 = vsel %vm610, %v4216, 0.0
      %4356 = vadd.xlane.f32.xlu0 %v4355
      %v4357 = vpop.xlane.xlu0 %4356
      %v4358 = vsel %vm610, %v4218, 0.0
      %4359 = vadd.xlane.f32.xlu0 %v4358
      %v4360 = vpop.xlane.xlu0 %4359
      %v4361 = vsel %vm610, %v4220, 0.0
      %4362 = vadd.xlane.f32.xlu0 %v4361
      %v4363 = vpop.xlane.xlu0 %4362
      %v4364 = vsel %vm610, %v4222, 0.0
      %4365 = vadd.xlane.f32.xlu0 %v4364
      %v4366 = vpop.xlane.xlu0 %4365
      %v4367 = vsel %vm610, %v4224, 0.0
      %4368 = vadd.xlane.f32.xlu0 %v4367
      %v4369 = vpop.xlane.xlu0 %4368
      %v4370 = vsel %vm610, %v4226, 0.0
      %4371 = vadd.xlane.f32.xlu0 %v4370
      %v4372 = vpop.xlane.xlu0 %4371
      %v4373 = vsel %vm610, %v4228, 0.0
      %4374 = vadd.xlane.f32.xlu0 %v4373
      %v4375 = vpop.xlane.xlu0 %4374
      %v4376 = vsel %vm610, %v4230, 0.0
      %4377 = vadd.xlane.f32.xlu0 %v4376
      %v4378 = vpop.xlane.xlu0 %4377
      %v4379 = vsel %vm610, %v4232, 0.0
      %4380 = vadd.xlane.f32.xlu0 %v4379
      %v4381 = vpop.xlane.xlu0 %4380
      %v4382 = vsel %vm610, %v4234, 0.0
      %4383 = vadd.xlane.f32.xlu0 %v4382
      %v4384 = vpop.xlane.xlu0 %4383
      %v4385 = vsel %vm610, %v4236, 0.0
      %4386 = vadd.xlane.f32.xlu0 %v4385
      %v4387 = vpop.xlane.xlu0 %4386
      %v4388 = vsel %vm610, %v4238, 0.0
      %4389 = vadd.xlane.f32.xlu0 %v4388
      %v4390 = vpop.xlane.xlu0 %4389
      %v4391 = vsel %vm610, %v4240, 0.0
      %4392 = vadd.xlane.f32.xlu0 %v4391
      %v4393 = vpop.xlane.xlu0 %4392
      %v4394 = vsel %vm610, %v4242, 0.0
      %4395 = vadd.xlane.f32.xlu0 %v4394
      %v4396 = vpop.xlane.xlu0 %4395
      %v4397 = vsel %vm610, %v4244, 0.0
      %4398 = vadd.xlane.f32.xlu0 %v4397
      %v4399 = vpop.xlane.xlu0 %4398
      %v4400 = vsel %vm610, %v4246, 0.0
      %4401 = vadd.xlane.f32.xlu0 %v4400
      %v4402 = vpop.xlane.xlu0 %4401
      %v4403 = vsel %vm610, %v4248, 0.0
      %4404 = vadd.xlane.f32.xlu0 %v4403
      %v4405 = vpop.xlane.xlu0 %4404
      %v4406 = vsel %vm610, %v4250, 0.0
      %4407 = vadd.xlane.f32.xlu0 %v4406
      %v4408 = vpop.xlane.xlu0 %4407
      %v4409 = vsel %vm610, %v4252, 0.0
      %4410 = vadd.xlane.f32.xlu0 %v4409
      %v4411 = vpop.xlane.xlu0 %4410
      %v4412 = vsel %vm610, %v4254, 0.0
      %4413 = vadd.xlane.f32.xlu0 %v4412
      %v4414 = vpop.xlane.xlu0 %4413
      %v4415 = vsel %vm610, %v4256, 0.0
      %4416 = vadd.xlane.f32.xlu0 %v4415
      %v4417 = vpop.xlane.xlu0 %4416
      %v4418 = vsel %vm610, %v4258, 0.0
      %4419 = vadd.xlane.f32.xlu0 %v4418
      %v4420 = vpop.xlane.xlu0 %4419
      %v4421 = vsel %vm610, %v4260, 0.0
      %4422 = vadd.xlane.f32.xlu0 %v4421
      %v4423 = vpop.xlane.xlu0 %4422
      %v4424 = vsel %vm610, %v4262, 0.0
      %4425 = vadd.xlane.f32.xlu0 %v4424
      %v4426 = vpop.xlane.xlu0 %4425
      %v4427 = vsel %vm610, %v4264, 0.0
      %4428 = vadd.xlane.f32.xlu0 %v4427
      %v4429 = vpop.xlane.xlu0 %4428
      %v4430 = vsel %vm610, %v4266, 0.0
      %4431 = vadd.xlane.f32.xlu0 %v4430
      %v4432 = vpop.xlane.xlu0 %4431
      %v4433 = vsel %vm610, %v4268, 0.0
      %4434 = vadd.xlane.f32.xlu0 %v4433
      %v4435 = vpop.xlane.xlu0 %4434
      %v4436 = vsel %vm610, %v4270, 0.0
      %4437 = vadd.xlane.f32.xlu0 %v4436
      %v4438 = vpop.xlane.xlu0 %4437
      %v4439 = vsel %vm610, %v4272, 0.0
      %4440 = vadd.xlane.f32.xlu0 %v4439
      %v4441 = vpop.xlane.xlu0 %4440
      %v4442 = vsel %vm610, %v4274, 0.0
      %4443 = vadd.xlane.f32.xlu0 %v4442
      %v4444 = vpop.xlane.xlu0 %4443
      %v4445 = vsel %vm610, %v4276, 0.0
      %4446 = vadd.xlane.f32.xlu0 %v4445
      %v4447 = vpop.xlane.xlu0 %4446
      %v4448 = vsel %vm610, %v4278, 0.0
      %4449 = vadd.xlane.f32.xlu0 %v4448
      %v4450 = vpop.xlane.xlu0 %4449
      %v4451 = vsel %vm610, %v4280, 0.0
      %4452 = vadd.xlane.f32.xlu0 %v4451
      %v4453 = vpop.xlane.xlu0 %4452
      %v4454 = vsel %vm610, %v4282, 0.0
      %4455 = vadd.xlane.f32.xlu0 %v4454
      %v4456 = vpop.xlane.xlu0 %4455
      %v4457 = vsel %vm610, %v4284, 0.0
      %4458 = vadd.xlane.f32.xlu0 %v4457
      %v4459 = vpop.xlane.xlu0 %4458
      %v4460 = vsel %vm610, %v4286, 0.0
      %4461 = vadd.xlane.f32.xlu0 %v4460
      %v4462 = vpop.xlane.xlu0 %4461
      %v4463 = vsel %vm610, %v4288, 0.0
      %4464 = vadd.xlane.f32.xlu0 %v4463
      %v4465 = vpop.xlane.xlu0 %4464
      %v4466 = vsel %vm610, %v4290, 0.0
      %4467 = vadd.xlane.f32.xlu0 %v4466
      %v4468 = vpop.xlane.xlu0 %4467
      %v4469 = vsel %vm610, %v4292, 0.0
      %4470 = vadd.xlane.f32.xlu0 %v4469
      %v4471 = vpop.xlane.xlu0 %4470
      %v4472 = vsel %vm610, %v4294, 0.0
      %4473 = vadd.xlane.f32.xlu0 %v4472
      %v4474 = vpop.xlane.xlu0 %4473
      %v4475 = vsel %vm610, %v4296, 0.0
      %4476 = vadd.xlane.f32.xlu0 %v4475
      %v4477 = vpop.xlane.xlu0 %4476
      %v4478 = vsel %vm610, %v4298, 0.0
      %4479 = vadd.xlane.f32.xlu0 %v4478
      %v4480 = vpop.xlane.xlu0 %4479
      %v4481 = vsel %vm610, %v4300, 0.0
      %4482 = vadd.xlane.f32.xlu0 %v4481
      %v4483 = vpop.xlane.xlu0 %4482
      %v4484 = vsel %vm610, %v4302, 0.0
      %4485 = vadd.xlane.f32.xlu0 %v4484
      %v4486 = vpop.xlane.xlu0 %4485
      %v4487 = vsel %vm610, %v4304, 0.0
      %4488 = vadd.xlane.f32.xlu0 %v4487
      %v4489 = vpop.xlane.xlu0 %4488
      %v4490 = vsel %vm610, %v4306, 0.0
      %4491 = vadd.xlane.f32.xlu0 %v4490
      %v4492 = vpop.xlane.xlu0 %4491
      %v4493 = vsel %vm610, %v4308, 0.0
      %4494 = vadd.xlane.f32.xlu0 %v4493
      %v4495 = vpop.xlane.xlu0 %4494
      %v4496 = vsel %vm610, %v4310, 0.0
      %4497 = vadd.xlane.f32.xlu0 %v4496
      %v4498 = vpop.xlane.xlu0 %4497
      %v4499 = vsel %vm610, %v4312, 0.0
      %4500 = vadd.xlane.f32.xlu0 %v4499
      %v4501 = vpop.xlane.xlu0 %4500
      %v4502 = vsel %vm610, %v4314, 0.0
      %4503 = vadd.xlane.f32.xlu0 %v4502
      %v4504 = vpop.xlane.xlu0 %4503
      %v4505 = vsel %vm610, %v4316, 0.0
      %4506 = vadd.xlane.f32.xlu0 %v4505
      %v4507 = vpop.xlane.xlu0 %4506
      %v4508 = vsel %vm610, %v4318, 0.0
      %4509 = vadd.xlane.f32.xlu0 %v4508
      %v4510 = vpop.xlane.xlu0 %4509
      %v4511 = vpack.c.bf16 %v4194, %v4192
      %v4512 = vpack.c.bf16 %v4198, %v4196
      %v4513 = vpack.c.bf16 %v4202, %v4200
      %v4514 = vpack.c.bf16 %v4206, %v4204
      %v4515 = vpack.c.bf16 %v4210, %v4208
      %v4516 = vpack.c.bf16 %v4214, %v4212
      %v4517 = vpack.c.bf16 %v4218, %v4216
      %v4518 = vpack.c.bf16 %v4222, %v4220
      %v4519 = vpack.c.bf16 %v4226, %v4224
      %v4520 = vpack.c.bf16 %v4230, %v4228
      %v4521 = vpack.c.bf16 %v4234, %v4232
      %v4522 = vpack.c.bf16 %v4238, %v4236
      %v4523 = vpack.c.bf16 %v4242, %v4240
      %v4524 = vpack.c.bf16 %v4246, %v4244
      %v4525 = vpack.c.bf16 %v4250, %v4248
      %v4526 = vpack.c.bf16 %v4254, %v4252
      %v4527 = vpack.c.bf16 %v4258, %v4256
      %v4528 = vpack.c.bf16 %v4262, %v4260
      %v4529 = vpack.c.bf16 %v4266, %v4264
      %v4530 = vpack.c.bf16 %v4270, %v4268
      %v4531 = vpack.c.bf16 %v4274, %v4272
      %v4532 = vpack.c.bf16 %v4278, %v4276
      %v4533 = vpack.c.bf16 %v4282, %v4280
      %v4534 = vpack.c.bf16 %v4286, %v4284
      %v4535 = vpack.c.bf16 %v4290, %v4288
      %v4536 = vpack.c.bf16 %v4294, %v4292
      %v4537 = vpack.c.bf16 %v4298, %v4296
      %v4538 = vpack.c.bf16 %v4302, %v4300
      %v4539 = vpack.c.bf16 %v4306, %v4304
      %v4540 = vpack.c.bf16 %v4310, %v4308
      %v4541 = vpack.c.bf16 %v4314, %v4312
      %v4542 = vpack.c.bf16 %v4318, %v4316
      %v4544 = vsel %vm610, %v4511, 0
      %v4547 = vsel %vm610, %v4512, 0
      %v4550 = vsel %vm610, %v4513, 0
      %v4553 = vsel %vm610, %v4514, 0
      %4555 = vmatprep.subr.bf16.mxu0 0
      %4556 = vmatpush1.bf16.msra.mxu0 %v3009
      %4557 = vmatprep.subr.bf16.mxu0 0
      %4558 = vmatpush1.bf16.msra.mxu0 %v3012
      %4559 = vmatprep.subr.bf16.mxu0 0
      %4560 = vmatpush1.bf16.msra.mxu0 %v3015
      %4561 = vmatprep.subr.bf16.mxu0 0
      %4562 = vmatpush1.bf16.msra.mxu0 %v3018
      %4563 = vmatprep.subr.bf16.mxu0 0
      %4564 = vmatpush1.bf16.msra.mxu0 0
      %4565 = vmatprep.subr.bf16.mxu0 0
      %4566 = vmatpush1.bf16.msra.mxu0 0
      %4567 = vmatprep.subr.bf16.mxu0 0
      %4568 = vmatpush1.bf16.msra.mxu0 0
      %4569 = vmatprep.subr.bf16.mxu0 0
      %4570 = vmatpush1.bf16.msra.mxu0 0
      %4571 = vmatprep.subr.bf16.mxu0 0
      %4572 = vmatpush1.bf16.msra.mxu0 0
      %4573 = vmatprep.subr.bf16.mxu0 0
      %4574 = vmatpush1.bf16.msra.mxu0 0
      %4575 = vmatprep.subr.bf16.mxu0 0
      %4576 = vmatpush1.bf16.msra.mxu0 0
      %4577 = vmatprep.subr.bf16.mxu0 0
      %4578 = vmatpush1.bf16.msra.mxu0 0
      %4579 = vmatprep.subr.bf16.mxu0 0
      %4580 = vmatpush1.bf16.msra.mxu0 0
      %4581 = vmatprep.subr.bf16.mxu0 0
      %4582 = vmatpush1.bf16.msra.mxu0 0
      %4583 = vmatprep.subr.bf16.mxu0 0
      %4584 = vmatpush1.bf16.msra.mxu0 0
      %4585 = vmatprep.subr.bf16.mxu0 0
      %4586 = vmatpush1.bf16.msra.mxu0 0
      %4587 = vmatprep.mubr.bf16.mxu0 0
      %4588 = vmatmul.mubr.bf16.gmra.mrb[0].mxu0 %v4544
      %v4589 = vpop.f32.mrb[0].mxu0
      %v4590 = vadd.f32 0.0, %v4589
      %v4591 = vpop.f32.mrb[0].mxu0
      %v4592 = vpop.f32.mrb[0].mxu0
      %v4593 = vadd.f32 0.0, %v4592
      %v4594 = vpop.f32.mrb[0].mxu0
      %4595 = vmatprep.mubr.bf16.mxu0 0
      %4596 = vmatmul.mubr.bf16.gmra.mrb[0].mxu0 %v4547
      %v4597 = vpop.f32.mrb[0].mxu0
      %v4598 = vadd.f32 0.0, %v4597
      %v4599 = vpop.f32.mrb[0].mxu0
      %v4600 = vpop.f32.mrb[0].mxu0
      %v4601 = vadd.f32 0.0, %v4600
      %v4602 = vpop.f32.mrb[0].mxu0
      %4603 = vmatprep.mubr.bf16.mxu0 0
      %4604 = vmatmul.mubr.bf16.gmra.mrb[0].mxu0 %v4550
      %v4605 = vpop.f32.mrb[0].mxu0
      %v4606 = vadd.f32 0.0, %v4605
      %v4607 = vpop.f32.mrb[0].mxu0
      %v4608 = vpop.f32.mrb[0].mxu0
      %v4609 = vadd.f32 0.0, %v4608
      %v4610 = vpop.f32.mrb[0].mxu0
      %4611 = vmatprep.mubr.bf16.mxu0 0
      %4612 = vmatmul.mubr.bf16.gmra.mrb[0].mxu0 %v4553
      %v4613 = vpop.f32.mrb[0].mxu0
      %v4614 = vadd.f32 0.0, %v4613
      %v4615 = vpop.f32.mrb[0].mxu0
      %v4616 = vpop.f32.mrb[0].mxu0
      %v4617 = vadd.f32 0.0, %v4616
      %v4618 = vpop.f32.mrb[0].mxu0
      %4619 = vdwg.mxu0
      %v4621 = vsel %vm610, %v4515, 0
      %v4624 = vsel %vm610, %v4516, 0
      %v4627 = vsel %vm610, %v4517, 0
      %v4630 = vsel %vm610, %v4518, 0
      %4632 = vmatprep.subr.bf16.mxu0 0
      %4633 = vmatpush1.bf16.msra.mxu0 %v3021
      %4634 = vmatprep.subr.bf16.mxu0 0
      %4635 = vmatpush1.bf16.msra.mxu0 %v3024
      %4636 = vmatprep.subr.bf16.mxu0 0
      %4637 = vmatpush1.bf16.msra.mxu0 %v3027
      %4638 = vmatprep.subr.bf16.mxu0 0
      %4639 = vmatpush1.bf16.msra.mxu0 %v3030
      %4640 = vmatprep.subr.bf16.mxu0 0
      %4641 = vmatpush1.bf16.msra.mxu0 0
      %4642 = vmatprep.subr.bf16.mxu0 0
      %4643 = vmatpush1.bf16.msra.mxu0 0
      %4644 = vmatprep.subr.bf16.mxu0 0
      %4645 = vmatpush1.bf16.msra.mxu0 0
      %4646 = vmatprep.subr.bf16.mxu0 0
      %4647 = vmatpush1.bf16.msra.mxu0 0
      %4648 = vmatprep.subr.bf16.mxu0 0
      %4649 = vmatpush1.bf16.msra.mxu0 0
      %4650 = vmatprep.subr.bf16.mxu0 0
      %4651 = vmatpush1.bf16.msra.mxu0 0
      %4652 = vmatprep.subr.bf16.mxu0 0
      %4653 = vmatpush1.bf16.msra.mxu0 0
      %4654 = vmatprep.subr.bf16.mxu0 0
      %4655 = vmatpush1.bf16.msra.mxu0 0
      %4656 = vmatprep.subr.bf16.mxu0 0
      %4657 = vmatpush1.bf16.msra.mxu0 0
      %4658 = vmatprep.subr.bf16.mxu0 0
      %4659 = vmatpush1.bf16.msra.mxu0 0
      %4660 = vmatprep.subr.bf16.mxu0 0
      %4661 = vmatpush1.bf16.msra.mxu0 0
      %4662 = vmatprep.subr.bf16.mxu0 0
      %4663 = vmatpush1.bf16.msra.mxu0 0
      %4664 = vmatprep.mubr.bf16.mxu0 0
      %4665 = vmatmul.mubr.bf16.gmra.mrb[0].mxu0 %v4621
      %v4666 = vpop.f32.mrb[0].mxu0
      %v4667 = vadd.f32 0.0, %v4666
      %v4668 = vpop.f32.mrb[0].mxu0
      %v4669 = vpop.f32.mrb[0].mxu0
      %v4670 = vadd.f32 0.0, %v4669
      %v4671 = vpop.f32.mrb[0].mxu0
      %4672 = vmatprep.mubr.bf16.mxu0 0
      %4673 = vmatmul.mubr.bf16.gmra.mrb[0].mxu0 %v4624
      %v4674 = vpop.f32.mrb[0].mxu0
      %v4675 = vadd.f32 0.0, %v4674
      %v4676 = vpop.f32.mrb[0].mxu0
      %v4677 = vpop.f32.mrb[0].mxu0
      %v4678 = vadd.f32 0.0, %v4677
      %v4679 = vpop.f32.mrb[0].mxu0
      %4680 = vmatprep.mubr.bf16.mxu0 0
      %4681 = vmatmul.mubr.bf16.gmra.mrb[0].mxu0 %v4627
      %v4682 = vpop.f32.mrb[0].mxu0
      %v4683 = vadd.f32 0.0, %v4682
      %v4684 = vpop.f32.mrb[0].mxu0
      %v4685 = vpop.f32.mrb[0].mxu0
      %v4686 = vadd.f32 0.0, %v4685
      %v4687 = vpop.f32.mrb[0].mxu0
      %4688 = vmatprep.mubr.bf16.mxu0 0
      %4689 = vmatmul.mubr.bf16.gmra.mrb[0].mxu0 %v4630
      %v4690 = vpop.f32.mrb[0].mxu0
      %v4691 = vadd.f32 0.0, %v4690
      %v4692 = vpop.f32.mrb[0].mxu0
      %v4693 = vpop.f32.mrb[0].mxu0
      %v4694 = vadd.f32 0.0, %v4693
      %v4695 = vpop.f32.mrb[0].mxu0
      %4696 = vdwg.mxu0
      %v4698 = vsel %vm610, %v4519, 0
      %v4701 = vsel %vm610, %v4520, 0
      %v4704 = vsel %vm610, %v4521, 0
      %v4707 = vsel %vm610, %v4522, 0
      %4709 = vmatprep.subr.bf16.mxu0 0
      %4710 = vmatpush1.bf16.msra.mxu0 %v3152
      %4711 = vmatprep.subr.bf16.mxu0 0
      %4712 = vmatpush1.bf16.msra.mxu0 %v3154
      %4713 = vmatprep.subr.bf16.mxu0 0
      %4714 = vmatpush1.bf16.msra.mxu0 %v3156
      %4715 = vmatprep.subr.bf16.mxu0 0
      %4716 = vmatpush1.bf16.msra.mxu0 %v3158
      %4717 = vmatprep.subr.bf16.mxu0 0
      %4718 = vmatpush1.bf16.msra.mxu0 0
      %4719 = vmatprep.subr.bf16.mxu0 0
      %4720 = vmatpush1.bf16.msra.mxu0 0
      %4721 = vmatprep.subr.bf16.mxu0 0
      %4722 = vmatpush1.bf16.msra.mxu0 0
      %4723 = vmatprep.subr.bf16.mxu0 0
      %4724 = vmatpush1.bf16.msra.mxu0 0
      %4725 = vmatprep.subr.bf16.mxu0 0
      %4726 = vmatpush1.bf16.msra.mxu0 0
      %4727 = vmatprep.subr.bf16.mxu0 0
      %4728 = vmatpush1.bf16.msra.mxu0 0
      %4729 = vmatprep.subr.bf16.mxu0 0
      %4730 = vmatpush1.bf16.msra.mxu0 0
      %4731 = vmatprep.subr.bf16.mxu0 0
      %4732 = vmatpush1.bf16.msra.mxu0 0
      %4733 = vmatprep.subr.bf16.mxu0 0
      %4734 = vmatpush1.bf16.msra.mxu0 0
      %4735 = vmatprep.subr.bf16.mxu0 0
      %4736 = vmatpush1.bf16.msra.mxu0 0
      %4737 = vmatprep.subr.bf16.mxu0 0
      %4738 = vmatpush1.bf16.msra.mxu0 0
      %4739 = vmatprep.subr.bf16.mxu0 0
      %4740 = vmatpush1.bf16.msra.mxu0 0
      %4741 = vmatprep.mubr.bf16.mxu0 0
      %4742 = vmatmul.mubr.bf16.gmra.mrb[0].mxu0 %v4698
      %v4743 = vpop.f32.mrb[0].mxu0
      %v4744 = vadd.f32 0.0, %v4743
      %v4745 = vpop.f32.mrb[0].mxu0
      %v4746 = vpop.f32.mrb[0].mxu0
      %v4747 = vadd.f32 0.0, %v4746
      %v4748 = vpop.f32.mrb[0].mxu0
      %4749 = vmatprep.mubr.bf16.mxu0 0
      %4750 = vmatmul.mubr.bf16.gmra.mrb[0].mxu0 %v4701
      %v4751 = vpop.f32.mrb[0].mxu0
      %v4752 = vadd.f32 0.0, %v4751
      %v4753 = vpop.f32.mrb[0].mxu0
      %v4754 = vpop.f32.mrb[0].mxu0
      %v4755 = vadd.f32 0.0, %v4754
      %v4756 = vpop.f32.mrb[0].mxu0
      %4757 = vmatprep.mubr.bf16.mxu0 0
      %4758 = vmatmul.mubr.bf16.gmra.mrb[0].mxu0 %v4704
      %v4759 = vpop.f32.mrb[0].mxu0
      %v4760 = vadd.f32 0.0, %v4759
      %v4761 = vpop.f32.mrb[0].mxu0
      %v4762 = vpop.f32.mrb[0].mxu0
      %v4763 = vadd.f32 0.0, %v4762
      %v4764 = vpop.f32.mrb[0].mxu0
      %4765 = vmatprep.mubr.bf16.mxu0 0
      %4766 = vmatmul.mubr.bf16.gmra.mrb[0].mxu0 %v4707
      %v4767 = vpop.f32.mrb[0].mxu0
      %v4768 = vadd.f32 0.0, %v4767
      %v4769 = vpop.f32.mrb[0].mxu0
      %v4770 = vpop.f32.mrb[0].mxu0
      %v4771 = vadd.f32 0.0, %v4770
      %v4772 = vpop.f32.mrb[0].mxu0
      %4773 = vdwg.mxu0
      %v4775 = vsel %vm610, %v4523, 0
      %v4778 = vsel %vm610, %v4524, 0
      %v4781 = vsel %vm610, %v4525, 0
      %v4784 = vsel %vm610, %v4526, 0
      %4786 = vmatprep.subr.bf16.mxu0 0
      %4787 = vmatpush1.bf16.msra.mxu0 %v3160
      %4788 = vmatprep.subr.bf16.mxu0 0
      %4789 = vmatpush1.bf16.msra.mxu0 %v3162
      %4790 = vmatprep.subr.bf16.mxu0 0
      %4791 = vmatpush1.bf16.msra.mxu0 %v3164
      %4792 = vmatprep.subr.bf16.mxu0 0
      %4793 = vmatpush1.bf16.msra.mxu0 %v3166
      %4794 = vmatprep.subr.bf16.mxu0 0
      %4795 = vmatpush1.bf16.msra.mxu0 0
      %4796 = vmatprep.subr.bf16.mxu0 0
      %4797 = vmatpush1.bf16.msra.mxu0 0
      %4798 = vmatprep.subr.bf16.mxu0 0
      %4799 = vmatpush1.bf16.msra.mxu0 0
      %4800 = vmatprep.subr.bf16.mxu0 0
      %4801 = vmatpush1.bf16.msra.mxu0 0
      %4802 = vmatprep.subr.bf16.mxu0 0
      %4803 = vmatpush1.bf16.msra.mxu0 0
      %4804 = vmatprep.subr.bf16.mxu0 0
      %4805 = vmatpush1.bf16.msra.mxu0 0
      %4806 = vmatprep.subr.bf16.mxu0 0
      %4807 = vmatpush1.bf16.msra.mxu0 0
      %4808 = vmatprep.subr.bf16.mxu0 0
      %4809 = vmatpush1.bf16.msra.mxu0 0
      %4810 = vmatprep.subr.bf16.mxu0 0
      %4811 = vmatpush1.bf16.msra.mxu0 0
      %4812 = vmatprep.subr.bf16.mxu0 0
      %4813 = vmatpush1.bf16.msra.mxu0 0
      %4814 = vmatprep.subr.bf16.mxu0 0
      %4815 = vmatpush1.bf16.msra.mxu0 0
      %4816 = vmatprep.subr.bf16.mxu0 0
      %4817 = vmatpush1.bf16.msra.mxu0 0
      %4818 = vmatprep.mubr.bf16.mxu0 0
      %4819 = vmatmul.mubr.bf16.gmra.mrb[0].mxu0 %v4775
      %v4820 = vpop.f32.mrb[0].mxu0
      %v4821 = vadd.f32 0.0, %v4820
      %v4822 = vpop.f32.mrb[0].mxu0
      %v4823 = vpop.f32.mrb[0].mxu0
      %v4824 = vadd.f32 0.0, %v4823
      %v4825 = vpop.f32.mrb[0].mxu0
      %4826 = vmatprep.mubr.bf16.mxu0 0
      %4827 = vmatmul.mubr.bf16.gmra.mrb[0].mxu0 %v4778
      %v4828 = vpop.f32.mrb[0].mxu0
      %v4829 = vadd.f32 0.0, %v4828
      %v4830 = vpop.f32.mrb[0].mxu0
      %v4831 = vpop.f32.mrb[0].mxu0
      %v4832 = vadd.f32 0.0, %v4831
      %v4833 = vpop.f32.mrb[0].mxu0
      %4834 = vmatprep.mubr.bf16.mxu0 0
      %4835 = vmatmul.mubr.bf16.gmra.mrb[0].mxu0 %v4781
      %v4836 = vpop.f32.mrb[0].mxu0
      %v4837 = vadd.f32 0.0, %v4836
      %v4838 = vpop.f32.mrb[0].mxu0
      %v4839 = vpop.f32.mrb[0].mxu0
      %v4840 = vadd.f32 0.0, %v4839
      %v4841 = vpop.f32.mrb[0].mxu0
      %4842 = vmatprep.mubr.bf16.mxu0 0
      %4843 = vmatmul.mubr.bf16.gmra.mrb[0].mxu0 %v4784
      %v4844 = vpop.f32.mrb[0].mxu0
      %v4845 = vadd.f32 0.0, %v4844
      %v4846 = vpop.f32.mrb[0].mxu0
      %v4847 = vpop.f32.mrb[0].mxu0
      %v4848 = vadd.f32 0.0, %v4847
      %v4849 = vpop.f32.mrb[0].mxu0
      %4850 = vdwg.mxu0
      %v4852 = vsel %vm610, %v4527, 0
      %v4855 = vsel %vm610, %v4528, 0
      %v4858 = vsel %vm610, %v4529, 0
      %v4861 = vsel %vm610, %v4530, 0
      %4863 = vmatprep.subr.bf16.mxu0 0
      %4864 = vmatpush1.bf16.msra.mxu0 %v3176
      %4865 = vmatprep.subr.bf16.mxu0 0
      %4866 = vmatpush1.bf16.msra.mxu0 %v3178
      %4867 = vmatprep.subr.bf16.mxu0 0
      %4868 = vmatpush1.bf16.msra.mxu0 %v3180
      %4869 = vmatprep.subr.bf16.mxu0 0
      %4870 = vmatpush1.bf16.msra.mxu0 %v3182
      %4871 = vmatprep.subr.bf16.mxu0 0
      %4872 = vmatpush1.bf16.msra.mxu0 0
      %4873 = vmatprep.subr.bf16.mxu0 0
      %4874 = vmatpush1.bf16.msra.mxu0 0
      %4875 = vmatprep.subr.bf16.mxu0 0
      %4876 = vmatpush1.bf16.msra.mxu0 0
      %4877 = vmatprep.subr.bf16.mxu0 0
      %4878 = vmatpush1.bf16.msra.mxu0 0
      %4879 = vmatprep.subr.bf16.mxu0 0
      %4880 = vmatpush1.bf16.msra.mxu0 0
      %4881 = vmatprep.subr.bf16.mxu0 0
      %4882 = vmatpush1.bf16.msra.mxu0 0
      %4883 = vmatprep.subr.bf16.mxu0 0
      %4884 = vmatpush1.bf16.msra.mxu0 0
      %4885 = vmatprep.subr.bf16.mxu0 0
      %4886 = vmatpush1.bf16.msra.mxu0 0
      %4887 = vmatprep.subr.bf16.mxu0 0
      %4888 = vmatpush1.bf16.msra.mxu0 0
      %4889 = vmatprep.subr.bf16.mxu0 0
      %4890 = vmatpush1.bf16.msra.mxu0 0
      %4891 = vmatprep.subr.bf16.mxu0 0
      %4892 = vmatpush1.bf16.msra.mxu0 0
      %4893 = vmatprep.subr.bf16.mxu0 0
      %4894 = vmatpush1.bf16.msra.mxu0 0
      %4895 = vmatprep.mubr.bf16.mxu0 0
      %4896 = vmatmul.mubr.bf16.gmra.mrb[0].mxu0 %v4852
      %v4897 = vpop.f32.mrb[0].mxu0
      %v4898 = vadd.f32 0.0, %v4897
      %v4899 = vpop.f32.mrb[0].mxu0
      %v4900 = vpop.f32.mrb[0].mxu0
      %v4901 = vadd.f32 0.0, %v4900
      %v4902 = vpop.f32.mrb[0].mxu0
      %4903 = vmatprep.mubr.bf16.mxu0 0
      %4904 = vmatmul.mubr.bf16.gmra.mrb[0].mxu0 %v4855
      %v4905 = vpop.f32.mrb[0].mxu0
      %v4906 = vadd.f32 0.0, %v4905
      %v4907 = vpop.f32.mrb[0].mxu0
      %v4908 = vpop.f32.mrb[0].mxu0
      %v4909 = vadd.f32 0.0, %v4908
      %v4910 = vpop.f32.mrb[0].mxu0
      %4911 = vmatprep.mubr.bf16.mxu0 0
      %4912 = vmatmul.mubr.bf16.gmra.mrb[0].mxu0 %v4858
      %v4913 = vpop.f32.mrb[0].mxu0
      %v4914 = vadd.f32 0.0, %v4913
      %v4915 = vpop.f32.mrb[0].mxu0
      %v4916 = vpop.f32.mrb[0].mxu0
      %v4917 = vadd.f32 0.0, %v4916
      %v4918 = vpop.f32.mrb[0].mxu0
      %4919 = vmatprep.mubr.bf16.mxu0 0
      %4920 = vmatmul.mubr.bf16.gmra.mrb[0].mxu0 %v4861
      %v4921 = vpop.f32.mrb[0].mxu0
      %v4922 = vadd.f32 0.0, %v4921
      %v4923 = vpop.f32.mrb[0].mxu0
      %v4924 = vpop.f32.mrb[0].mxu0
      %v4925 = vadd.f32 0.0, %v4924
      %v4926 = vpop.f32.mrb[0].mxu0
      %4927 = vdwg.mxu0
      %v4929 = vsel %vm610, %v4531, 0
      %v4932 = vsel %vm610, %v4532, 0
      %v4935 = vsel %vm610, %v4533, 0
      %v4938 = vsel %vm610, %v4534, 0
      %4940 = vmatprep.subr.bf16.mxu0 0
      %4941 = vmatpush1.bf16.msra.mxu0 %v3184
      %4942 = vmatprep.subr.bf16.mxu0 0
      %4943 = vmatpush1.bf16.msra.mxu0 %v3186
      %4944 = vmatprep.subr.bf16.mxu0 0
      %4945 = vmatpush1.bf16.msra.mxu0 %v3188
      %4946 = vmatprep.subr.bf16.mxu0 0
      %4947 = vmatpush1.bf16.msra.mxu0 %v3190
      %4948 = vmatprep.subr.bf16.mxu0 0
      %4949 = vmatpush1.bf16.msra.mxu0 0
      %4950 = vmatprep.subr.bf16.mxu0 0
      %4951 = vmatpush1.bf16.msra.mxu0 0
      %4952 = vmatprep.subr.bf16.mxu0 0
      %4953 = vmatpush1.bf16.msra.mxu0 0
      %4954 = vmatprep.subr.bf16.mxu0 0
      %4955 = vmatpush1.bf16.msra.mxu0 0
      %4956 = vmatprep.subr.bf16.mxu0 0
      %4957 = vmatpush1.bf16.msra.mxu0 0
      %4958 = vmatprep.subr.bf16.mxu0 0
      %4959 = vmatpush1.bf16.msra.mxu0 0
      %4960 = vmatprep.subr.bf16.mxu0 0
      %4961 = vmatpush1.bf16.msra.mxu0 0
      %4962 = vmatprep.subr.bf16.mxu0 0
      %4963 = vmatpush1.bf16.msra.mxu0 0
      %4964 = vmatprep.subr.bf16.mxu0 0
      %4965 = vmatpush1.bf16.msra.mxu0 0
      %4966 = vmatprep.subr.bf16.mxu0 0
      %4967 = vmatpush1.bf16.msra.mxu0 0
      %4968 = vmatprep.subr.bf16.mxu0 0
      %4969 = vmatpush1.bf16.msra.mxu0 0
      %4970 = vmatprep.subr.bf16.mxu0 0
      %4971 = vmatpush1.bf16.msra.mxu0 0
      %4972 = vmatprep.mubr.bf16.mxu0 0
      %4973 = vmatmul.mubr.bf16.gmra.mrb[0].mxu0 %v4929
      %v4974 = vpop.f32.mrb[0].mxu0
      %v4975 = vadd.f32 0.0, %v4974
      %v4976 = vpop.f32.mrb[0].mxu0
      %v4977 = vpop.f32.mrb[0].mxu0
      %v4978 = vadd.f32 0.0, %v4977
      %v4979 = vpop.f32.mrb[0].mxu0
      %4980 = vmatprep.mubr.bf16.mxu0 0
      %4981 = vmatmul.mubr.bf16.gmra.mrb[0].mxu0 %v4932
      %v4982 = vpop.f32.mrb[0].mxu0
      %v4983 = vadd.f32 0.0, %v4982
      %v4984 = vpop.f32.mrb[0].mxu0
      %v4985 = vpop.f32.mrb[0].mxu0
      %v4986 = vadd.f32 0.0, %v4985
      %v4987 = vpop.f32.mrb[0].mxu0
      %4988 = vmatprep.mubr.bf16.mxu0 0
      %4989 = vmatmul.mubr.bf16.gmra.mrb[0].mxu0 %v4935
      %v4990 = vpop.f32.mrb[0].mxu0
      %v4991 = vadd.f32 0.0, %v4990
      %v4992 = vpop.f32.mrb[0].mxu0
      %v4993 = vpop.f32.mrb[0].mxu0
      %v4994 = vadd.f32 0.0, %v4993
      %v4995 = vpop.f32.mrb[0].mxu0
      %4996 = vmatprep.mubr.bf16.mxu0 0
      %4997 = vmatmul.mubr.bf16.gmra.mrb[0].mxu0 %v4938
      %v4998 = vpop.f32.mrb[0].mxu0
      %v4999 = vadd.f32 0.0, %v4998
      %v5000 = vpop.f32.mrb[0].mxu0
      %v5001 = vpop.f32.mrb[0].mxu0
      %v5002 = vadd.f32 0.0, %v5001
      %v5003 = vpop.f32.mrb[0].mxu0
      %5004 = vdwg.mxu0
      %v5006 = vsel %vm610, %v4535, 0
      %v5009 = vsel %vm610, %v4536, 0
      %v5012 = vsel %vm610, %v4537, 0
      %v5015 = vsel %vm610, %v4538, 0
      %5017 = vmatprep.subr.bf16.mxu0 0
      %5018 = vmatpush1.bf16.msra.mxu0 %v3200
      %5019 = vmatprep.subr.bf16.mxu0 0
      %5020 = vmatpush1.bf16.msra.mxu0 %v3202
      %5021 = vmatprep.subr.bf16.mxu0 0
      %5022 = vmatpush1.bf16.msra.mxu0 %v3204
      %5023 = vmatprep.subr.bf16.mxu0 0
      %5024 = vmatpush1.bf16.msra.mxu0 %v3206
      %5025 = vmatprep.subr.bf16.mxu0 0
      %5026 = vmatpush1.bf16.msra.mxu0 0
      %5027 = vmatprep.subr.bf16.mxu0 0
      %5028 = vmatpush1.bf16.msra.mxu0 0
      %5029 = vmatprep.subr.bf16.mxu0 0
      %5030 = vmatpush1.bf16.msra.mxu0 0
      %5031 = vmatprep.subr.bf16.mxu0 0
      %5032 = vmatpush1.bf16.msra.mxu0 0
      %5033 = vmatprep.subr.bf16.mxu0 0
      %5034 = vmatpush1.bf16.msra.mxu0 0
      %5035 = vmatprep.subr.bf16.mxu0 0
      %5036 = vmatpush1.bf16.msra.mxu0 0
      %5037 = vmatprep.subr.bf16.mxu0 0
      %5038 = vmatpush1.bf16.msra.mxu0 0
      %5039 = vmatprep.subr.bf16.mxu0 0
      %5040 = vmatpush1.bf16.msra.mxu0 0
      %5041 = vmatprep.subr.bf16.mxu0 0
      %5042 = vmatpush1.bf16.msra.mxu0 0
      %5043 = vmatprep.subr.bf16.mxu0 0
      %5044 = vmatpush1.bf16.msra.mxu0 0
      %5045 = vmatprep.subr.bf16.mxu0 0
      %5046 = vmatpush1.bf16.msra.mxu0 0
      %5047 = vmatprep.subr.bf16.mxu0 0
      %5048 = vmatpush1.bf16.msra.mxu0 0
      %5049 = vmatprep.mubr.bf16.mxu0 0
      %5050 = vmatmul.mubr.bf16.gmra.mrb[0].mxu0 %v5006
      %v5051 = vpop.f32.mrb[0].mxu0
      %v5052 = vadd.f32 0.0, %v5051
      %v5053 = vpop.f32.mrb[0].mxu0
      %v5054 = vpop.f32.mrb[0].mxu0
      %v5055 = vadd.f32 0.0, %v5054
      %v5056 = vpop.f32.mrb[0].mxu0
      %5057 = vmatprep.mubr.bf16.mxu0 0
      %5058 = vmatmul.mubr.bf16.gmra.mrb[0].mxu0 %v5009
      %v5059 = vpop.f32.mrb[0].mxu0
      %v5060 = vadd.f32 0.0, %v5059
      %v5061 = vpop.f32.mrb[0].mxu0
      %v5062 = vpop.f32.mrb[0].mxu0
      %v5063 = vadd.f32 0.0, %v5062
      %v5064 = vpop.f32.mrb[0].mxu0
      %5065 = vmatprep.mubr.bf16.mxu0 0
      %5066 = vmatmul.mubr.bf16.gmra.mrb[0].mxu0 %v5012
      %v5067 = vpop.f32.mrb[0].mxu0
      %v5068 = vadd.f32 0.0, %v5067
      %v5069 = vpop.f32.mrb[0].mxu0
      %v5070 = vpop.f32.mrb[0].mxu0
      %v5071 = vadd.f32 0.0, %v5070
      %v5072 = vpop.f32.mrb[0].mxu0
      %5073 = vmatprep.mubr.bf16.mxu0 0
      %5074 = vmatmul.mubr.bf16.gmra.mrb[0].mxu0 %v5015
      %v5075 = vpop.f32.mrb[0].mxu0
      %v5076 = vadd.f32 0.0, %v5075
      %v5077 = vpop.f32.mrb[0].mxu0
      %v5078 = vpop.f32.mrb[0].mxu0
      %v5079 = vadd.f32 0.0, %v5078
      %v5080 = vpop.f32.mrb[0].mxu0
      %5081 = vdwg.mxu0
      %v5083 = vsel %vm610, %v4539, 0
      %v5086 = vsel %vm610, %v4540, 0
      %v5089 = vsel %vm610, %v4541, 0
      %v5092 = vsel %vm610, %v4542, 0
      %5094 = vmatprep.subr.bf16.mxu0 0
      %5095 = vmatpush1.bf16.msra.mxu0 %v3208
      %5096 = vmatprep.subr.bf16.mxu0 0
      %5097 = vmatpush1.bf16.msra.mxu0 %v3210
      %5098 = vmatprep.subr.bf16.mxu0 0
      %5099 = vmatpush1.bf16.msra.mxu0 %v3212
      %5100 = vmatprep.subr.bf16.mxu0 0
      %5101 = vmatpush1.bf16.msra.mxu0 %v3214
      %5102 = vmatprep.subr.bf16.mxu0 0
      %5103 = vmatpush1.bf16.msra.mxu0 0
      %5104 = vmatprep.subr.bf16.mxu0 0
      %5105 = vmatpush1.bf16.msra.mxu0 0
      %5106 = vmatprep.subr.bf16.mxu0 0
      %5107 = vmatpush1.bf16.msra.mxu0 0
      %5108 = vmatprep.subr.bf16.mxu0 0
      %5109 = vmatpush1.bf16.msra.mxu0 0
      %5110 = vmatprep.subr.bf16.mxu0 0
      %5111 = vmatpush1.bf16.msra.mxu0 0
      %5112 = vmatprep.subr.bf16.mxu0 0
      %5113 = vmatpush1.bf16.msra.mxu0 0
      %5114 = vmatprep.subr.bf16.mxu0 0
      %5115 = vmatpush1.bf16.msra.mxu0 0
      %5116 = vmatprep.subr.bf16.mxu0 0
      %5117 = vmatpush1.bf16.msra.mxu0 0
      %5118 = vmatprep.subr.bf16.mxu0 0
      %5119 = vmatpush1.bf16.msra.mxu0 0
      %5120 = vmatprep.subr.bf16.mxu0 0
      %5121 = vmatpush1.bf16.msra.mxu0 0
      %5122 = vmatprep.subr.bf16.mxu0 0
      %5123 = vmatpush1.bf16.msra.mxu0 0
      %5124 = vmatprep.subr.bf16.mxu0 0
      %5125 = vmatpush1.bf16.msra.mxu0 0
      %5126 = vmatprep.mubr.bf16.mxu0 0
      %5127 = vmatmul.mubr.bf16.gmra.mrb[0].mxu0 %v5083
      %v5128 = vpop.f32.mrb[0].mxu0
      %v5129 = vadd.f32 0.0, %v5128
      %v5130 = vpop.f32.mrb[0].mxu0
      %v5131 = vpop.f32.mrb[0].mxu0
      %v5132 = vadd.f32 0.0, %v5131
      %v5133 = vpop.f32.mrb[0].mxu0
      %5134 = vmatprep.mubr.bf16.mxu0 0
      %5135 = vmatmul.mubr.bf16.gmra.mrb[0].mxu0 %v5086
      %v5136 = vpop.f32.mrb[0].mxu0
      %v5137 = vadd.f32 0.0, %v5136
      %v5138 = vpop.f32.mrb[0].mxu0
      %v5139 = vpop.f32.mrb[0].mxu0
      %v5140 = vadd.f32 0.0, %v5139
      %v5141 = vpop.f32.mrb[0].mxu0
      %5142 = vmatprep.mubr.bf16.mxu0 0
      %5143 = vmatmul.mubr.bf16.gmra.mrb[0].mxu0 %v5089
      %v5144 = vpop.f32.mrb[0].mxu0
      %v5145 = vadd.f32 0.0, %v5144
      %v5146 = vpop.f32.mrb[0].mxu0
      %v5147 = vpop.f32.mrb[0].mxu0
      %v5148 = vadd.f32 0.0, %v5147
      %v5149 = vpop.f32.mrb[0].mxu0
      %5150 = vmatprep.mubr.bf16.mxu0 0
      %5151 = vmatmul.mubr.bf16.gmra.mrb[0].mxu0 %v5092
      %v5152 = vpop.f32.mrb[0].mxu0
      %v5153 = vadd.f32 0.0, %v5152
      %v5154 = vpop.f32.mrb[0].mxu0
      %v5155 = vpop.f32.mrb[0].mxu0
      %v5156 = vadd.f32 0.0, %v5155
      %v5157 = vpop.f32.mrb[0].mxu0
      %5158 = vdwg.mxu0
      %v5159 = vrcp.pop %v4321
      %v5160 = vrcp.pop %v4324
      %v5161 = vrcp.pop %v4327
      %v5162 = vrcp.pop %v4330
      %v5163 = vrcp.pop %v4333
      %v5164 = vrcp.pop %v4336
      %v5165 = vrcp.pop %v4339
      %v5166 = vrcp.pop %v4342
      %v5167 = vrcp.pop %v4345
      %v5168 = vrcp.pop %v4348
      %v5169 = vrcp.pop %v4351
      %v5170 = vrcp.pop %v4354
      %v5171 = vrcp.pop %v4357
      %v5172 = vrcp.pop %v4360
      %v5173 = vrcp.pop %v4363
      %v5174 = vrcp.pop %v4366
      %v5175 = vrcp.pop %v4369
      %v5176 = vrcp.pop %v4372
      %v5177 = vrcp.pop %v4375
      %v5178 = vrcp.pop %v4378
      %v5179 = vrcp.pop %v4381
      %v5180 = vrcp.pop %v4384
      %v5181 = vrcp.pop %v4387
      %v5182 = vrcp.pop %v4390
      %v5183 = vrcp.pop %v4393
      %v5184 = vrcp.pop %v4396
      %v5185 = vrcp.pop %v4399
      %v5186 = vrcp.pop %v4402
      %v5187 = vrcp.pop %v4405
      %v5188 = vrcp.pop %v4408
      %v5189 = vrcp.pop %v4411
      %v5190 = vrcp.pop %v4414
      %v5191 = vrcp.pop %v4417
      %v5192 = vrcp.pop %v4420
      %v5193 = vrcp.pop %v4423
      %v5194 = vrcp.pop %v4426
      %v5195 = vrcp.pop %v4429
      %v5196 = vrcp.pop %v4432
      %v5197 = vrcp.pop %v4435
      %v5198 = vrcp.pop %v4438
      %v5199 = vrcp.pop %v4441
      %v5200 = vrcp.pop %v4444
      %v5201 = vrcp.pop %v4447
      %v5202 = vrcp.pop %v4450
      %v5203 = vrcp.pop %v4453
      %v5204 = vrcp.pop %v4456
      %v5205 = vrcp.pop %v4459
      %v5206 = vrcp.pop %v4462
      %v5207 = vrcp.pop %v4465
      %v5208 = vrcp.pop %v4468
      %v5209 = vrcp.pop %v4471
      %v5210 = vrcp.pop %v4474
      %v5211 = vrcp.pop %v4477
      %v5212 = vrcp.pop %v4480
      %v5213 = vrcp.pop %v4483
      %v5214 = vrcp.pop %v4486
      %v5215 = vrcp.pop %v4489
      %v5216 = vrcp.pop %v4492
      %v5217 = vrcp.pop %v4495
      %v5218 = vrcp.pop %v4498
      %v5219 = vrcp.pop %v4501
      %v5220 = vrcp.pop %v4504
      %v5221 = vrcp.pop %v4507
      %v5222 = vrcp.pop %v4510
      %v5223 = vmul.f32 %v4590, %v5159
      %v5224 = vmul.f32 %v4593, %v5160
      %v5225 = vmul.f32 %v4598, %v5161
      %v5226 = vmul.f32 %v4601, %v5162
      %v5227 = vmul.f32 %v4606, %v5163
      %v5228 = vmul.f32 %v4609, %v5164
      %v5229 = vmul.f32 %v4614, %v5165
      %v5230 = vmul.f32 %v4617, %v5166
      %v5231 = vmul.f32 %v4667, %v5167
      %v5232 = vmul.f32 %v4670, %v5168
      %v5233 = vmul.f32 %v4675, %v5169
      %v5234 = vmul.f32 %v4678, %v5170
      %v5235 = vmul.f32 %v4683, %v5171
      %v5236 = vmul.f32 %v4686, %v5172
      %v5237 = vmul.f32 %v4691, %v5173
      %v5238 = vmul.f32 %v4694, %v5174
      %v5239 = vmul.f32 %v4744, %v5175
      %v5240 = vmul.f32 %v4747, %v5176
      %v5241 = vmul.f32 %v4752, %v5177
      %v5242 = vmul.f32 %v4755, %v5178
      %v5243 = vmul.f32 %v4760, %v5179
      %v5244 = vmul.f32 %v4763, %v5180
      %v5245 = vmul.f32 %v4768, %v5181
      %v5246 = vmul.f32 %v4771, %v5182
      %v5247 = vmul.f32 %v4821, %v5183
      %v5248 = vmul.f32 %v4824, %v5184
      %v5249 = vmul.f32 %v4829, %v5185
      %v5250 = vmul.f32 %v4832, %v5186
      %v5251 = vmul.f32 %v4837, %v5187
      %v5252 = vmul.f32 %v4840, %v5188
      %v5253 = vmul.f32 %v4845, %v5189
      %v5254 = vmul.f32 %v4848, %v5190
      %v5255 = vmul.f32 %v4898, %v5191
      %v5256 = vmul.f32 %v4901, %v5192
      %v5257 = vmul.f32 %v4906, %v5193
      %v5258 = vmul.f32 %v4909, %v5194
      %v5259 = vmul.f32 %v4914, %v5195
      %v5260 = vmul.f32 %v4917, %v5196
      %v5261 = vmul.f32 %v4922, %v5197
      %v5262 = vmul.f32 %v4925, %v5198
      %v5263 = vmul.f32 %v4975, %v5199
      %v5264 = vmul.f32 %v4978, %v5200
      %v5265 = vmul.f32 %v4983, %v5201
      %v5266 = vmul.f32 %v4986, %v5202
      %v5267 = vmul.f32 %v4991, %v5203
      %v5268 = vmul.f32 %v4994, %v5204
      %v5269 = vmul.f32 %v4999, %v5205
      %v5270 = vmul.f32 %v5002, %v5206
      %v5271 = vmul.f32 %v5052, %v5207
      %v5272 = vmul.f32 %v5055, %v5208
      %v5273 = vmul.f32 %v5060, %v5209
      %v5274 = vmul.f32 %v5063, %v5210
      %v5275 = vmul.f32 %v5068, %v5211
      %v5276 = vmul.f32 %v5071, %v5212
      %v5277 = vmul.f32 %v5076, %v5213
      %v5278 = vmul.f32 %v5079, %v5214
      %v5279 = vmul.f32 %v5129, %v5215
      %v5280 = vmul.f32 %v5132, %v5216
      %v5281 = vmul.f32 %v5137, %v5217
      %v5282 = vmul.f32 %v5140, %v5218
      %v5283 = vmul.f32 %v5145, %v5219
      %v5284 = vmul.f32 %v5148, %v5220
      %v5285 = vmul.f32 %v5153, %v5221
      %v5286 = vmul.f32 %v5156, %v5222
      %v5287 = vpack.c.bf16 %v5224, %v5223
      %v5288 = vpack.c.bf16 %v5226, %v5225
      %v5289 = vpack.c.bf16 %v5228, %v5227
      %v5290 = vpack.c.bf16 %v5230, %v5229
      %v5291 = vpack.c.bf16 %v5232, %v5231
      %v5292 = vpack.c.bf16 %v5234, %v5233
      %v5293 = vpack.c.bf16 %v5236, %v5235
      %v5294 = vpack.c.bf16 %v5238, %v5237
      %v5295 = vpack.c.bf16 %v5240, %v5239
      %v5296 = vpack.c.bf16 %v5242, %v5241
      %v5297 = vpack.c.bf16 %v5244, %v5243
      %v5298 = vpack.c.bf16 %v5246, %v5245
      %v5299 = vpack.c.bf16 %v5248, %v5247
      %v5300 = vpack.c.bf16 %v5250, %v5249
      %v5301 = vpack.c.bf16 %v5252, %v5251
      %v5302 = vpack.c.bf16 %v5254, %v5253
      %v5303 = vpack.c.bf16 %v5256, %v5255
      %v5304 = vpack.c.bf16 %v5258, %v5257
      %v5305 = vpack.c.bf16 %v5260, %v5259
      %v5306 = vpack.c.bf16 %v5262, %v5261
      %v5307 = vpack.c.bf16 %v5264, %v5263
      %v5308 = vpack.c.bf16 %v5266, %v5265
      %v5309 = vpack.c.bf16 %v5268, %v5267
      %v5310 = vpack.c.bf16 %v5270, %v5269
      %v5311 = vpack.c.bf16 %v5272, %v5271
      %v5312 = vpack.c.bf16 %v5274, %v5273
      %v5313 = vpack.c.bf16 %v5276, %v5275
      %v5314 = vpack.c.bf16 %v5278, %v5277
      %v5315 = vpack.c.bf16 %v5280, %v5279
      %v5316 = vpack.c.bf16 %v5282, %v5281
      %v5317 = vpack.c.bf16 %v5284, %v5283
      %v5318 = vpack.c.bf16 %v5286, %v5285
      %v5319 = vld [vmem:[%s14] sm:$0xf]
      %v5320 = vld [vmem:[%s14 + $0x4] sm:$0xf]
      %v5321 = vld [vmem:[%s14 + $0x8] sm:$0xf]
      %v5322 = vld [vmem:[%s14 + $0xc] sm:$0xf]
      %v5323 = vld [vmem:[%s14 + $0x10] sm:$0xf]
      %v5324 = vld [vmem:[%s14 + $0x14] sm:$0xf]
      %v5325 = vld [vmem:[%s14 + $0x18] sm:$0xf]
      %v5326 = vld [vmem:[%s14 + $0x1c] sm:$0xf]
      %v5327 = vld [vmem:[%s14 + $0x20] sm:$0xf]
      %v5328 = vld [vmem:[%s14 + $0x24] sm:$0xf]
      %v5329 = vld [vmem:[%s14 + $0x28] sm:$0xf]
      %v5330 = vld [vmem:[%s14 + $0x2c] sm:$0xf]
      %v5331 = vld [vmem:[%s14 + $0x30] sm:$0xf]
      %v5332 = vld [vmem:[%s14 + $0x34] sm:$0xf]
      %v5333 = vld [vmem:[%s14 + $0x38] sm:$0xf]
      %v5334 = vld [vmem:[%s14 + $0x3c] sm:$0xf]
      %v5339 = vunpack.c.l.b16 %v5319
      %v5340 = vunpack.c.l.b16 %v5320
      %v5341 = vunpack.c.l.b16 %v5321
      %v5342 = vunpack.c.l.b16 %v5322
      %v5343 = vpack.c.b16 %v5340, %v5339
      %v5344 = vpack.c.b16 %v5342, %v5341
      %v5348 = vsel %vm800, %v5287, 0
      %v5351 = vsel %vm800, %v5288, 0
      %v5354 = vsel %vm800, %v5289, 0
      %v5357 = vsel %vm800, %v5290, 0
      %v5360 = vsel %vm800, %v5291, 0
      %v5363 = vsel %vm800, %v5292, 0
      %v5366 = vsel %vm800, %v5293, 0
      %v5369 = vsel %vm800, %v5294, 0
      %5371 = vmatprep.subr.bf16.mxu0 0
      %5372 = vmatpush1.bf16.msra.mxu0 %v5343
      %5373 = vmatprep.subr.bf16.mxu0 0
      %5374 = vmatpush1.bf16.msra.mxu0 %v5344
      %5375 = vmatprep.subr.bf16.mxu0 0
      %5376 = vmatpush1.bf16.msra.mxu0 0
      %5377 = vmatprep.subr.bf16.mxu0 0
      %5378 = vmatpush1.bf16.msra.mxu0 0
      %5379 = vmatprep.subr.bf16.mxu0 0
      %5380 = vmatpush1.bf16.msra.mxu0 0
      %5381 = vmatprep.subr.bf16.mxu0 0
      %5382 = vmatpush1.bf16.msra.mxu0 0
      %5383 = vmatprep.subr.bf16.mxu0 0
      %5384 = vmatpush1.bf16.msra.mxu0 0
      %5385 = vmatprep.subr.bf16.mxu0 0
      %5386 = vmatpush1.bf16.msra.mxu0 0
      %5387 = vmatprep.subr.bf16.mxu0 0
      %5388 = vmatpush1.bf16.msra.mxu0 0
      %5389 = vmatprep.subr.bf16.mxu0 0
      %5390 = vmatpush1.bf16.msra.mxu0 0
      %5391 = vmatprep.subr.bf16.mxu0 0
      %5392 = vmatpush1.bf16.msra.mxu0 0
      %5393 = vmatprep.subr.bf16.mxu0 0
      %5394 = vmatpush1.bf16.msra.mxu0 0
      %5395 = vmatprep.subr.bf16.mxu0 0
      %5396 = vmatpush1.bf16.msra.mxu0 0
      %5397 = vmatprep.subr.bf16.mxu0 0
      %5398 = vmatpush1.bf16.msra.mxu0 0
      %5399 = vmatprep.subr.bf16.mxu0 0
      %5400 = vmatpush1.bf16.msra.mxu0 0
      %5401 = vmatprep.subr.bf16.mxu0 0
      %5402 = vmatpush1.bf16.msra.mxu0 0
      %5403 = vmatprep.mubr.bf16.mxu0 0
      %5404 = vmatmul.mubr.bf16.gmra.mrb[0].mxu0 %v5348
      %v5405 = vpop.f32.mrb[0].mxu0
      %v5406 = vadd.f32 0.0, %v5405
      %v5407 = vpop.f32.mrb[0].mxu0
      %v5408 = vpop.f32.mrb[0].mxu0
      %v5409 = vadd.f32 0.0, %v5408
      %v5410 = vpop.f32.mrb[0].mxu0
      %5411 = vmatprep.mubr.bf16.mxu0 0
      %5412 = vmatmul.mubr.bf16.gmra.mrb[0].mxu0 %v5351
      %v5413 = vpop.f32.mrb[0].mxu0
      %v5414 = vadd.f32 0.0, %v5413
      %v5415 = vpop.f32.mrb[0].mxu0
      %v5416 = vpop.f32.mrb[0].mxu0
      %v5417 = vadd.f32 0.0, %v5416
      %v5418 = vpop.f32.mrb[0].mxu0
      %5419 = vmatprep.mubr.bf16.mxu0 0
      %5420 = vmatmul.mubr.bf16.gmra.mrb[0].mxu0 %v5354
      %v5421 = vpop.f32.mrb[0].mxu0
      %v5422 = vadd.f32 0.0, %v5421
      %v5423 = vpop.f32.mrb[0].mxu0
      %v5424 = vpop.f32.mrb[0].mxu0
      %v5425 = vadd.f32 0.0, %v5424
      %v5426 = vpop.f32.mrb[0].mxu0
      %5427 = vmatprep.mubr.bf16.mxu0 0
      %5428 = vmatmul.mubr.bf16.gmra.mrb[0].mxu0 %v5357
      %v5429 = vpop.f32.mrb[0].mxu0
      %v5430 = vadd.f32 0.0, %v5429
      %v5431 = vpop.f32.mrb[0].mxu0
      %v5432 = vpop.f32.mrb[0].mxu0
      %v5433 = vadd.f32 0.0, %v5432
      %v5434 = vpop.f32.mrb[0].mxu0
      %5435 = vmatprep.mubr.bf16.mxu0 0
      %5436 = vmatmul.mubr.bf16.gmra.mrb[0].mxu0 %v5360
      %v5437 = vpop.f32.mrb[0].mxu0
      %v5438 = vadd.f32 0.0, %v5437
      %v5439 = vpop.f32.mrb[0].mxu0
      %v5440 = vpop.f32.mrb[0].mxu0
      %v5441 = vadd.f32 0.0, %v5440
      %v5442 = vpop.f32.mrb[0].mxu0
      %5443 = vmatprep.mubr.bf16.mxu0 0
      %5444 = vmatmul.mubr.bf16.gmra.mrb[0].mxu0 %v5363
      %v5445 = vpop.f32.mrb[0].mxu0
      %v5446 = vadd.f32 0.0, %v5445
      %v5447 = vpop.f32.mrb[0].mxu0
      %v5448 = vpop.f32.mrb[0].mxu0
      %v5449 = vadd.f32 0.0, %v5448
      %v5450 = vpop.f32.mrb[0].mxu0
      %5451 = vmatprep.mubr.bf16.mxu0 0
      %5452 = vmatmul.mubr.bf16.gmra.mrb[0].mxu0 %v5366
      %v5453 = vpop.f32.mrb[0].mxu0
      %v5454 = vadd.f32 0.0, %v5453
      %v5455 = vpop.f32.mrb[0].mxu0
      %v5456 = vpop.f32.mrb[0].mxu0
      %v5457 = vadd.f32 0.0, %v5456
      %v5458 = vpop.f32.mrb[0].mxu0
      %5459 = vmatprep.mubr.bf16.mxu0 0
      %5460 = vmatmul.mubr.bf16.gmra.mrb[0].mxu0 %v5369
      %v5461 = vpop.f32.mrb[0].mxu0
      %v5462 = vadd.f32 0.0, %v5461
      %v5463 = vpop.f32.mrb[0].mxu0
      %v5464 = vpop.f32.mrb[0].mxu0
      %v5465 = vadd.f32 0.0, %v5464
      %v5466 = vpop.f32.mrb[0].mxu0
      %5467 = vdwg.mxu0
      %v5472 = vunpack.c.l.b16 %v5323
      %v5473 = vunpack.c.l.b16 %v5324
      %v5474 = vunpack.c.l.b16 %v5325
      %v5475 = vunpack.c.l.b16 %v5326
      %v5476 = vpack.c.b16 %v5473, %v5472
      %v5477 = vpack.c.b16 %v5475, %v5474
      %v5481 = vsel %vm800, %v5295, 0
      %v5484 = vsel %vm800, %v5296, 0
      %v5487 = vsel %vm800, %v5297, 0
      %v5490 = vsel %vm800, %v5298, 0
      %v5493 = vsel %vm800, %v5299, 0
      %v5496 = vsel %vm800, %v5300, 0
      %v5499 = vsel %vm800, %v5301, 0
      %v5502 = vsel %vm800, %v5302, 0
      %5504 = vmatprep.subr.bf16.mxu0 0
      %5505 = vmatpush1.bf16.msra.mxu0 %v5476
      %5506 = vmatprep.subr.bf16.mxu0 0
      %5507 = vmatpush1.bf16.msra.mxu0 %v5477
      %5508 = vmatprep.subr.bf16.mxu0 0
      %5509 = vmatpush1.bf16.msra.mxu0 0
      %5510 = vmatprep.subr.bf16.mxu0 0
      %5511 = vmatpush1.bf16.msra.mxu0 0
      %5512 = vmatprep.subr.bf16.mxu0 0
      %5513 = vmatpush1.bf16.msra.mxu0 0
      %5514 = vmatprep.subr.bf16.mxu0 0
      %5515 = vmatpush1.bf16.msra.mxu0 0
      %5516 = vmatprep.subr.bf16.mxu0 0
      %5517 = vmatpush1.bf16.msra.mxu0 0
      %5518 = vmatprep.subr.bf16.mxu0 0
      %5519 = vmatpush1.bf16.msra.mxu0 0
      %5520 = vmatprep.subr.bf16.mxu0 0
      %5521 = vmatpush1.bf16.msra.mxu0 0
      %5522 = vmatprep.subr.bf16.mxu0 0
      %5523 = vmatpush1.bf16.msra.mxu0 0
      %5524 = vmatprep.subr.bf16.mxu0 0
      %5525 = vmatpush1.bf16.msra.mxu0 0
      %5526 = vmatprep.subr.bf16.mxu0 0
      %5527 = vmatpush1.bf16.msra.mxu0 0
      %5528 = vmatprep.subr.bf16.mxu0 0
      %5529 = vmatpush1.bf16.msra.mxu0 0
      %5530 = vmatprep.subr.bf16.mxu0 0
      %5531 = vmatpush1.bf16.msra.mxu0 0
      %5532 = vmatprep.subr.bf16.mxu0 0
      %5533 = vmatpush1.bf16.msra.mxu0 0
      %5534 = vmatprep.subr.bf16.mxu0 0
      %5535 = vmatpush1.bf16.msra.mxu0 0
      %5536 = vmatprep.mubr.bf16.mxu0 0
      %5537 = vmatmul.mubr.bf16.gmra.mrb[0].mxu0 %v5481
      %v5538 = vpop.f32.mrb[0].mxu0
      %v5539 = vadd.f32 0.0, %v5538
      %v5540 = vpop.f32.mrb[0].mxu0
      %v5541 = vpop.f32.mrb[0].mxu0
      %v5542 = vadd.f32 0.0, %v5541
      %v5543 = vpop.f32.mrb[0].mxu0
      %5544 = vmatprep.mubr.bf16.mxu0 0
      %5545 = vmatmul.mubr.bf16.gmra.mrb[0].mxu0 %v5484
      %v5546 = vpop.f32.mrb[0].mxu0
      %v5547 = vadd.f32 0.0, %v5546
      %v5548 = vpop.f32.mrb[0].mxu0
      %v5549 = vpop.f32.mrb[0].mxu0
      %v5550 = vadd.f32 0.0, %v5549
      %v5551 = vpop.f32.mrb[0].mxu0
      %5552 = vmatprep.mubr.bf16.mxu0 0
      %5553 = vmatmul.mubr.bf16.gmra.mrb[0].mxu0 %v5487
      %v5554 = vpop.f32.mrb[0].mxu0
      %v5555 = vadd.f32 0.0, %v5554
      %v5556 = vpop.f32.mrb[0].mxu0
      %v5557 = vpop.f32.mrb[0].mxu0
      %v5558 = vadd.f32 0.0, %v5557
      %v5559 = vpop.f32.mrb[0].mxu0
      %5560 = vmatprep.mubr.bf16.mxu0 0
      %5561 = vmatmul.mubr.bf16.gmra.mrb[0].mxu0 %v5490
      %v5562 = vpop.f32.mrb[0].mxu0
      %v5563 = vadd.f32 0.0, %v5562
      %v5564 = vpop.f32.mrb[0].mxu0
      %v5565 = vpop.f32.mrb[0].mxu0
      %v5566 = vadd.f32 0.0, %v5565
      %v5567 = vpop.f32.mrb[0].mxu0
      %5568 = vmatprep.mubr.bf16.mxu0 0
      %5569 = vmatmul.mubr.bf16.gmra.mrb[0].mxu0 %v5493
      %v5570 = vpop.f32.mrb[0].mxu0
      %v5571 = vadd.f32 0.0, %v5570
      %v5572 = vpop.f32.mrb[0].mxu0
      %v5573 = vpop.f32.mrb[0].mxu0
      %v5574 = vadd.f32 0.0, %v5573
      %v5575 = vpop.f32.mrb[0].mxu0
      %5576 = vmatprep.mubr.bf16.mxu0 0
      %5577 = vmatmul.mubr.bf16.gmra.mrb[0].mxu0 %v5496
      %v5578 = vpop.f32.mrb[0].mxu0
      %v5579 = vadd.f32 0.0, %v5578
      %v5580 = vpop.f32.mrb[0].mxu0
      %v5581 = vpop.f32.mrb[0].mxu0
      %v5582 = vadd.f32 0.0, %v5581
      %v5583 = vpop.f32.mrb[0].mxu0
      %5584 = vmatprep.mubr.bf16.mxu0 0
      %5585 = vmatmul.mubr.bf16.gmra.mrb[0].mxu0 %v5499
      %v5586 = vpop.f32.mrb[0].mxu0
      %v5587 = vadd.f32 0.0, %v5586
      %v5588 = vpop.f32.mrb[0].mxu0
      %v5589 = vpop.f32.mrb[0].mxu0
      %v5590 = vadd.f32 0.0, %v5589
      %v5591 = vpop.f32.mrb[0].mxu0
      %5592 = vmatprep.mubr.bf16.mxu0 0
      %5593 = vmatmul.mubr.bf16.gmra.mrb[0].mxu0 %v5502
      %v5594 = vpop.f32.mrb[0].mxu0
      %v5595 = vadd.f32 0.0, %v5594
      %v5596 = vpop.f32.mrb[0].mxu0
      %v5597 = vpop.f32.mrb[0].mxu0
      %v5598 = vadd.f32 0.0, %v5597
      %v5599 = vpop.f32.mrb[0].mxu0
      %5600 = vdwg.mxu0
      %v5605 = vunpack.c.l.b16 %v5327
      %v5606 = vunpack.c.l.b16 %v5328
      %v5607 = vunpack.c.l.b16 %v5329
      %v5608 = vunpack.c.l.b16 %v5330
      %v5609 = vpack.c.b16 %v5606, %v5605
      %v5610 = vpack.c.b16 %v5608, %v5607
      %v5614 = vsel %vm800, %v5303, 0
      %v5617 = vsel %vm800, %v5304, 0
      %v5620 = vsel %vm800, %v5305, 0
      %v5623 = vsel %vm800, %v5306, 0
      %v5626 = vsel %vm800, %v5307, 0
      %v5629 = vsel %vm800, %v5308, 0
      %v5632 = vsel %vm800, %v5309, 0
      %v5635 = vsel %vm800, %v5310, 0
      %5637 = vmatprep.subr.bf16.mxu0 0
      %5638 = vmatpush1.bf16.msra.mxu0 %v5609
      %5639 = vmatprep.subr.bf16.mxu0 0
      %5640 = vmatpush1.bf16.msra.mxu0 %v5610
      %5641 = vmatprep.subr.bf16.mxu0 0
      %5642 = vmatpush1.bf16.msra.mxu0 0
      %5643 = vmatprep.subr.bf16.mxu0 0
      %5644 = vmatpush1.bf16.msra.mxu0 0
      %5645 = vmatprep.subr.bf16.mxu0 0
      %5646 = vmatpush1.bf16.msra.mxu0 0
      %5647 = vmatprep.subr.bf16.mxu0 0
      %5648 = vmatpush1.bf16.msra.mxu0 0
      %5649 = vmatprep.subr.bf16.mxu0 0
      %5650 = vmatpush1.bf16.msra.mxu0 0
      %5651 = vmatprep.subr.bf16.mxu0 0
      %5652 = vmatpush1.bf16.msra.mxu0 0
      %5653 = vmatprep.subr.bf16.mxu0 0
      %5654 = vmatpush1.bf16.msra.mxu0 0
      %5655 = vmatprep.subr.bf16.mxu0 0
      %5656 = vmatpush1.bf16.msra.mxu0 0
      %5657 = vmatprep.subr.bf16.mxu0 0
      %5658 = vmatpush1.bf16.msra.mxu0 0
      %5659 = vmatprep.subr.bf16.mxu0 0
      %5660 = vmatpush1.bf16.msra.mxu0 0
      %5661 = vmatprep.subr.bf16.mxu0 0
      %5662 = vmatpush1.bf16.msra.mxu0 0
      %5663 = vmatprep.subr.bf16.mxu0 0
      %5664 = vmatpush1.bf16.msra.mxu0 0
      %5665 = vmatprep.subr.bf16.mxu0 0
      %5666 = vmatpush1.bf16.msra.mxu0 0
      %5667 = vmatprep.subr.bf16.mxu0 0
      %5668 = vmatpush1.bf16.msra.mxu0 0
      %5669 = vmatprep.mubr.bf16.mxu0 0
      %5670 = vmatmul.mubr.bf16.gmra.mrb[0].mxu0 %v5614
      %v5671 = vpop.f32.mrb[0].mxu0
      %v5672 = vadd.f32 0.0, %v5671
      %v5673 = vpop.f32.mrb[0].mxu0
      %v5674 = vpop.f32.mrb[0].mxu0
      %v5675 = vadd.f32 0.0, %v5674
      %v5676 = vpop.f32.mrb[0].mxu0
      %5677 = vmatprep.mubr.bf16.mxu0 0
      %5678 = vmatmul.mubr.bf16.gmra.mrb[0].mxu0 %v5617
      %v5679 = vpop.f32.mrb[0].mxu0
      %v5680 = vadd.f32 0.0, %v5679
      %v5681 = vpop.f32.mrb[0].mxu0
      %v5682 = vpop.f32.mrb[0].mxu0
      %v5683 = vadd.f32 0.0, %v5682
      %v5684 = vpop.f32.mrb[0].mxu0
      %5685 = vmatprep.mubr.bf16.mxu0 0
      %5686 = vmatmul.mubr.bf16.gmra.mrb[0].mxu0 %v5620
      %v5687 = vpop.f32.mrb[0].mxu0
      %v5688 = vadd.f32 0.0, %v5687
      %v5689 = vpop.f32.mrb[0].mxu0
      %v5690 = vpop.f32.mrb[0].mxu0
      %v5691 = vadd.f32 0.0, %v5690
      %v5692 = vpop.f32.mrb[0].mxu0
      %5693 = vmatprep.mubr.bf16.mxu0 0
      %5694 = vmatmul.mubr.bf16.gmra.mrb[0].mxu0 %v5623
      %v5695 = vpop.f32.mrb[0].mxu0
      %v5696 = vadd.f32 0.0, %v5695
      %v5697 = vpop.f32.mrb[0].mxu0
      %v5698 = vpop.f32.mrb[0].mxu0
      %v5699 = vadd.f32 0.0, %v5698
      %v5700 = vpop.f32.mrb[0].mxu0
      %5701 = vmatprep.mubr.bf16.mxu0 0
      %5702 = vmatmul.mubr.bf16.gmra.mrb[0].mxu0 %v5626
      %v5703 = vpop.f32.mrb[0].mxu0
      %v5704 = vadd.f32 0.0, %v5703
      %v5705 = vpop.f32.mrb[0].mxu0
      %v5706 = vpop.f32.mrb[0].mxu0
      %v5707 = vadd.f32 0.0, %v5706
      %v5708 = vpop.f32.mrb[0].mxu0
      %5709 = vmatprep.mubr.bf16.mxu0 0
      %5710 = vmatmul.mubr.bf16.gmra.mrb[0].mxu0 %v5629
      %v5711 = vpop.f32.mrb[0].mxu0
      %v5712 = vadd.f32 0.0, %v5711
      %v5713 = vpop.f32.mrb[0].mxu0
      %v5714 = vpop.f32.mrb[0].mxu0
      %v5715 = vadd.f32 0.0, %v5714
      %v5716 = vpop.f32.mrb[0].mxu0
      %5717 = vmatprep.mubr.bf16.mxu0 0
      %5718 = vmatmul.mubr.bf16.gmra.mrb[0].mxu0 %v5632
      %v5719 = vpop.f32.mrb[0].mxu0
      %v5720 = vadd.f32 0.0, %v5719
      %v5721 = vpop.f32.mrb[0].mxu0
      %v5722 = vpop.f32.mrb[0].mxu0
      %v5723 = vadd.f32 0.0, %v5722
      %v5724 = vpop.f32.mrb[0].mxu0
      %5725 = vmatprep.mubr.bf16.mxu0 0
      %5726 = vmatmul.mubr.bf16.gmra.mrb[0].mxu0 %v5635
      %v5727 = vpop.f32.mrb[0].mxu0
      %v5728 = vadd.f32 0.0, %v5727
      %v5729 = vpop.f32.mrb[0].mxu0
      %v5730 = vpop.f32.mrb[0].mxu0
      %v5731 = vadd.f32 0.0, %v5730
      %v5732 = vpop.f32.mrb[0].mxu0
      %5733 = vdwg.mxu0
      %v5738 = vunpack.c.l.b16 %v5331
      %v5739 = vunpack.c.l.b16 %v5332
      %v5740 = vunpack.c.l.b16 %v5333
      %v5741 = vunpack.c.l.b16 %v5334
      %v5742 = vpack.c.b16 %v5739, %v5738
      %v5743 = vpack.c.b16 %v5741, %v5740
      %v5747 = vsel %vm800, %v5311, 0
      %v5750 = vsel %vm800, %v5312, 0
      %v5753 = vsel %vm800, %v5313, 0
      %v5756 = vsel %vm800, %v5314, 0
      %v5759 = vsel %vm800, %v5315, 0
      %v5762 = vsel %vm800, %v5316, 0
      %v5765 = vsel %vm800, %v5317, 0
      %v5768 = vsel %vm800, %v5318, 0
      %5770 = vmatprep.subr.bf16.mxu0 0
      %5771 = vmatpush1.bf16.msra.mxu0 %v5742
      %5772 = vmatprep.subr.bf16.mxu0 0
      %5773 = vmatpush1.bf16.msra.mxu0 %v5743
      %5774 = vmatprep.subr.bf16.mxu0 0
      %5775 = vmatpush1.bf16.msra.mxu0 0
      %5776 = vmatprep.subr.bf16.mxu0 0
      %5777 = vmatpush1.bf16.msra.mxu0 0
      %5778 = vmatprep.subr.bf16.mxu0 0
      %5779 = vmatpush1.bf16.msra.mxu0 0
      %5780 = vmatprep.subr.bf16.mxu0 0
      %5781 = vmatpush1.bf16.msra.mxu0 0
      %5782 = vmatprep.subr.bf16.mxu0 0
      %5783 = vmatpush1.bf16.msra.mxu0 0
      %5784 = vmatprep.subr.bf16.mxu0 0
      %5785 = vmatpush1.bf16.msra.mxu0 0
      %5786 = vmatprep.subr.bf16.mxu0 0
      %5787 = vmatpush1.bf16.msra.mxu0 0
      %5788 = vmatprep.subr.bf16.mxu0 0
      %5789 = vmatpush1.bf16.msra.mxu0 0
      %5790 = vmatprep.subr.bf16.mxu0 0
      %5791 = vmatpush1.bf16.msra.mxu0 0
      %5792 = vmatprep.subr.bf16.mxu0 0
      %5793 = vmatpush1.bf16.msra.mxu0 0
      %5794 = vmatprep.subr.bf16.mxu0 0
      %5795 = vmatpush1.bf16.msra.mxu0 0
      %5796 = vmatprep.subr.bf16.mxu0 0
      %5797 = vmatpush1.bf16.msra.mxu0 0
      %5798 = vmatprep.subr.bf16.mxu0 0
      %5799 = vmatpush1.bf16.msra.mxu0 0
      %5800 = vmatprep.subr.bf16.mxu0 0
      %5801 = vmatpush1.bf16.msra.mxu0 0
      %5802 = vmatprep.mubr.bf16.mxu0 0
      %5803 = vmatmul.mubr.bf16.gmra.mrb[0].mxu0 %v5747
      %v5804 = vpop.f32.mrb[0].mxu0
      %v5805 = vadd.f32 0.0, %v5804
      %v5806 = vpop.f32.mrb[0].mxu0
      %v5807 = vpop.f32.mrb[0].mxu0
      %v5808 = vadd.f32 0.0, %v5807
      %v5809 = vpop.f32.mrb[0].mxu0
      %5810 = vmatprep.mubr.bf16.mxu0 0
      %5811 = vmatmul.mubr.bf16.gmra.mrb[0].mxu0 %v5750
      %v5812 = vpop.f32.mrb[0].mxu0
      %v5813 = vadd.f32 0.0, %v5812
      %v5814 = vpop.f32.mrb[0].mxu0
      %v5815 = vpop.f32.mrb[0].mxu0
      %v5816 = vadd.f32 0.0, %v5815
      %v5817 = vpop.f32.mrb[0].mxu0
      %5818 = vmatprep.mubr.bf16.mxu0 0
      %5819 = vmatmul.mubr.bf16.gmra.mrb[0].mxu0 %v5753
      %v5820 = vpop.f32.mrb[0].mxu0
      %v5821 = vadd.f32 0.0, %v5820
      %v5822 = vpop.f32.mrb[0].mxu0
      %v5823 = vpop.f32.mrb[0].mxu0
      %v5824 = vadd.f32 0.0, %v5823
      %v5825 = vpop.f32.mrb[0].mxu0
      %5826 = vmatprep.mubr.bf16.mxu0 0
      %5827 = vmatmul.mubr.bf16.gmra.mrb[0].mxu0 %v5756
      %v5828 = vpop.f32.mrb[0].mxu0
      %v5829 = vadd.f32 0.0, %v5828
      %v5830 = vpop.f32.mrb[0].mxu0
      %v5831 = vpop.f32.mrb[0].mxu0
      %v5832 = vadd.f32 0.0, %v5831
      %v5833 = vpop.f32.mrb[0].mxu0
      %5834 = vmatprep.mubr.bf16.mxu0 0
      %5835 = vmatmul.mubr.bf16.gmra.mrb[0].mxu0 %v5759
      %v5836 = vpop.f32.mrb[0].mxu0
      %v5837 = vadd.f32 0.0, %v5836
      %v5838 = vpop.f32.mrb[0].mxu0
      %v5839 = vpop.f32.mrb[0].mxu0
      %v5840 = vadd.f32 0.0, %v5839
      %v5841 = vpop.f32.mrb[0].mxu0
      %5842 = vmatprep.mubr.bf16.mxu0 0
      %5843 = vmatmul.mubr.bf16.gmra.mrb[0].mxu0 %v5762
      %v5844 = vpop.f32.mrb[0].mxu0
      %v5845 = vadd.f32 0.0, %v5844
      %v5846 = vpop.f32.mrb[0].mxu0
      %v5847 = vpop.f32.mrb[0].mxu0
      %v5848 = vadd.f32 0.0, %v5847
      %v5849 = vpop.f32.mrb[0].mxu0
      %5850 = vmatprep.mubr.bf16.mxu0 0
      %5851 = vmatmul.mubr.bf16.gmra.mrb[0].mxu0 %v5765
      %v5852 = vpop.f32.mrb[0].mxu0
      %v5853 = vadd.f32 0.0, %v5852
      %v5854 = vpop.f32.mrb[0].mxu0
      %v5855 = vpop.f32.mrb[0].mxu0
      %v5856 = vadd.f32 0.0, %v5855
      %v5857 = vpop.f32.mrb[0].mxu0
      %5858 = vmatprep.mubr.bf16.mxu0 0
      %5859 = vmatmul.mubr.bf16.gmra.mrb[0].mxu0 %v5768
      %v5860 = vpop.f32.mrb[0].mxu0
      %v5861 = vadd.f32 0.0, %v5860
      %v5862 = vpop.f32.mrb[0].mxu0
      %v5863 = vpop.f32.mrb[0].mxu0
      %v5864 = vadd.f32 0.0, %v5863
      %v5865 = vpop.f32.mrb[0].mxu0
      %5866 = vdwg.mxu0
      %v5867 = vadd.f32 %v5406, %v5539
      %v5868 = vadd.f32 %v5867, %v5672
      %v5869 = vadd.f32 %v5868, %v5805
      %v5870 = vadd.f32 %v5409, %v5542
      %v5871 = vadd.f32 %v5870, %v5675
      %v5872 = vadd.f32 %v5871, %v5808
      %v5873 = vadd.f32 %v5414, %v5547
      %v5874 = vadd.f32 %v5873, %v5680
      %v5875 = vadd.f32 %v5874, %v5813
      %v5876 = vadd.f32 %v5417, %v5550
      %v5877 = vadd.f32 %v5876, %v5683
      %v5878 = vadd.f32 %v5877, %v5816
      %v5879 = vadd.f32 %v5422, %v5555
      %v5880 = vadd.f32 %v5879, %v5688
      %v5881 = vadd.f32 %v5880, %v5821
      %v5882 = vadd.f32 %v5425, %v5558
      %v5883 = vadd.f32 %v5882, %v5691
      %v5884 = vadd.f32 %v5883, %v5824
      %v5885 = vadd.f32 %v5430, %v5563
      %v5886 = vadd.f32 %v5885, %v5696
      %v5887 = vadd.f32 %v5886, %v5829
      %v5888 = vadd.f32 %v5433, %v5566
      %v5889 = vadd.f32 %v5888, %v5699
      %v5890 = vadd.f32 %v5889, %v5832
      %v5891 = vadd.f32 %v5438, %v5571
      %v5892 = vadd.f32 %v5891, %v5704
      %v5893 = vadd.f32 %v5892, %v5837
      %v5894 = vadd.f32 %v5441, %v5574
      %v5895 = vadd.f32 %v5894, %v5707
      %v5896 = vadd.f32 %v5895, %v5840
      %v5897 = vadd.f32 %v5446, %v5579
      %v5898 = vadd.f32 %v5897, %v5712
      %v5899 = vadd.f32 %v5898, %v5845
      %v5900 = vadd.f32 %v5449, %v5582
      %v5901 = vadd.f32 %v5900, %v5715
      %v5902 = vadd.f32 %v5901, %v5848
      %v5903 = vadd.f32 %v5454, %v5587
      %v5904 = vadd.f32 %v5903, %v5720
      %v5905 = vadd.f32 %v5904, %v5853
      %v5906 = vadd.f32 %v5457, %v5590
      %v5907 = vadd.f32 %v5906, %v5723
      %v5908 = vadd.f32 %v5907, %v5856
      %v5909 = vadd.f32 %v5462, %v5595
      %v5910 = vadd.f32 %v5909, %v5728
      %v5911 = vadd.f32 %v5910, %v5861
      %v5912 = vadd.f32 %v5465, %v5598
      %v5913 = vadd.f32 %v5912, %v5731
      %v5914 = vadd.f32 %v5913, %v5864
      %v5915 = vld [vmem:[%s15] sm:$0x1]
      %v5917 = vlaneseq
      %v5918 = vshrl.u32 %v5917, 7
      %v5919 = vsub.s32 0, %v5918
      %v5920 = vrot.slane %v5915, %v5919
      %v5922 = vadd.f32 %v5869, %v5920
      %v5923 = vadd.f32 %v5872, %v5920
      %v5924 = vadd.f32 %v5875, %v5920
      %v5925 = vadd.f32 %v5878, %v5920
      %v5926 = vadd.f32 %v5881, %v5920
      %v5927 = vadd.f32 %v5884, %v5920
      %v5928 = vadd.f32 %v5887, %v5920
      %v5929 = vadd.f32 %v5890, %v5920
      %v5930 = vadd.f32 %v5893, %v5920
      %v5931 = vadd.f32 %v5896, %v5920
      %v5932 = vadd.f32 %v5899, %v5920
      %v5933 = vadd.f32 %v5902, %v5920
      %v5934 = vadd.f32 %v5905, %v5920
      %v5935 = vadd.f32 %v5908, %v5920
      %v5936 = vadd.f32 %v5911, %v5920
      %v5937 = vadd.f32 %v5914, %v5920
      %v5938 = vadd.f32 %v5922, %v2613
      %v5939 = vadd.f32 %v5923, %v2614
      %v5940 = vadd.f32 %v5924, %v2615
      %v5941 = vadd.f32 %v5925, %v2616
      %v5942 = vadd.f32 %v5926, %v2617
      %v5943 = vadd.f32 %v5927, %v2618
      %v5944 = vadd.f32 %v5928, %v2619
      %v5945 = vadd.f32 %v5929, %v2620
      %v5946 = vadd.f32 %v5930, %v2621
      %v5947 = vadd.f32 %v5931, %v2622
      %v5948 = vadd.f32 %v5932, %v2623
      %v5949 = vadd.f32 %v5933, %v2624
      %v5950 = vadd.f32 %v5934, %v2625
      %v5951 = vadd.f32 %v5935, %v2626
      %v5952 = vadd.f32 %v5936, %v2627
      %v5953 = vadd.f32 %v5937, %v2628
      %v5954 = vld [vmem:[%s16] sm:$0xf]
      %v5955 = vld [vmem:[%s16 + $0x4] sm:$0xf]
      %v5956 = vld [vmem:[%s16 + $0x8] sm:$0xf]
      %v5957 = vld [vmem:[%s16 + $0xc] sm:$0xf]
      %v5958 = vld [vmem:[%s16 + $0x10] sm:$0xf]
      %v5959 = vld [vmem:[%s16 + $0x14] sm:$0xf]
      %v5960 = vld [vmem:[%s16 + $0x18] sm:$0xf]
      %v5961 = vld [vmem:[%s16 + $0x1c] sm:$0xf]
      %v5962 = vld [vmem:[%s16 + $0x20] sm:$0xf]
      %v5963 = vld [vmem:[%s16 + $0x24] sm:$0xf]
      %v5964 = vld [vmem:[%s16 + $0x28] sm:$0xf]
      %v5965 = vld [vmem:[%s16 + $0x2c] sm:$0xf]
      %v5966 = vld [vmem:[%s16 + $0x30] sm:$0xf]
      %v5967 = vld [vmem:[%s16 + $0x34] sm:$0xf]
      %v5968 = vld [vmem:[%s16 + $0x38] sm:$0xf]
      %v5969 = vld [vmem:[%s16 + $0x3c] sm:$0xf]
      %v5970 = vpack.c.bf16 %v5939, %v5938
      %v5971 = vpack.c.bf16 %v5941, %v5940
      %v5972 = vpack.c.bf16 %v5943, %v5942
      %v5973 = vpack.c.bf16 %v5945, %v5944
      %v5974 = vpack.c.bf16 %v5947, %v5946
      %v5975 = vpack.c.bf16 %v5949, %v5948
      %v5976 = vpack.c.bf16 %v5951, %v5950
      %v5977 = vpack.c.bf16 %v5953, %v5952
      %v5978 = vld [vmem:[%s17] sm:$0x1]
      %v5980 = vlaneseq
      %v5981 = vshrl.u32 %v5980, 7
      %v5982 = vsub.s32 0, %v5981
      %v5983 = vrot.slane %v5978, %v5982
      %v6001 = vunpack.c.l.b16 %v5954
      %v6002 = vunpack.c.l.b16 %v5955
      %v6003 = vunpack.c.l.b16 %v5956
      %v6004 = vunpack.c.l.b16 %v5957
      %v6005 = vunpack.c.l.b16 %v5958
      %v6006 = vunpack.c.l.b16 %v5959
      %v6007 = vunpack.c.l.b16 %v5960
      %v6008 = vunpack.c.l.b16 %v5961
      %v6009 = vunpack.c.l.b16 %v5962
      %v6010 = vunpack.c.l.b16 %v5963
      %v6011 = vunpack.c.l.b16 %v5964
      %v6012 = vunpack.c.l.b16 %v5965
      %v6013 = vunpack.c.l.b16 %v5966
      %v6014 = vunpack.c.l.b16 %v5967
      %v6015 = vunpack.c.l.b16 %v5968
      %v6016 = vunpack.c.l.b16 %v5969
      %v6017 = vpack.c.b16 %v6002, %v6001
      %v6018 = vpack.c.b16 %v6004, %v6003
      %v6019 = vpack.c.b16 %v6006, %v6005
      %v6020 = vpack.c.b16 %v6008, %v6007
      %v6021 = vpack.c.b16 %v6010, %v6009
      %v6022 = vpack.c.b16 %v6012, %v6011
      %v6023 = vpack.c.b16 %v6014, %v6013
      %v6024 = vpack.c.b16 %v6016, %v6015
      %6033 = vmatprep.subr.bf16.mxu0 0
      %6034 = vmatpush1.bf16.msra.mxu0 %v6017
      %6035 = vmatprep.subr.bf16.mxu0 0
      %6036 = vmatpush1.bf16.msra.mxu0 %v6018
      %6037 = vmatprep.subr.bf16.mxu0 0
      %6038 = vmatpush1.bf16.msra.mxu0 %v6019
      %6039 = vmatprep.subr.bf16.mxu0 0
      %6040 = vmatpush1.bf16.msra.mxu0 %v6020
      %6041 = vmatprep.subr.bf16.mxu0 0
      %6042 = vmatpush1.bf16.msra.mxu0 %v6021
      %6043 = vmatprep.subr.bf16.mxu0 0
      %6044 = vmatpush1.bf16.msra.mxu0 %v6022
      %6045 = vmatprep.subr.bf16.mxu0 0
      %6046 = vmatpush1.bf16.msra.mxu0 %v6023
      %6047 = vmatprep.subr.bf16.mxu0 0
      %6048 = vmatpush1.bf16.msra.mxu0 %v6024
      %6049 = vmatprep.subr.bf16.mxu0 0
      %6050 = vmatpush1.bf16.msra.mxu0 0
      %6051 = vmatprep.subr.bf16.mxu0 0
      %6052 = vmatpush1.bf16.msra.mxu0 0
      %6053 = vmatprep.subr.bf16.mxu0 0
      %6054 = vmatpush1.bf16.msra.mxu0 0
      %6055 = vmatprep.subr.bf16.mxu0 0
      %6056 = vmatpush1.bf16.msra.mxu0 0
      %6057 = vmatprep.subr.bf16.mxu0 0
      %6058 = vmatpush1.bf16.msra.mxu0 0
      %6059 = vmatprep.subr.bf16.mxu0 0
      %6060 = vmatpush1.bf16.msra.mxu0 0
      %6061 = vmatprep.subr.bf16.mxu0 0
      %6062 = vmatpush1.bf16.msra.mxu0 0
      %6063 = vmatprep.subr.bf16.mxu0 0
      %6064 = vmatpush1.bf16.msra.mxu0 0
      %6065 = vmatprep.mubr.bf16.mxu0 0
      %6066 = vmatmul.mubr.bf16.gmra.mrb[0].mxu0 %v5970
      %v6067 = vpop.f32.mrb[0].mxu0
      %v6068 = vadd.f32 %v5983, %v6067
      %v6069 = vpop.f32.mrb[0].mxu0
      %v6070 = vpop.f32.mrb[0].mxu0
      %v6071 = vadd.f32 %v5983, %v6070
      %v6072 = vpop.f32.mrb[0].mxu0
      %6073 = vmatprep.mubr.bf16.mxu0 0
      %6074 = vmatmul.mubr.bf16.gmra.mrb[0].mxu0 %v5971
      %v6075 = vpop.f32.mrb[0].mxu0
      %v6076 = vadd.f32 %v5983, %v6075
      %v6077 = vpop.f32.mrb[0].mxu0
      %v6078 = vpop.f32.mrb[0].mxu0
      %v6079 = vadd.f32 %v5983, %v6078
      %v6080 = vpop.f32.mrb[0].mxu0
      %6081 = vmatprep.mubr.bf16.mxu0 0
      %6082 = vmatmul.mubr.bf16.gmra.mrb[0].mxu0 %v5972
      %v6083 = vpop.f32.mrb[0].mxu0
      %v6084 = vadd.f32 %v5983, %v6083
      %v6085 = vpop.f32.mrb[0].mxu0
      %v6086 = vpop.f32.mrb[0].mxu0
      %v6087 = vadd.f32 %v5983, %v6086
      %v6088 = vpop.f32.mrb[0].mxu0
      %6089 = vmatprep.mubr.bf16.mxu0 0
      %6090 = vmatmul.mubr.bf16.gmra.mrb[0].mxu0 %v5973
      %v6091 = vpop.f32.mrb[0].mxu0
      %v6092 = vadd.f32 %v5983, %v6091
      %v6093 = vpop.f32.mrb[0].mxu0
      %v6094 = vpop.f32.mrb[0].mxu0
      %v6095 = vadd.f32 %v5983, %v6094
      %v6096 = vpop.f32.mrb[0].mxu0
      %6097 = vmatprep.mubr.bf16.mxu0 0
      %6098 = vmatmul.mubr.bf16.gmra.mrb[0].mxu0 %v5974
      %v6099 = vpop.f32.mrb[0].mxu0
      %v6100 = vadd.f32 %v5983, %v6099
      %v6101 = vpop.f32.mrb[0].mxu0
      %v6102 = vpop.f32.mrb[0].mxu0
      %v6103 = vadd.f32 %v5983, %v6102
      %v6104 = vpop.f32.mrb[0].mxu0
      %6105 = vmatprep.mubr.bf16.mxu0 0
      %6106 = vmatmul.mubr.bf16.gmra.mrb[0].mxu0 %v5975
      %v6107 = vpop.f32.mrb[0].mxu0
      %v6108 = vadd.f32 %v5983, %v6107
      %v6109 = vpop.f32.mrb[0].mxu0
      %v6110 = vpop.f32.mrb[0].mxu0
      %v6111 = vadd.f32 %v5983, %v6110
      %v6112 = vpop.f32.mrb[0].mxu0
      %6113 = vmatprep.mubr.bf16.mxu0 0
      %6114 = vmatmul.mubr.bf16.gmra.mrb[0].mxu0 %v5976
      %v6115 = vpop.f32.mrb[0].mxu0
      %v6116 = vadd.f32 %v5983, %v6115
      %v6117 = vpop.f32.mrb[0].mxu0
      %v6118 = vpop.f32.mrb[0].mxu0
      %v6119 = vadd.f32 %v5983, %v6118
      %v6120 = vpop.f32.mrb[0].mxu0
      %6121 = vmatprep.mubr.bf16.mxu0 0
      %6122 = vmatmul.mubr.bf16.gmra.mrb[0].mxu0 %v5977
      %v6123 = vpop.f32.mrb[0].mxu0
      %v6124 = vadd.f32 %v5983, %v6123
      %v6125 = vpop.f32.mrb[0].mxu0
      %v6126 = vpop.f32.mrb[0].mxu0
      %v6127 = vadd.f32 %v5983, %v6126
      %v6128 = vpop.f32.mrb[0].mxu0
      %6129 = vdwg.mxu0
      %v6130 = vadd.f32 %v6068, %v580
      %v6131 = vadd.f32 %v6071, %v581
      %v6132 = vadd.f32 %v6076, %v582
      %v6133 = vadd.f32 %v6079, %v583
      %v6134 = vadd.f32 %v6084, %v584
      %v6135 = vadd.f32 %v6087, %v585
      %v6136 = vadd.f32 %v6092, %v586
      %v6137 = vadd.f32 %v6095, %v587
      %v6138 = vadd.f32 %v6100, %v588
      %v6139 = vadd.f32 %v6103, %v589
      %v6140 = vadd.f32 %v6108, %v590
      %v6141 = vadd.f32 %v6111, %v591
      %v6142 = vadd.f32 %v6116, %v592
      %v6143 = vadd.f32 %v6119, %v593
      %v6144 = vadd.f32 %v6124, %v594
      %v6145 = vadd.f32 %v6127, %v595
      %6146 = vst.msk [vmem:[%s577] sm:$0xff] %vm610, %v6130
      %6147 = vst.msk [vmem:[%s577 + $0x8] sm:$0xff] %vm610, %v6131
      %6148 = vst.msk [vmem:[%s577 + $0x10] sm:$0xff] %vm610, %v6132
      %6149 = vst.msk [vmem:[%s577 + $0x18] sm:$0xff] %vm610, %v6133
      %6150 = vst.msk [vmem:[%s577 + $0x20] sm:$0xff] %vm610, %v6134
      %6151 = vst.msk [vmem:[%s577 + $0x28] sm:$0xff] %vm610, %v6135
      %6152 = vst.msk [vmem:[%s577 + $0x30] sm:$0xff] %vm610, %v6136
      %6153 = vst.msk [vmem:[%s577 + $0x38] sm:$0xff] %vm610, %v6137
      %6154 = vst.msk [vmem:[%s577 + $0x40] sm:$0xff] %vm610, %v6138
      %6155 = vst.msk [vmem:[%s577 + $0x48] sm:$0xff] %vm610, %v6139
      %6156 = vst.msk [vmem:[%s577 + $0x50] sm:$0xff] %vm610, %v6140
      %6157 = vst.msk [vmem:[%s577 + $0x58] sm:$0xff] %vm610, %v6141
      %6158 = vst.msk [vmem:[%s577 + $0x60] sm:$0xff] %vm610, %v6142
      %6159 = vst.msk [vmem:[%s577 + $0x68] sm:$0xff] %vm610, %v6143
      %6160 = vst.msk [vmem:[%s577 + $0x70] sm:$0xff] %vm610, %v6144
      %6161 = vst.msk [vmem:[%s577 + $0x78] sm:$0xff] %vm610, %v6145
      %s6162 = smul.u32 16, %s29
      %p6163 = scmp.lt.s32.totalorder %s6162, 63
      %s6164 = scalar_select %p6163, %s6162, 63
      %s6165 = smul.addr %s6164, 8
      %s6166 = scalar_lea.vmem %s18, %s6165
      // Predicated region
      $region93: #{tpu_custom_call.1} parent=91 // pred_check
        %p6167 = pneg %p430
      $region94: #{tpu_custom_call.1} parent=91 // pred_check_branch
        %6169 = sbr.rel (%p6167) target = $region96
      $region95: #{tpu_custom_call.1} parent=91 // pred_region
        %s6170 = smul.u32 16, %s29
      $region96: #{tpu_custom_call.1} parent=91 // pred_fallthru
        _
    $region92: #{tpu_custom_call.1} parent=5 // pred_fallthru
      _
    %p6171 = scmp.le.s32.totalorder 2, %s24
    // Predicated region
    $region97: #{tpu_custom_call.1} parent=5 // pred_check
      %p6172 = pneg %p6171
    $region98: #{tpu_custom_call.1} parent=5 // pred_check_branch
      %6174 = sbr.rel (%p6172) target = $region100
    $region99: #{tpu_custom_call.1} parent=5 // pred_region
      %s6175 = ssub.s32 %s24, 2
      // Predicated region
      $region101: #{tpu_custom_call.1} parent=99 // pred_check
        %p6176 = pneg %p436
      $region102: #{tpu_custom_call.1} parent=99 // pred_check_branch
        %6178 = sbr.rel (%p6176) target = $region104
      $region103: #{tpu_custom_call.1} parent=99 // pred_region
        %s6179 = smul.u32 16, %s30
        %p6180 = scmp.lt.s32.totalorder %s6179, 63
        %s6181 = scalar_select %p6180, %s6179, 63
        %s6182 = smul.addr %s6181, 8
        %s6183 = scalar_lea.vmem %s18, %s6182
      $region104: #{tpu_custom_call.1} parent=99 // pred_fallthru
        _
    $region100: #{tpu_custom_call.1} parent=5 // pred_fallthru
      _
  $region6: #{tpu_custom_call.1} parent=0 // loop_footer
    %s28 = sadd.s32 1, %s24
  $region7: #{tpu_custom_call.1} parent=0 // loop_footer_branch
    %23 = sbr.rel target = $region3
  $region8: #{tpu_custom_call.1} parent=0 // loop_exit
    _

</llo_original>
